<compile_context>
chip_gen: v5e
topology: v5e:2x2
jax: 0.10.0
libtpu: 0.0.40
codegen_flags: <defaults>
</compile_context>

<pallas_src>
import functools

import jax
import jax.numpy as jnp
from jax.experimental import pallas as pl
from jax.experimental.pallas import tpu as pltpu


# ----------------------------------------------------------------------------
# Fused Pallas kernel: encoder 2-layer GRU -> view trick -> decoder 2-layer GRU
# ----------------------------------------------------------------------------
def autoencoder_kernel(x_ref,
                       e_wi0_ref, e_wh0_ref, e_bi0_ref, e_bh0_ref,
                       e_wi1_ref, e_wh1_ref, e_bi1_ref, e_bh1_ref,
                       d_wi0_ref, d_wh0_ref, d_bi0_ref, d_bh0_ref,
                       d_wi1_ref, d_wh1_ref, d_bi1_ref, d_bh1_ref,
                       out_ref,
                       gi0_scr, hn_scr, dgi_scr,
                       *, T, B, H):
    """x_ref: (T*B, I) time-major flattened; w*_ref: (F_in, 3H); b*_ref: (1, 3H); out: (1, H)."""
    f32 = jnp.float32
    G = 3 * H

    def cell(gi, h, wh, bh):
        """One GRU cell (PyTorch gate order r, z, n). `gi` already includes the input bias."""
        gh = jnp.dot(h, wh, preferred_element_type=f32) + bh
        r = jax.nn.sigmoid(gi[:, 0:H] + gh[:, 0:H])
        z = jax.nn.sigmoid(gi[:, H:2 * H] + gh[:, H:2 * H])
        n = jnp.tanh(gi[:, 2 * H:G] + r * gh[:, 2 * H:G])
        return (1.0 - z) * n + z * h

    # ---------------- encoder ----------------
    wh0 = e_wh0_ref[...]
    wi1 = e_wi1_ref[...]
    wh1 = e_wh1_ref[...]
    # Hoist bias broadcasts out of the unrolled loop (JAX does not CSE broadcast_in_dim).
    bh0 = jnp.broadcast_to(e_bh0_ref[...], (B, G))
    bi1 = jnp.broadcast_to(e_bi1_ref[...], (B, G))
    bh1 = jnp.broadcast_to(e_bh1_ref[...], (B, G))

    # Layer-0 input projection for ALL timesteps: one (T*B, I) @ (I, 3H) matmul + bias.
    gi0_scr[...] = (jnp.dot(x_ref[...], e_wi0_ref[...], preferred_element_type=f32)
                    + e_bi0_ref[...])

    h0 = jnp.zeros((B, H), f32)     # PyTorch default h_0 = 0
    h1 = jnp.zeros((B, H), f32)
    for t in range(T):              # static unroll; h0/h1 stay in registers
        gi0 = gi0_scr[pl.ds(t * B, B), :]                                   # (B, 3H)
        h0 = cell(gi0, h0, wh0, bh0)
        gi1 = jnp.dot(h0, wi1, preferred_element_type=f32) + bi1            # (B, 3H)
        h1 = cell(gi1, h1, wh1, bh1)

    # Encoder h_n (2, B, H) flattened row-major into a (2B, H) scratch: rows [h0; h1].
    hn_scr[pl.ds(0, B), :] = h0
    hn_scr[pl.ds(B, B), :] = h1

    # ---------------- decoder ----------------
    # h_last = h_n.view(-1, 2, H)[:, -1, :]  <=>  rows (2*s + 1) of hn_scr.
    # The decoder treats that 2-D tensor as an unbatched length-B sequence, so only its layer-0
    # input projection is needed; project ALL 2B rows at once (M pads to 8 anyway) and pick the
    # odd rows inside the decoder loop.
    d_wh0 = d_wh0_ref[...]
    d_wi1 = d_wi1_ref[...]
    d_wh1 = d_wh1_ref[...]
    d_bh0 = d_bh0_ref[...]          # decoder batch is 1 -> (1, 3H) biases need no broadcast
    d_bi1 = d_bi1_ref[...]
    d_bh1 = d_bh1_ref[...]

    dgi_scr[...] = (jnp.dot(hn_scr[...], d_wi0_ref[...], preferred_element_type=f32)
                    + d_bi0_ref[...])

    d0 = jnp.zeros((1, H), f32)
    d1 = jnp.zeros((1, H), f32)
    for s in range(B):              # static unroll over the "sequence" of length B
        gi0 = dgi_scr[pl.ds(2 * s + 1, 1), :]                               # (1, 3H)
        d0 = cell(gi0, d0, d_wh0, d_bh0)
        gi1 = jnp.dot(d0, d_wi1, preferred_element_type=f32) + d_bi1        # (1, 3H)
        d1 = cell(gi1, d1, d_wh1, d_bh1)

    # x_hat = decoder-h_n.view(-1, 2, H)[:, -1, :] == decoder layer-1 final hidden, shape (1, H).
    out_ref[...] = d1


# ----------------------------------------------------------------------------
# Parameter init (deterministic, PyTorch-style uniform(-1/sqrt(H), 1/sqrt(H)))
# Fused gate layout: columns ordered [r | z | n], weights pre-transposed to (F_in, 3H).
# ----------------------------------------------------------------------------
def init_gru2(key, input_size, hidden_size):
    H = hidden_size
    G = 3 * H
    bound = float(1.0 / (H ** 0.5))
    ks = jax.random.split(key, 8)

    def u(k, shape):
        return jax.random.uniform(k, shape, jnp.float32, -bound, bound)

    return dict(
        wi0=u(ks[0], (input_size, G)),  # layer 0: [W_ir | W_iz | W_in], transposed & fused
        wh0=u(ks[1], (H, G)),
        bi0=u(ks[2], (1, G)),
        bh0=u(ks[3], (1, G)),
        wi1=u(ks[4], (H, G)),           # layer 1 input is layer-0 hidden
        wh1=u(ks[5], (H, G)),
        bi1=u(ks[6], (1, G)),
        bh1=u(ks[7], (1, G)),
    )


# ----------------------------------------------------------------------------
# Model forward (mirrors AutoEncoderModel.forward) — single fused pallas_call
# ----------------------------------------------------------------------------
def autoencoder_forward(x, enc_params, dec_params, hidden_size):
    """x: (B, T, input_size) batch-first float32 -> x_hat (1, hidden_size)."""
    B, T, I = x.shape
    H = hidden_size
    assert I == H, ("decoder GRU keeps input_size == original input_size; feeding it hidden "
                    "states requires input_size == hidden_size")
    G = 3 * H

    # Time-major + flattened so the kernel's layer-0 input projection is ONE matmul.
    # TODO(synk): for large T*B, deliver time-major tiles via a BlockSpec index_map instead of
    #             this host-side transpose (and add a batch grid to use v7x's two TensorCores).
    x2d = jnp.transpose(x, (1, 0, 2)).reshape(T * B, I)

    vmem = functools.partial(pl.BlockSpec, memory_space=pltpu.MemorySpace.VMEM)
    kernel = functools.partial(autoencoder_kernel, T=T, B=B, H=H)
    return pl.pallas_call(
        kernel,
        out_shape=jax.ShapeDtypeStruct((1, H), jnp.float32),
        in_specs=[vmem() for _ in range(17)],
        out_specs=vmem(),
        scratch_shapes=[
            pltpu.VMEM((T * B, G), jnp.float32),   # precomputed encoder layer-0 input projections
            pltpu.VMEM((2 * B, H), jnp.float32),   # encoder h_n, flattened row-major
            pltpu.VMEM((2 * B, G), jnp.float32),   # decoder layer-0 input projections
        ],
    )(x2d,
      enc_params["wi0"], enc_params["wh0"], enc_params["bi0"], enc_params["bh0"],
      enc_params["wi1"], enc_params["wh1"], enc_params["bi1"], enc_params["bh1"],
      dec_params["wi0"], dec_params["wh0"], dec_params["bi0"], dec_params["bh0"],
      dec_params["wi1"], dec_params["wh1"], dec_params["bi1"], dec_params["bh1"])


if __name__ == "__main__":
    B, T = 4, 8
    input_size = hidden_size = 32          # decoder path requires input_size == hidden_size
    num_classes = 5                        # unused in forward (as in the PyTorch module)

    key = jax.random.PRNGKey(0)
    k_x, k_enc, k_dec = jax.random.split(key, 3)

    x = jax.random.normal(k_x, (B, T, input_size), jnp.float32)
    enc_params = init_gru2(k_enc, input_size, hidden_size)
    dec_params = init_gru2(k_dec, input_size, hidden_size)

    fwd = jax.jit(functools.partial(autoencoder_forward, hidden_size=hidden_size))
    out = fwd(x, enc_params, dec_params)
    jax.block_until_ready(out)
    assert out.shape == (1, hidden_size) and out.dtype == jnp.float32
    print("KERNEL_OK")
</pallas_src>

<mosaic_0001>
module attributes {stable_mosaic.version = 11 : i64} {
  func.func @autoencoder_kernel(%arg0: memref<32x32xf32, #tpu.memory_space<vmem>>, %arg1: memref<32x96xf32, #tpu.memory_space<vmem>>, %arg2: memref<32x96xf32, #tpu.memory_space<vmem>>, %arg3: memref<1x96xf32, #tpu.memory_space<vmem>>, %arg4: memref<1x96xf32, #tpu.memory_space<vmem>>, %arg5: memref<32x96xf32, #tpu.memory_space<vmem>>, %arg6: memref<32x96xf32, #tpu.memory_space<vmem>>, %arg7: memref<1x96xf32, #tpu.memory_space<vmem>>, %arg8: memref<1x96xf32, #tpu.memory_space<vmem>>, %arg9: memref<32x96xf32, #tpu.memory_space<vmem>>, %arg10: memref<32x96xf32, #tpu.memory_space<vmem>>, %arg11: memref<1x96xf32, #tpu.memory_space<vmem>>, %arg12: memref<1x96xf32, #tpu.memory_space<vmem>>, %arg13: memref<32x96xf32, #tpu.memory_space<vmem>>, %arg14: memref<32x96xf32, #tpu.memory_space<vmem>>, %arg15: memref<1x96xf32, #tpu.memory_space<vmem>>, %arg16: memref<1x96xf32, #tpu.memory_space<vmem>>, %arg17: memref<1x32xf32, #tpu.memory_space<vmem>>, %arg18: memref<32x96xf32, #tpu.memory_space<vmem>>, %arg19: memref<8x32xf32, #tpu.memory_space<vmem>>, %arg20: memref<8x96xf32, #tpu.memory_space<vmem>>) attributes {dimension_semantics = [], scalar_prefetch = 0 : i64, scratch_operands = 3 : i64, tpu.core_type = #tpu.core_type<tc>} {
    %c0 = arith.constant 0 : index
    %c0_0 = arith.constant 0 : index
    %0 = vector.load %arg2[%c0, %c0_0] : memref<32x96xf32, #tpu.memory_space<vmem>>, vector<32x96xf32>
    %c0_1 = arith.constant 0 : index
    %c0_2 = arith.constant 0 : index
    %1 = vector.load %arg5[%c0_1, %c0_2] : memref<32x96xf32, #tpu.memory_space<vmem>>, vector<32x96xf32>
    %c0_3 = arith.constant 0 : index
    %c0_4 = arith.constant 0 : index
    %2 = vector.load %arg6[%c0_3, %c0_4] : memref<32x96xf32, #tpu.memory_space<vmem>>, vector<32x96xf32>
    %c0_5 = arith.constant 0 : index
    %c0_6 = arith.constant 0 : index
    %3 = vector.load %arg4[%c0_5, %c0_6] : memref<1x96xf32, #tpu.memory_space<vmem>>, vector<1x96xf32>
    %4 = vector.shape_cast %3 : vector<1x96xf32> to vector<1x96xf32>
    %5 = vector.broadcast %4 : vector<1x96xf32> to vector<4x96xf32>
    %c0_7 = arith.constant 0 : index
    %c0_8 = arith.constant 0 : index
    %6 = vector.load %arg7[%c0_7, %c0_8] : memref<1x96xf32, #tpu.memory_space<vmem>>, vector<1x96xf32>
    %7 = vector.shape_cast %6 : vector<1x96xf32> to vector<1x96xf32>
    %8 = vector.broadcast %7 : vector<1x96xf32> to vector<4x96xf32>
    %c0_9 = arith.constant 0 : index
    %c0_10 = arith.constant 0 : index
    %9 = vector.load %arg8[%c0_9, %c0_10] : memref<1x96xf32, #tpu.memory_space<vmem>>, vector<1x96xf32>
    %10 = vector.shape_cast %9 : vector<1x96xf32> to vector<1x96xf32>
    %11 = vector.broadcast %10 : vector<1x96xf32> to vector<4x96xf32>
    %c0_11 = arith.constant 0 : index
    %c0_12 = arith.constant 0 : index
    %12 = vector.load %arg0[%c0_11, %c0_12] : memref<32x32xf32, #tpu.memory_space<vmem>>, vector<32x32xf32>
    %c0_13 = arith.constant 0 : index
    %c0_14 = arith.constant 0 : index
    %13 = vector.load %arg1[%c0_13, %c0_14] : memref<32x96xf32, #tpu.memory_space<vmem>>, vector<32x96xf32>
    %cst = arith.constant dense<0.000000e+00> : vector<32x96xf32>
    %14 = tpu.matmul %12, %13, %cst {dimension_numbers = #tpu.dot_dimension_numbers<[1], [0], [0], [1], [0, 0, 1, 1], [], []>} : vector<32x32xf32>, vector<32x96xf32>, vector<32x96xf32> -> vector<32x96xf32>
    %c0_15 = arith.constant 0 : index
    %c0_16 = arith.constant 0 : index
    %15 = vector.load %arg3[%c0_15, %c0_16] : memref<1x96xf32, #tpu.memory_space<vmem>>, vector<1x96xf32>
    %16 = vector.broadcast %15 : vector<1x96xf32> to vector<32x96xf32>
    %17 = arith.addf %14, %16 : vector<32x96xf32>
    %c0_17 = arith.constant 0 : index
    %c0_18 = arith.constant 0 : index
    %18 = vector.load %arg18[%c0_17, %c0_18] : memref<32x96xf32, #tpu.memory_space<vmem>>, vector<32x96xf32>
    tpu.vector_store %arg18[%c0_17, %c0_18], %17 {strides = array<i32>} : memref<32x96xf32, #tpu.memory_space<vmem>>, vector<32x96xf32>,
    %cst_19 = arith.constant 0.000000e+00 : f32
    %19 = vector.broadcast %cst_19 : f32 to vector<4x32xf32>
    %cst_20 = arith.constant 0.000000e+00 : f32
    %20 = vector.broadcast %cst_20 : f32 to vector<4x32xf32>
    %c0_21 = arith.constant 0 : index
    %c0_22 = arith.constant 0 : index
    %21 = vector.load %arg18[%c0_21, %c0_22] : memref<32x96xf32, #tpu.memory_space<vmem>>, vector<4x96xf32>
    %cst_23 = arith.constant dense<0.000000e+00> : vector<4x96xf32>
    %22 = tpu.matmul %19, %0, %cst_23 {dimension_numbers = #tpu.dot_dimension_numbers<[1], [0], [0], [1], [0, 0, 1, 1], [], []>} : vector<4x32xf32>, vector<32x96xf32>, vector<4x96xf32> -> vector<4x96xf32>
    %23 = arith.addf %22, %5 : vector<4x96xf32>
    %24 = vector.extract_strided_slice %21 {offsets = [0, 0], sizes = [4, 32], strides = [1, 1]} : vector<4x96xf32> to vector<4x32xf32>
    %25 = vector.extract_strided_slice %23 {offsets = [0, 0], sizes = [4, 32], strides = [1, 1]} : vector<4x96xf32> to vector<4x32xf32>
    %26 = arith.addf %24, %25 : vector<4x32xf32>
    %27 = arith.negf %26 : vector<4x32xf32>
    %28 = math.exp %27 : vector<4x32xf32>
    %cst_24 = arith.constant 1.000000e+00 : f32
    %29 = vector.broadcast %cst_24 : f32 to vector<4x32xf32>
    %30 = arith.addf %29, %28 : vector<4x32xf32>
    %31 = arith.divf %29, %30 : vector<4x32xf32>
    %32 = vector.extract_strided_slice %21 {offsets = [0, 32], sizes = [4, 32], strides = [1, 1]} : vector<4x96xf32> to vector<4x32xf32>
    %33 = vector.extract_strided_slice %23 {offsets = [0, 32], sizes = [4, 32], strides = [1, 1]} : vector<4x96xf32> to vector<4x32xf32>
    %34 = arith.addf %32, %33 : vector<4x32xf32>
    %35 = arith.negf %34 : vector<4x32xf32>
    %36 = math.exp %35 : vector<4x32xf32>
    %cst_25 = arith.constant 1.000000e+00 : f32
    %37 = vector.broadcast %cst_25 : f32 to vector<4x32xf32>
    %38 = arith.addf %37, %36 : vector<4x32xf32>
    %39 = arith.divf %37, %38 : vector<4x32xf32>
    %40 = vector.extract_strided_slice %21 {offsets = [0, 64], sizes = [4, 32], strides = [1, 1]} : vector<4x96xf32> to vector<4x32xf32>
    %41 = vector.extract_strided_slice %23 {offsets = [0, 64], sizes = [4, 32], strides = [1, 1]} : vector<4x96xf32> to vector<4x32xf32>
    %42 = arith.mulf %31, %41 : vector<4x32xf32>
    %43 = arith.addf %40, %42 : vector<4x32xf32>
    %44 = math.tanh %43 : vector<4x32xf32>
    %cst_26 = arith.constant 1.000000e+00 : f32
    %45 = vector.broadcast %cst_26 : f32 to vector<4x32xf32>
    %46 = arith.subf %45, %39 : vector<4x32xf32>
    %47 = arith.mulf %46, %44 : vector<4x32xf32>
    %48 = arith.mulf %39, %19 : vector<4x32xf32>
    %49 = arith.addf %47, %48 : vector<4x32xf32>
    %cst_27 = arith.constant dense<0.000000e+00> : vector<4x96xf32>
    %50 = tpu.matmul %49, %1, %cst_27 {dimension_numbers = #tpu.dot_dimension_numbers<[1], [0], [0], [1], [0, 0, 1, 1], [], []>} : vector<4x32xf32>, vector<32x96xf32>, vector<4x96xf32> -> vector<4x96xf32>
    %51 = arith.addf %50, %8 : vector<4x96xf32>
    %cst_28 = arith.constant dense<0.000000e+00> : vector<4x96xf32>
    %52 = tpu.matmul %20, %2, %cst_28 {dimension_numbers = #tpu.dot_dimension_numbers<[1], [0], [0], [1], [0, 0, 1, 1], [], []>} : vector<4x32xf32>, vector<32x96xf32>, vector<4x96xf32> -> vector<4x96xf32>
    %53 = arith.addf %52, %11 : vector<4x96xf32>
    %54 = vector.extract_strided_slice %51 {offsets = [0, 0], sizes = [4, 32], strides = [1, 1]} : vector<4x96xf32> to vector<4x32xf32>
    %55 = vector.extract_strided_slice %53 {offsets = [0, 0], sizes = [4, 32], strides = [1, 1]} : vector<4x96xf32> to vector<4x32xf32>
    %56 = arith.addf %54, %55 : vector<4x32xf32>
    %57 = arith.negf %56 : vector<4x32xf32>
    %58 = math.exp %57 : vector<4x32xf32>
    %cst_29 = arith.constant 1.000000e+00 : f32
    %59 = vector.broadcast %cst_29 : f32 to vector<4x32xf32>
    %60 = arith.addf %59, %58 : vector<4x32xf32>
    %61 = arith.divf %59, %60 : vector<4x32xf32>
    %62 = vector.extract_strided_slice %51 {offsets = [0, 32], sizes = [4, 32], strides = [1, 1]} : vector<4x96xf32> to vector<4x32xf32>
    %63 = vector.extract_strided_slice %53 {offsets = [0, 32], sizes = [4, 32], strides = [1, 1]} : vector<4x96xf32> to vector<4x32xf32>
    %64 = arith.addf %62, %63 : vector<4x32xf32>
    %65 = arith.negf %64 : vector<4x32xf32>
    %66 = math.exp %65 : vector<4x32xf32>
    %cst_30 = arith.constant 1.000000e+00 : f32
    %67 = vector.broadcast %cst_30 : f32 to vector<4x32xf32>
    %68 = arith.addf %67, %66 : vector<4x32xf32>
    %69 = arith.divf %67, %68 : vector<4x32xf32>
    %70 = vector.extract_strided_slice %51 {offsets = [0, 64], sizes = [4, 32], strides = [1, 1]} : vector<4x96xf32> to vector<4x32xf32>
    %71 = vector.extract_strided_slice %53 {offsets = [0, 64], sizes = [4, 32], strides = [1, 1]} : vector<4x96xf32> to vector<4x32xf32>
    %72 = arith.mulf %61, %71 : vector<4x32xf32>
    %73 = arith.addf %70, %72 : vector<4x32xf32>
    %74 = math.tanh %73 : vector<4x32xf32>
    %cst_31 = arith.constant 1.000000e+00 : f32
    %75 = vector.broadcast %cst_31 : f32 to vector<4x32xf32>
    %76 = arith.subf %75, %69 : vector<4x32xf32>
    %77 = arith.mulf %76, %74 : vector<4x32xf32>
    %78 = arith.mulf %69, %20 : vector<4x32xf32>
    %79 = arith.addf %77, %78 : vector<4x32xf32>
    %c4 = arith.constant 4 : index
    %c0_32 = arith.constant 0 : index
    %80 = vector.load %arg18[%c4, %c0_32] : memref<32x96xf32, #tpu.memory_space<vmem>>, vector<4x96xf32>
    %cst_33 = arith.constant dense<0.000000e+00> : vector<4x96xf32>
    %81 = tpu.matmul %49, %0, %cst_33 {dimension_numbers = #tpu.dot_dimension_numbers<[1], [0], [0], [1], [0, 0, 1, 1], [], []>} : vector<4x32xf32>, vector<32x96xf32>, vector<4x96xf32> -> vector<4x96xf32>
    %82 = arith.addf %81, %5 : vector<4x96xf32>
    %83 = vector.extract_strided_slice %80 {offsets = [0, 0], sizes = [4, 32], strides = [1, 1]} : vector<4x96xf32> to vector<4x32xf32>
    %84 = vector.extract_strided_slice %82 {offsets = [0, 0], sizes = [4, 32], strides = [1, 1]} : vector<4x96xf32> to vector<4x32xf32>
    %85 = arith.addf %83, %84 : vector<4x32xf32>
    %86 = arith.negf %85 : vector<4x32xf32>
    %87 = math.exp %86 : vector<4x32xf32>
    %cst_34 = arith.constant 1.000000e+00 : f32
    %88 = vector.broadcast %cst_34 : f32 to vector<4x32xf32>
    %89 = arith.addf %88, %87 : vector<4x32xf32>
    %90 = arith.divf %88, %89 : vector<4x32xf32>
    %91 = vector.extract_strided_slice %80 {offsets = [0, 32], sizes = [4, 32], strides = [1, 1]} : vector<4x96xf32> to vector<4x32xf32>
    %92 = vector.extract_strided_slice %82 {offsets = [0, 32], sizes = [4, 32], strides = [1, 1]} : vector<4x96xf32> to vector<4x32xf32>
    %93 = arith.addf %91, %92 : vector<4x32xf32>
    %94 = arith.negf %93 : vector<4x32xf32>
    %95 = math.exp %94 : vector<4x32xf32>
    %cst_35 = arith.constant 1.000000e+00 : f32
    %96 = vector.broadcast %cst_35 : f32 to vector<4x32xf32>
    %97 = arith.addf %96, %95 : vector<4x32xf32>
    %98 = arith.divf %96, %97 : vector<4x32xf32>
    %99 = vector.extract_strided_slice %80 {offsets = [0, 64], sizes = [4, 32], strides = [1, 1]} : vector<4x96xf32> to vector<4x32xf32>
    %100 = vector.extract_strided_slice %82 {offsets = [0, 64], sizes = [4, 32], strides = [1, 1]} : vector<4x96xf32> to vector<4x32xf32>
    %101 = arith.mulf %90, %100 : vector<4x32xf32>
    %102 = arith.addf %99, %101 : vector<4x32xf32>
    %103 = math.tanh %102 : vector<4x32xf32>
    %cst_36 = arith.constant 1.000000e+00 : f32
    %104 = vector.broadcast %cst_36 : f32 to vector<4x32xf32>
    %105 = arith.subf %104, %98 : vector<4x32xf32>
    %106 = arith.mulf %105, %103 : vector<4x32xf32>
    %107 = arith.mulf %98, %49 : vector<4x32xf32>
    %108 = arith.addf %106, %107 : vector<4x32xf32>
    %cst_37 = arith.constant dense<0.000000e+00> : vector<4x96xf32>
    %109 = tpu.matmul %108, %1, %cst_37 {dimension_numbers = #tpu.dot_dimension_numbers<[1], [0], [0], [1], [0, 0, 1, 1], [], []>} : vector<4x32xf32>, vector<32x96xf32>, vector<4x96xf32> -> vector<4x96xf32>
    %110 = arith.addf %109, %8 : vector<4x96xf32>
    %cst_38 = arith.constant dense<0.000000e+00> : vector<4x96xf32>
    %111 = tpu.matmul %79, %2, %cst_38 {dimension_numbers = #tpu.dot_dimension_numbers<[1], [0], [0], [1], [0, 0, 1, 1], [], []>} : vector<4x32xf32>, vector<32x96xf32>, vector<4x96xf32> -> vector<4x96xf32>
    %112 = arith.addf %111, %11 : vector<4x96xf32>
    %113 = vector.extract_strided_slice %110 {offsets = [0, 0], sizes = [4, 32], strides = [1, 1]} : vector<4x96xf32> to vector<4x32xf32>
    %114 = vector.extract_strided_slice %112 {offsets = [0, 0], sizes = [4, 32], strides = [1, 1]} : vector<4x96xf32> to vector<4x32xf32>
    %115 = arith.addf %113, %114 : vector<4x32xf32>
    %116 = arith.negf %115 : vector<4x32xf32>
    %117 = math.exp %116 : vector<4x32xf32>
    %cst_39 = arith.constant 1.000000e+00 : f32
    %118 = vector.broadcast %cst_39 : f32 to vector<4x32xf32>
    %119 = arith.addf %118, %117 : vector<4x32xf32>
    %120 = arith.divf %118, %119 : vector<4x32xf32>
    %121 = vector.extract_strided_slice %110 {offsets = [0, 32], sizes = [4, 32], strides = [1, 1]} : vector<4x96xf32> to vector<4x32xf32>
    %122 = vector.extract_strided_slice %112 {offsets = [0, 32], sizes = [4, 32], strides = [1, 1]} : vector<4x96xf32> to vector<4x32xf32>
    %123 = arith.addf %121, %122 : vector<4x32xf32>
    %124 = arith.negf %123 : vector<4x32xf32>
    %125 = math.exp %124 : vector<4x32xf32>
    %cst_40 = arith.constant 1.000000e+00 : f32
    %126 = vector.broadcast %cst_40 : f32 to vector<4x32xf32>
    %127 = arith.addf %126, %125 : vector<4x32xf32>
    %128 = arith.divf %126, %127 : vector<4x32xf32>
    %129 = vector.extract_strided_slice %110 {offsets = [0, 64], sizes = [4, 32], strides = [1, 1]} : vector<4x96xf32> to vector<4x32xf32>
    %130 = vector.extract_strided_slice %112 {offsets = [0, 64], sizes = [4, 32], strides = [1, 1]} : vector<4x96xf32> to vector<4x32xf32>
    %131 = arith.mulf %120, %130 : vector<4x32xf32>
    %132 = arith.addf %129, %131 : vector<4x32xf32>
    %133 = math.tanh %132 : vector<4x32xf32>
    %cst_41 = arith.constant 1.000000e+00 : f32
    %134 = vector.broadcast %cst_41 : f32 to vector<4x32xf32>
    %135 = arith.subf %134, %128 : vector<4x32xf32>
    %136 = arith.mulf %135, %133 : vector<4x32xf32>
    %137 = arith.mulf %128, %79 : vector<4x32xf32>
    %138 = arith.addf %136, %137 : vector<4x32xf32>
    %c8 = arith.constant 8 : index
    %c0_42 = arith.constant 0 : index
    %139 = vector.load %arg18[%c8, %c0_42] : memref<32x96xf32, #tpu.memory_space<vmem>>, vector<4x96xf32>
    %cst_43 = arith.constant dense<0.000000e+00> : vector<4x96xf32>
    %140 = tpu.matmul %108, %0, %cst_43 {dimension_numbers = #tpu.dot_dimension_numbers<[1], [0], [0], [1], [0, 0, 1, 1], [], []>} : vector<4x32xf32>, vector<32x96xf32>, vector<4x96xf32> -> vector<4x96xf32>
    %141 = arith.addf %140, %5 : vector<4x96xf32>
    %142 = vector.extract_strided_slice %139 {offsets = [0, 0], sizes = [4, 32], strides = [1, 1]} : vector<4x96xf32> to vector<4x32xf32>
    %143 = vector.extract_strided_slice %141 {offsets = [0, 0], sizes = [4, 32], strides = [1, 1]} : vector<4x96xf32> to vector<4x32xf32>
    %144 = arith.addf %142, %143 : vector<4x32xf32>
    %145 = arith.negf %144 : vector<4x32xf32>
    %146 = math.exp %145 : vector<4x32xf32>
    %cst_44 = arith.constant 1.000000e+00 : f32
    %147 = vector.broadcast %cst_44 : f32 to vector<4x32xf32>
    %148 = arith.addf %147, %146 : vector<4x32xf32>
    %149 = arith.divf %147, %148 : vector<4x32xf32>
    %150 = vector.extract_strided_slice %139 {offsets = [0, 32], sizes = [4, 32], strides = [1, 1]} : vector<4x96xf32> to vector<4x32xf32>
    %151 = vector.extract_strided_slice %141 {offsets = [0, 32], sizes = [4, 32], strides = [1, 1]} : vector<4x96xf32> to vector<4x32xf32>
    %152 = arith.addf %150, %151 : vector<4x32xf32>
    %153 = arith.negf %152 : vector<4x32xf32>
    %154 = math.exp %153 : vector<4x32xf32>
    %cst_45 = arith.constant 1.000000e+00 : f32
    %155 = vector.broadcast %cst_45 : f32 to vector<4x32xf32>
    %156 = arith.addf %155, %154 : vector<4x32xf32>
    %157 = arith.divf %155, %156 : vector<4x32xf32>
    %158 = vector.extract_strided_slice %139 {offsets = [0, 64], sizes = [4, 32], strides = [1, 1]} : vector<4x96xf32> to vector<4x32xf32>
    %159 = vector.extract_strided_slice %141 {offsets = [0, 64], sizes = [4, 32], strides = [1, 1]} : vector<4x96xf32> to vector<4x32xf32>
    %160 = arith.mulf %149, %159 : vector<4x32xf32>
    %161 = arith.addf %158, %160 : vector<4x32xf32>
    %162 = math.tanh %161 : vector<4x32xf32>
    %cst_46 = arith.constant 1.000000e+00 : f32
    %163 = vector.broadcast %cst_46 : f32 to vector<4x32xf32>
    %164 = arith.subf %163, %157 : vector<4x32xf32>
    %165 = arith.mulf %164, %162 : vector<4x32xf32>
    %166 = arith.mulf %157, %108 : vector<4x32xf32>
    %167 = arith.addf %165, %166 : vector<4x32xf32>
    %cst_47 = arith.constant dense<0.000000e+00> : vector<4x96xf32>
    %168 = tpu.matmul %167, %1, %cst_47 {dimension_numbers = #tpu.dot_dimension_numbers<[1], [0], [0], [1], [0, 0, 1, 1], [], []>} : vector<4x32xf32>, vector<32x96xf32>, vector<4x96xf32> -> vector<4x96xf32>
    %169 = arith.addf %168, %8 : vector<4x96xf32>
    %cst_48 = arith.constant dense<0.000000e+00> : vector<4x96xf32>
    %170 = tpu.matmul %138, %2, %cst_48 {dimension_numbers = #tpu.dot_dimension_numbers<[1], [0], [0], [1], [0, 0, 1, 1], [], []>} : vector<4x32xf32>, vector<32x96xf32>, vector<4x96xf32> -> vector<4x96xf32>
    %171 = arith.addf %170, %11 : vector<4x96xf32>
    %172 = vector.extract_strided_slice %169 {offsets = [0, 0], sizes = [4, 32], strides = [1, 1]} : vector<4x96xf32> to vector<4x32xf32>
    %173 = vector.extract_strided_slice %171 {offsets = [0, 0], sizes = [4, 32], strides = [1, 1]} : vector<4x96xf32> to vector<4x32xf32>
    %174 = arith.addf %172, %173 : vector<4x32xf32>
    %175 = arith.negf %174 : vector<4x32xf32>
    %176 = math.exp %175 : vector<4x32xf32>
    %cst_49 = arith.constant 1.000000e+00 : f32
    %177 = vector.broadcast %cst_49 : f32 to vector<4x32xf32>
    %178 = arith.addf %177, %176 : vector<4x32xf32>
    %179 = arith.divf %177, %178 : vector<4x32xf32>
    %180 = vector.extract_strided_slice %169 {offsets = [0, 32], sizes = [4, 32], strides = [1, 1]} : vector<4x96xf32> to vector<4x32xf32>
    %181 = vector.extract_strided_slice %171 {offsets = [0, 32], sizes = [4, 32], strides = [1, 1]} : vector<4x96xf32> to vector<4x32xf32>
    %182 = arith.addf %180, %181 : vector<4x32xf32>
    %183 = arith.negf %182 : vector<4x32xf32>
    %184 = math.exp %183 : vector<4x32xf32>
    %cst_50 = arith.constant 1.000000e+00 : f32
    %185 = vector.broadcast %cst_50 : f32 to vector<4x32xf32>
    %186 = arith.addf %185, %184 : vector<4x32xf32>
    %187 = arith.divf %185, %186 : vector<4x32xf32>
    %188 = vector.extract_strided_slice %169 {offsets = [0, 64], sizes = [4, 32], strides = [1, 1]} : vector<4x96xf32> to vector<4x32xf32>
    %189 = vector.extract_strided_slice %171 {offsets = [0, 64], sizes = [4, 32], strides = [1, 1]} : vector<4x96xf32> to vector<4x32xf32>
    %190 = arith.mulf %179, %189 : vector<4x32xf32>
    %191 = arith.addf %188, %190 : vector<4x32xf32>
    %192 = math.tanh %191 : vector<4x32xf32>
    %cst_51 = arith.constant 1.000000e+00 : f32
    %193 = vector.broadcast %cst_51 : f32 to vector<4x32xf32>
    %194 = arith.subf %193, %187 : vector<4x32xf32>
    %195 = arith.mulf %194, %192 : vector<4x32xf32>
    %196 = arith.mulf %187, %138 : vector<4x32xf32>
    %197 = arith.addf %195, %196 : vector<4x32xf32>
    %c12 = arith.constant 12 : index
    %c0_52 = arith.constant 0 : index
    %198 = vector.load %arg18[%c12, %c0_52] : memref<32x96xf32, #tpu.memory_space<vmem>>, vector<4x96xf32>
    %cst_53 = arith.constant dense<0.000000e+00> : vector<4x96xf32>
    %199 = tpu.matmul %167, %0, %cst_53 {dimension_numbers = #tpu.dot_dimension_numbers<[1], [0], [0], [1], [0, 0, 1, 1], [], []>} : vector<4x32xf32>, vector<32x96xf32>, vector<4x96xf32> -> vector<4x96xf32>
    %200 = arith.addf %199, %5 : vector<4x96xf32>
    %201 = vector.extract_strided_slice %198 {offsets = [0, 0], sizes = [4, 32], strides = [1, 1]} : vector<4x96xf32> to vector<4x32xf32>
    %202 = vector.extract_strided_slice %200 {offsets = [0, 0], sizes = [4, 32], strides = [1, 1]} : vector<4x96xf32> to vector<4x32xf32>
    %203 = arith.addf %201, %202 : vector<4x32xf32>
    %204 = arith.negf %203 : vector<4x32xf32>
    %205 = math.exp %204 : vector<4x32xf32>
    %cst_54 = arith.constant 1.000000e+00 : f32
    %206 = vector.broadcast %cst_54 : f32 to vector<4x32xf32>
    %207 = arith.addf %206, %205 : vector<4x32xf32>
    %208 = arith.divf %206, %207 : vector<4x32xf32>
    %209 = vector.extract_strided_slice %198 {offsets = [0, 32], sizes = [4, 32], strides = [1, 1]} : vector<4x96xf32> to vector<4x32xf32>
    %210 = vector.extract_strided_slice %200 {offsets = [0, 32], sizes = [4, 32], strides = [1, 1]} : vector<4x96xf32> to vector<4x32xf32>
    %211 = arith.addf %209, %210 : vector<4x32xf32>
    %212 = arith.negf %211 : vector<4x32xf32>
    %213 = math.exp %212 : vector<4x32xf32>
    %cst_55 = arith.constant 1.000000e+00 : f32
    %214 = vector.broadcast %cst_55 : f32 to vector<4x32xf32>
    %215 = arith.addf %214, %213 : vector<4x32xf32>
    %216 = arith.divf %214, %215 : vector<4x32xf32>
    %217 = vector.extract_strided_slice %198 {offsets = [0, 64], sizes = [4, 32], strides = [1, 1]} : vector<4x96xf32> to vector<4x32xf32>
    %218 = vector.extract_strided_slice %200 {offsets = [0, 64], sizes = [4, 32], strides = [1, 1]} : vector<4x96xf32> to vector<4x32xf32>
    %219 = arith.mulf %208, %218 : vector<4x32xf32>
    %220 = arith.addf %217, %219 : vector<4x32xf32>
    %221 = math.tanh %220 : vector<4x32xf32>
    %cst_56 = arith.constant 1.000000e+00 : f32
    %222 = vector.broadcast %cst_56 : f32 to vector<4x32xf32>
    %223 = arith.subf %222, %216 : vector<4x32xf32>
    %224 = arith.mulf %223, %221 : vector<4x32xf32>
    %225 = arith.mulf %216, %167 : vector<4x32xf32>
    %226 = arith.addf %224, %225 : vector<4x32xf32>
    %cst_57 = arith.constant dense<0.000000e+00> : vector<4x96xf32>
    %227 = tpu.matmul %226, %1, %cst_57 {dimension_numbers = #tpu.dot_dimension_numbers<[1], [0], [0], [1], [0, 0, 1, 1], [], []>} : vector<4x32xf32>, vector<32x96xf32>, vector<4x96xf32> -> vector<4x96xf32>
    %228 = arith.addf %227, %8 : vector<4x96xf32>
    %cst_58 = arith.constant dense<0.000000e+00> : vector<4x96xf32>
    %229 = tpu.matmul %197, %2, %cst_58 {dimension_numbers = #tpu.dot_dimension_numbers<[1], [0], [0], [1], [0, 0, 1, 1], [], []>} : vector<4x32xf32>, vector<32x96xf32>, vector<4x96xf32> -> vector<4x96xf32>
    %230 = arith.addf %229, %11 : vector<4x96xf32>
    %231 = vector.extract_strided_slice %228 {offsets = [0, 0], sizes = [4, 32], strides = [1, 1]} : vector<4x96xf32> to vector<4x32xf32>
    %232 = vector.extract_strided_slice %230 {offsets = [0, 0], sizes = [4, 32], strides = [1, 1]} : vector<4x96xf32> to vector<4x32xf32>
    %233 = arith.addf %231, %232 : vector<4x32xf32>
    %234 = arith.negf %233 : vector<4x32xf32>
    %235 = math.exp %234 : vector<4x32xf32>
    %cst_59 = arith.constant 1.000000e+00 : f32
    %236 = vector.broadcast %cst_59 : f32 to vector<4x32xf32>
    %237 = arith.addf %236, %235 : vector<4x32xf32>
    %238 = arith.divf %236, %237 : vector<4x32xf32>
    %239 = vector.extract_strided_slice %228 {offsets = [0, 32], sizes = [4, 32], strides = [1, 1]} : vector<4x96xf32> to vector<4x32xf32>
    %240 = vector.extract_strided_slice %230 {offsets = [0, 32], sizes = [4, 32], strides = [1, 1]} : vector<4x96xf32> to vector<4x32xf32>
    %241 = arith.addf %239, %240 : vector<4x32xf32>
    %242 = arith.negf %241 : vector<4x32xf32>
    %243 = math.exp %242 : vector<4x32xf32>
    %cst_60 = arith.constant 1.000000e+00 : f32
    %244 = vector.broadcast %cst_60 : f32 to vector<4x32xf32>
    %245 = arith.addf %244, %243 : vector<4x32xf32>
    %246 = arith.divf %244, %245 : vector<4x32xf32>
    %247 = vector.extract_strided_slice %228 {offsets = [0, 64], sizes = [4, 32], strides = [1, 1]} : vector<4x96xf32> to vector<4x32xf32>
    %248 = vector.extract_strided_slice %230 {offsets = [0, 64], sizes = [4, 32], strides = [1, 1]} : vector<4x96xf32> to vector<4x32xf32>
    %249 = arith.mulf %238, %248 : vector<4x32xf32>
    %250 = arith.addf %247, %249 : vector<4x32xf32>
    %251 = math.tanh %250 : vector<4x32xf32>
    %cst_61 = arith.constant 1.000000e+00 : f32
    %252 = vector.broadcast %cst_61 : f32 to vector<4x32xf32>
    %253 = arith.subf %252, %246 : vector<4x32xf32>
    %254 = arith.mulf %253, %251 : vector<4x32xf32>
    %255 = arith.mulf %246, %197 : vector<4x32xf32>
    %256 = arith.addf %254, %255 : vector<4x32xf32>
    %c16 = arith.constant 16 : index
    %c0_62 = arith.constant 0 : index
    %257 = vector.load %arg18[%c16, %c0_62] : memref<32x96xf32, #tpu.memory_space<vmem>>, vector<4x96xf32>
    %cst_63 = arith.constant dense<0.000000e+00> : vector<4x96xf32>
    %258 = tpu.matmul %226, %0, %cst_63 {dimension_numbers = #tpu.dot_dimension_numbers<[1], [0], [0], [1], [0, 0, 1, 1], [], []>} : vector<4x32xf32>, vector<32x96xf32>, vector<4x96xf32> -> vector<4x96xf32>
    %259 = arith.addf %258, %5 : vector<4x96xf32>
    %260 = vector.extract_strided_slice %257 {offsets = [0, 0], sizes = [4, 32], strides = [1, 1]} : vector<4x96xf32> to vector<4x32xf32>
    %261 = vector.extract_strided_slice %259 {offsets = [0, 0], sizes = [4, 32], strides = [1, 1]} : vector<4x96xf32> to vector<4x32xf32>
    %262 = arith.addf %260, %261 : vector<4x32xf32>
    %263 = arith.negf %262 : vector<4x32xf32>
    %264 = math.exp %263 : vector<4x32xf32>
    %cst_64 = arith.constant 1.000000e+00 : f32
    %265 = vector.broadcast %cst_64 : f32 to vector<4x32xf32>
    %266 = arith.addf %265, %264 : vector<4x32xf32>
    %267 = arith.divf %265, %266 : vector<4x32xf32>
    %268 = vector.extract_strided_slice %257 {offsets = [0, 32], sizes = [4, 32], strides = [1, 1]} : vector<4x96xf32> to vector<4x32xf32>
    %269 = vector.extract_strided_slice %259 {offsets = [0, 32], sizes = [4, 32], strides = [1, 1]} : vector<4x96xf32> to vector<4x32xf32>
    %270 = arith.addf %268, %269 : vector<4x32xf32>
    %271 = arith.negf %270 : vector<4x32xf32>
    %272 = math.exp %271 : vector<4x32xf32>
    %cst_65 = arith.constant 1.000000e+00 : f32
    %273 = vector.broadcast %cst_65 : f32 to vector<4x32xf32>
    %274 = arith.addf %273, %272 : vector<4x32xf32>
    %275 = arith.divf %273, %274 : vector<4x32xf32>
    %276 = vector.extract_strided_slice %257 {offsets = [0, 64], sizes = [4, 32], strides = [1, 1]} : vector<4x96xf32> to vector<4x32xf32>
    %277 = vector.extract_strided_slice %259 {offsets = [0, 64], sizes = [4, 32], strides = [1, 1]} : vector<4x96xf32> to vector<4x32xf32>
    %278 = arith.mulf %267, %277 : vector<4x32xf32>
    %279 = arith.addf %276, %278 : vector<4x32xf32>
    %280 = math.tanh %279 : vector<4x32xf32>
    %cst_66 = arith.constant 1.000000e+00 : f32
    %281 = vector.broadcast %cst_66 : f32 to vector<4x32xf32>
    %282 = arith.subf %281, %275 : vector<4x32xf32>
    %283 = arith.mulf %282, %280 : vector<4x32xf32>
    %284 = arith.mulf %275, %226 : vector<4x32xf32>
    %285 = arith.addf %283, %284 : vector<4x32xf32>
    %cst_67 = arith.constant dense<0.000000e+00> : vector<4x96xf32>
    %286 = tpu.matmul %285, %1, %cst_67 {dimension_numbers = #tpu.dot_dimension_numbers<[1], [0], [0], [1], [0, 0, 1, 1], [], []>} : vector<4x32xf32>, vector<32x96xf32>, vector<4x96xf32> -> vector<4x96xf32>
    %287 = arith.addf %286, %8 : vector<4x96xf32>
    %cst_68 = arith.constant dense<0.000000e+00> : vector<4x96xf32>
    %288 = tpu.matmul %256, %2, %cst_68 {dimension_numbers = #tpu.dot_dimension_numbers<[1], [0], [0], [1], [0, 0, 1, 1], [], []>} : vector<4x32xf32>, vector<32x96xf32>, vector<4x96xf32> -> vector<4x96xf32>
    %289 = arith.addf %288, %11 : vector<4x96xf32>
    %290 = vector.extract_strided_slice %287 {offsets = [0, 0], sizes = [4, 32], strides = [1, 1]} : vector<4x96xf32> to vector<4x32xf32>
    %291 = vector.extract_strided_slice %289 {offsets = [0, 0], sizes = [4, 32], strides = [1, 1]} : vector<4x96xf32> to vector<4x32xf32>
    %292 = arith.addf %290, %291 : vector<4x32xf32>
    %293 = arith.negf %292 : vector<4x32xf32>
    %294 = math.exp %293 : vector<4x32xf32>
    %cst_69 = arith.constant 1.000000e+00 : f32
    %295 = vector.broadcast %cst_69 : f32 to vector<4x32xf32>
    %296 = arith.addf %295, %294 : vector<4x32xf32>
    %297 = arith.divf %295, %296 : vector<4x32xf32>
    %298 = vector.extract_strided_slice %287 {offsets = [0, 32], sizes = [4, 32], strides = [1, 1]} : vector<4x96xf32> to vector<4x32xf32>
    %299 = vector.extract_strided_slice %289 {offsets = [0, 32], sizes = [4, 32], strides = [1, 1]} : vector<4x96xf32> to vector<4x32xf32>
    %300 = arith.addf %298, %299 : vector<4x32xf32>
    %301 = arith.negf %300 : vector<4x32xf32>
    %302 = math.exp %301 : vector<4x32xf32>
    %cst_70 = arith.constant 1.000000e+00 : f32
    %303 = vector.broadcast %cst_70 : f32 to vector<4x32xf32>
    %304 = arith.addf %303, %302 : vector<4x32xf32>
    %305 = arith.divf %303, %304 : vector<4x32xf32>
    %306 = vector.extract_strided_slice %287 {offsets = [0, 64], sizes = [4, 32], strides = [1, 1]} : vector<4x96xf32> to vector<4x32xf32>
    %307 = vector.extract_strided_slice %289 {offsets = [0, 64], sizes = [4, 32], strides = [1, 1]} : vector<4x96xf32> to vector<4x32xf32>
    %308 = arith.mulf %297, %307 : vector<4x32xf32>
    %309 = arith.addf %306, %308 : vector<4x32xf32>
    %310 = math.tanh %309 : vector<4x32xf32>
    %cst_71 = arith.constant 1.000000e+00 : f32
    %311 = vector.broadcast %cst_71 : f32 to vector<4x32xf32>
    %312 = arith.subf %311, %305 : vector<4x32xf32>
    %313 = arith.mulf %312, %310 : vector<4x32xf32>
    %314 = arith.mulf %305, %256 : vector<4x32xf32>
    %315 = arith.addf %313, %314 : vector<4x32xf32>
    %c20 = arith.constant 20 : index
    %c0_72 = arith.constant 0 : index
    %316 = vector.load %arg18[%c20, %c0_72] : memref<32x96xf32, #tpu.memory_space<vmem>>, vector<4x96xf32>
    %cst_73 = arith.constant dense<0.000000e+00> : vector<4x96xf32>
    %317 = tpu.matmul %285, %0, %cst_73 {dimension_numbers = #tpu.dot_dimension_numbers<[1], [0], [0], [1], [0, 0, 1, 1], [], []>} : vector<4x32xf32>, vector<32x96xf32>, vector<4x96xf32> -> vector<4x96xf32>
    %318 = arith.addf %317, %5 : vector<4x96xf32>
    %319 = vector.extract_strided_slice %316 {offsets = [0, 0], sizes = [4, 32], strides = [1, 1]} : vector<4x96xf32> to vector<4x32xf32>
    %320 = vector.extract_strided_slice %318 {offsets = [0, 0], sizes = [4, 32], strides = [1, 1]} : vector<4x96xf32> to vector<4x32xf32>
    %321 = arith.addf %319, %320 : vector<4x32xf32>
    %322 = arith.negf %321 : vector<4x32xf32>
    %323 = math.exp %322 : vector<4x32xf32>
    %cst_74 = arith.constant 1.000000e+00 : f32
    %324 = vector.broadcast %cst_74 : f32 to vector<4x32xf32>
    %325 = arith.addf %324, %323 : vector<4x32xf32>
    %326 = arith.divf %324, %325 : vector<4x32xf32>
    %327 = vector.extract_strided_slice %316 {offsets = [0, 32], sizes = [4, 32], strides = [1, 1]} : vector<4x96xf32> to vector<4x32xf32>
    %328 = vector.extract_strided_slice %318 {offsets = [0, 32], sizes = [4, 32], strides = [1, 1]} : vector<4x96xf32> to vector<4x32xf32>
    %329 = arith.addf %327, %328 : vector<4x32xf32>
    %330 = arith.negf %329 : vector<4x32xf32>
    %331 = math.exp %330 : vector<4x32xf32>
    %cst_75 = arith.constant 1.000000e+00 : f32
    %332 = vector.broadcast %cst_75 : f32 to vector<4x32xf32>
    %333 = arith.addf %332, %331 : vector<4x32xf32>
    %334 = arith.divf %332, %333 : vector<4x32xf32>
    %335 = vector.extract_strided_slice %316 {offsets = [0, 64], sizes = [4, 32], strides = [1, 1]} : vector<4x96xf32> to vector<4x32xf32>
    %336 = vector.extract_strided_slice %318 {offsets = [0, 64], sizes = [4, 32], strides = [1, 1]} : vector<4x96xf32> to vector<4x32xf32>
    %337 = arith.mulf %326, %336 : vector<4x32xf32>
    %338 = arith.addf %335, %337 : vector<4x32xf32>
    %339 = math.tanh %338 : vector<4x32xf32>
    %cst_76 = arith.constant 1.000000e+00 : f32
    %340 = vector.broadcast %cst_76 : f32 to vector<4x32xf32>
    %341 = arith.subf %340, %334 : vector<4x32xf32>
    %342 = arith.mulf %341, %339 : vector<4x32xf32>
    %343 = arith.mulf %334, %285 : vector<4x32xf32>
    %344 = arith.addf %342, %343 : vector<4x32xf32>
    %cst_77 = arith.constant dense<0.000000e+00> : vector<4x96xf32>
    %345 = tpu.matmul %344, %1, %cst_77 {dimension_numbers = #tpu.dot_dimension_numbers<[1], [0], [0], [1], [0, 0, 1, 1], [], []>} : vector<4x32xf32>, vector<32x96xf32>, vector<4x96xf32> -> vector<4x96xf32>
    %346 = arith.addf %345, %8 : vector<4x96xf32>
    %cst_78 = arith.constant dense<0.000000e+00> : vector<4x96xf32>
    %347 = tpu.matmul %315, %2, %cst_78 {dimension_numbers = #tpu.dot_dimension_numbers<[1], [0], [0], [1], [0, 0, 1, 1], [], []>} : vector<4x32xf32>, vector<32x96xf32>, vector<4x96xf32> -> vector<4x96xf32>
    %348 = arith.addf %347, %11 : vector<4x96xf32>
    %349 = vector.extract_strided_slice %346 {offsets = [0, 0], sizes = [4, 32], strides = [1, 1]} : vector<4x96xf32> to vector<4x32xf32>
    %350 = vector.extract_strided_slice %348 {offsets = [0, 0], sizes = [4, 32], strides = [1, 1]} : vector<4x96xf32> to vector<4x32xf32>
    %351 = arith.addf %349, %350 : vector<4x32xf32>
    %352 = arith.negf %351 : vector<4x32xf32>
    %353 = math.exp %352 : vector<4x32xf32>
    %cst_79 = arith.constant 1.000000e+00 : f32
    %354 = vector.broadcast %cst_79 : f32 to vector<4x32xf32>
    %355 = arith.addf %354, %353 : vector<4x32xf32>
    %356 = arith.divf %354, %355 : vector<4x32xf32>
    %357 = vector.extract_strided_slice %346 {offsets = [0, 32], sizes = [4, 32], strides = [1, 1]} : vector<4x96xf32> to vector<4x32xf32>
    %358 = vector.extract_strided_slice %348 {offsets = [0, 32], sizes = [4, 32], strides = [1, 1]} : vector<4x96xf32> to vector<4x32xf32>
    %359 = arith.addf %357, %358 : vector<4x32xf32>
    %360 = arith.negf %359 : vector<4x32xf32>
    %361 = math.exp %360 : vector<4x32xf32>
    %cst_80 = arith.constant 1.000000e+00 : f32
    %362 = vector.broadcast %cst_80 : f32 to vector<4x32xf32>
    %363 = arith.addf %362, %361 : vector<4x32xf32>
    %364 = arith.divf %362, %363 : vector<4x32xf32>
    %365 = vector.extract_strided_slice %346 {offsets = [0, 64], sizes = [4, 32], strides = [1, 1]} : vector<4x96xf32> to vector<4x32xf32>
    %366 = vector.extract_strided_slice %348 {offsets = [0, 64], sizes = [4, 32], strides = [1, 1]} : vector<4x96xf32> to vector<4x32xf32>
    %367 = arith.mulf %356, %366 : vector<4x32xf32>
    %368 = arith.addf %365, %367 : vector<4x32xf32>
    %369 = math.tanh %368 : vector<4x32xf32>
    %cst_81 = arith.constant 1.000000e+00 : f32
    %370 = vector.broadcast %cst_81 : f32 to vector<4x32xf32>
    %371 = arith.subf %370, %364 : vector<4x32xf32>
    %372 = arith.mulf %371, %369 : vector<4x32xf32>
    %373 = arith.mulf %364, %315 : vector<4x32xf32>
    %374 = arith.addf %372, %373 : vector<4x32xf32>
    %c24 = arith.constant 24 : index
    %c0_82 = arith.constant 0 : index
    %375 = vector.load %arg18[%c24, %c0_82] : memref<32x96xf32, #tpu.memory_space<vmem>>, vector<4x96xf32>
    %cst_83 = arith.constant dense<0.000000e+00> : vector<4x96xf32>
    %376 = tpu.matmul %344, %0, %cst_83 {dimension_numbers = #tpu.dot_dimension_numbers<[1], [0], [0], [1], [0, 0, 1, 1], [], []>} : vector<4x32xf32>, vector<32x96xf32>, vector<4x96xf32> -> vector<4x96xf32>
    %377 = arith.addf %376, %5 : vector<4x96xf32>
    %378 = vector.extract_strided_slice %375 {offsets = [0, 0], sizes = [4, 32], strides = [1, 1]} : vector<4x96xf32> to vector<4x32xf32>
    %379 = vector.extract_strided_slice %377 {offsets = [0, 0], sizes = [4, 32], strides = [1, 1]} : vector<4x96xf32> to vector<4x32xf32>
    %380 = arith.addf %378, %379 : vector<4x32xf32>
    %381 = arith.negf %380 : vector<4x32xf32>
    %382 = math.exp %381 : vector<4x32xf32>
    %cst_84 = arith.constant 1.000000e+00 : f32
    %383 = vector.broadcast %cst_84 : f32 to vector<4x32xf32>
    %384 = arith.addf %383, %382 : vector<4x32xf32>
    %385 = arith.divf %383, %384 : vector<4x32xf32>
    %386 = vector.extract_strided_slice %375 {offsets = [0, 32], sizes = [4, 32], strides = [1, 1]} : vector<4x96xf32> to vector<4x32xf32>
    %387 = vector.extract_strided_slice %377 {offsets = [0, 32], sizes = [4, 32], strides = [1, 1]} : vector<4x96xf32> to vector<4x32xf32>
    %388 = arith.addf %386, %387 : vector<4x32xf32>
    %389 = arith.negf %388 : vector<4x32xf32>
    %390 = math.exp %389 : vector<4x32xf32>
    %cst_85 = arith.constant 1.000000e+00 : f32
    %391 = vector.broadcast %cst_85 : f32 to vector<4x32xf32>
    %392 = arith.addf %391, %390 : vector<4x32xf32>
    %393 = arith.divf %391, %392 : vector<4x32xf32>
    %394 = vector.extract_strided_slice %375 {offsets = [0, 64], sizes = [4, 32], strides = [1, 1]} : vector<4x96xf32> to vector<4x32xf32>
    %395 = vector.extract_strided_slice %377 {offsets = [0, 64], sizes = [4, 32], strides = [1, 1]} : vector<4x96xf32> to vector<4x32xf32>
    %396 = arith.mulf %385, %395 : vector<4x32xf32>
    %397 = arith.addf %394, %396 : vector<4x32xf32>
    %398 = math.tanh %397 : vector<4x32xf32>
    %cst_86 = arith.constant 1.000000e+00 : f32
    %399 = vector.broadcast %cst_86 : f32 to vector<4x32xf32>
    %400 = arith.subf %399, %393 : vector<4x32xf32>
    %401 = arith.mulf %400, %398 : vector<4x32xf32>
    %402 = arith.mulf %393, %344 : vector<4x32xf32>
    %403 = arith.addf %401, %402 : vector<4x32xf32>
    %cst_87 = arith.constant dense<0.000000e+00> : vector<4x96xf32>
    %404 = tpu.matmul %403, %1, %cst_87 {dimension_numbers = #tpu.dot_dimension_numbers<[1], [0], [0], [1], [0, 0, 1, 1], [], []>} : vector<4x32xf32>, vector<32x96xf32>, vector<4x96xf32> -> vector<4x96xf32>
    %405 = arith.addf %404, %8 : vector<4x96xf32>
    %cst_88 = arith.constant dense<0.000000e+00> : vector<4x96xf32>
    %406 = tpu.matmul %374, %2, %cst_88 {dimension_numbers = #tpu.dot_dimension_numbers<[1], [0], [0], [1], [0, 0, 1, 1], [], []>} : vector<4x32xf32>, vector<32x96xf32>, vector<4x96xf32> -> vector<4x96xf32>
    %407 = arith.addf %406, %11 : vector<4x96xf32>
    %408 = vector.extract_strided_slice %405 {offsets = [0, 0], sizes = [4, 32], strides = [1, 1]} : vector<4x96xf32> to vector<4x32xf32>
    %409 = vector.extract_strided_slice %407 {offsets = [0, 0], sizes = [4, 32], strides = [1, 1]} : vector<4x96xf32> to vector<4x32xf32>
    %410 = arith.addf %408, %409 : vector<4x32xf32>
    %411 = arith.negf %410 : vector<4x32xf32>
    %412 = math.exp %411 : vector<4x32xf32>
    %cst_89 = arith.constant 1.000000e+00 : f32
    %413 = vector.broadcast %cst_89 : f32 to vector<4x32xf32>
    %414 = arith.addf %413, %412 : vector<4x32xf32>
    %415 = arith.divf %413, %414 : vector<4x32xf32>
    %416 = vector.extract_strided_slice %405 {offsets = [0, 32], sizes = [4, 32], strides = [1, 1]} : vector<4x96xf32> to vector<4x32xf32>
    %417 = vector.extract_strided_slice %407 {offsets = [0, 32], sizes = [4, 32], strides = [1, 1]} : vector<4x96xf32> to vector<4x32xf32>
    %418 = arith.addf %416, %417 : vector<4x32xf32>
    %419 = arith.negf %418 : vector<4x32xf32>
    %420 = math.exp %419 : vector<4x32xf32>
    %cst_90 = arith.constant 1.000000e+00 : f32
    %421 = vector.broadcast %cst_90 : f32 to vector<4x32xf32>
    %422 = arith.addf %421, %420 : vector<4x32xf32>
    %423 = arith.divf %421, %422 : vector<4x32xf32>
    %424 = vector.extract_strided_slice %405 {offsets = [0, 64], sizes = [4, 32], strides = [1, 1]} : vector<4x96xf32> to vector<4x32xf32>
    %425 = vector.extract_strided_slice %407 {offsets = [0, 64], sizes = [4, 32], strides = [1, 1]} : vector<4x96xf32> to vector<4x32xf32>
    %426 = arith.mulf %415, %425 : vector<4x32xf32>
    %427 = arith.addf %424, %426 : vector<4x32xf32>
    %428 = math.tanh %427 : vector<4x32xf32>
    %cst_91 = arith.constant 1.000000e+00 : f32
    %429 = vector.broadcast %cst_91 : f32 to vector<4x32xf32>
    %430 = arith.subf %429, %423 : vector<4x32xf32>
    %431 = arith.mulf %430, %428 : vector<4x32xf32>
    %432 = arith.mulf %423, %374 : vector<4x32xf32>
    %433 = arith.addf %431, %432 : vector<4x32xf32>
    %c28 = arith.constant 28 : index
    %c0_92 = arith.constant 0 : index
    %434 = vector.load %arg18[%c28, %c0_92] : memref<32x96xf32, #tpu.memory_space<vmem>>, vector<4x96xf32>
    %cst_93 = arith.constant dense<0.000000e+00> : vector<4x96xf32>
    %435 = tpu.matmul %403, %0, %cst_93 {dimension_numbers = #tpu.dot_dimension_numbers<[1], [0], [0], [1], [0, 0, 1, 1], [], []>} : vector<4x32xf32>, vector<32x96xf32>, vector<4x96xf32> -> vector<4x96xf32>
    %436 = arith.addf %435, %5 : vector<4x96xf32>
    %437 = vector.extract_strided_slice %434 {offsets = [0, 0], sizes = [4, 32], strides = [1, 1]} : vector<4x96xf32> to vector<4x32xf32>
    %438 = vector.extract_strided_slice %436 {offsets = [0, 0], sizes = [4, 32], strides = [1, 1]} : vector<4x96xf32> to vector<4x32xf32>
    %439 = arith.addf %437, %438 : vector<4x32xf32>
    %440 = arith.negf %439 : vector<4x32xf32>
    %441 = math.exp %440 : vector<4x32xf32>
    %cst_94 = arith.constant 1.000000e+00 : f32
    %442 = vector.broadcast %cst_94 : f32 to vector<4x32xf32>
    %443 = arith.addf %442, %441 : vector<4x32xf32>
    %444 = arith.divf %442, %443 : vector<4x32xf32>
    %445 = vector.extract_strided_slice %434 {offsets = [0, 32], sizes = [4, 32], strides = [1, 1]} : vector<4x96xf32> to vector<4x32xf32>
    %446 = vector.extract_strided_slice %436 {offsets = [0, 32], sizes = [4, 32], strides = [1, 1]} : vector<4x96xf32> to vector<4x32xf32>
    %447 = arith.addf %445, %446 : vector<4x32xf32>
    %448 = arith.negf %447 : vector<4x32xf32>
    %449 = math.exp %448 : vector<4x32xf32>
    %cst_95 = arith.constant 1.000000e+00 : f32
    %450 = vector.broadcast %cst_95 : f32 to vector<4x32xf32>
    %451 = arith.addf %450, %449 : vector<4x32xf32>
    %452 = arith.divf %450, %451 : vector<4x32xf32>
    %453 = vector.extract_strided_slice %434 {offsets = [0, 64], sizes = [4, 32], strides = [1, 1]} : vector<4x96xf32> to vector<4x32xf32>
    %454 = vector.extract_strided_slice %436 {offsets = [0, 64], sizes = [4, 32], strides = [1, 1]} : vector<4x96xf32> to vector<4x32xf32>
    %455 = arith.mulf %444, %454 : vector<4x32xf32>
    %456 = arith.addf %453, %455 : vector<4x32xf32>
    %457 = math.tanh %456 : vector<4x32xf32>
    %cst_96 = arith.constant 1.000000e+00 : f32
    %458 = vector.broadcast %cst_96 : f32 to vector<4x32xf32>
    %459 = arith.subf %458, %452 : vector<4x32xf32>
    %460 = arith.mulf %459, %457 : vector<4x32xf32>
    %461 = arith.mulf %452, %403 : vector<4x32xf32>
    %462 = arith.addf %460, %461 : vector<4x32xf32>
    %cst_97 = arith.constant dense<0.000000e+00> : vector<4x96xf32>
    %463 = tpu.matmul %462, %1, %cst_97 {dimension_numbers = #tpu.dot_dimension_numbers<[1], [0], [0], [1], [0, 0, 1, 1], [], []>} : vector<4x32xf32>, vector<32x96xf32>, vector<4x96xf32> -> vector<4x96xf32>
    %464 = arith.addf %463, %8 : vector<4x96xf32>
    %cst_98 = arith.constant dense<0.000000e+00> : vector<4x96xf32>
    %465 = tpu.matmul %433, %2, %cst_98 {dimension_numbers = #tpu.dot_dimension_numbers<[1], [0], [0], [1], [0, 0, 1, 1], [], []>} : vector<4x32xf32>, vector<32x96xf32>, vector<4x96xf32> -> vector<4x96xf32>
    %466 = arith.addf %465, %11 : vector<4x96xf32>
    %467 = vector.extract_strided_slice %464 {offsets = [0, 0], sizes = [4, 32], strides = [1, 1]} : vector<4x96xf32> to vector<4x32xf32>
    %468 = vector.extract_strided_slice %466 {offsets = [0, 0], sizes = [4, 32], strides = [1, 1]} : vector<4x96xf32> to vector<4x32xf32>
    %469 = arith.addf %467, %468 : vector<4x32xf32>
    %470 = arith.negf %469 : vector<4x32xf32>
    %471 = math.exp %470 : vector<4x32xf32>
    %cst_99 = arith.constant 1.000000e+00 : f32
    %472 = vector.broadcast %cst_99 : f32 to vector<4x32xf32>
    %473 = arith.addf %472, %471 : vector<4x32xf32>
    %474 = arith.divf %472, %473 : vector<4x32xf32>
    %475 = vector.extract_strided_slice %464 {offsets = [0, 32], sizes = [4, 32], strides = [1, 1]} : vector<4x96xf32> to vector<4x32xf32>
    %476 = vector.extract_strided_slice %466 {offsets = [0, 32], sizes = [4, 32], strides = [1, 1]} : vector<4x96xf32> to vector<4x32xf32>
    %477 = arith.addf %475, %476 : vector<4x32xf32>
    %478 = arith.negf %477 : vector<4x32xf32>
    %479 = math.exp %478 : vector<4x32xf32>
    %cst_100 = arith.constant 1.000000e+00 : f32
    %480 = vector.broadcast %cst_100 : f32 to vector<4x32xf32>
    %481 = arith.addf %480, %479 : vector<4x32xf32>
    %482 = arith.divf %480, %481 : vector<4x32xf32>
    %483 = vector.extract_strided_slice %464 {offsets = [0, 64], sizes = [4, 32], strides = [1, 1]} : vector<4x96xf32> to vector<4x32xf32>
    %484 = vector.extract_strided_slice %466 {offsets = [0, 64], sizes = [4, 32], strides = [1, 1]} : vector<4x96xf32> to vector<4x32xf32>
    %485 = arith.mulf %474, %484 : vector<4x32xf32>
    %486 = arith.addf %483, %485 : vector<4x32xf32>
    %487 = math.tanh %486 : vector<4x32xf32>
    %cst_101 = arith.constant 1.000000e+00 : f32
    %488 = vector.broadcast %cst_101 : f32 to vector<4x32xf32>
    %489 = arith.subf %488, %482 : vector<4x32xf32>
    %490 = arith.mulf %489, %487 : vector<4x32xf32>
    %491 = arith.mulf %482, %433 : vector<4x32xf32>
    %492 = arith.addf %490, %491 : vector<4x32xf32>
    %c0_102 = arith.constant 0 : index
    %c0_103 = arith.constant 0 : index
    %493 = vector.load %arg19[%c0_102, %c0_103] : memref<8x32xf32, #tpu.memory_space<vmem>>, vector<4x32xf32>
    tpu.vector_store %arg19[%c0_102, %c0_103], %462 {strides = array<i32>} : memref<8x32xf32, #tpu.memory_space<vmem>>, vector<4x32xf32>,
    %c4_104 = arith.constant 4 : index
    %c0_105 = arith.constant 0 : index
    %494 = vector.load %arg19[%c4_104, %c0_105] : memref<8x32xf32, #tpu.memory_space<vmem>>, vector<4x32xf32>
    tpu.vector_store %arg19[%c4_104, %c0_105], %492 {strides = array<i32>} : memref<8x32xf32, #tpu.memory_space<vmem>>, vector<4x32xf32>,
    %c0_106 = arith.constant 0 : index
    %c0_107 = arith.constant 0 : index
    %495 = vector.load %arg10[%c0_106, %c0_107] : memref<32x96xf32, #tpu.memory_space<vmem>>, vector<32x96xf32>
    %c0_108 = arith.constant 0 : index
    %c0_109 = arith.constant 0 : index
    %496 = vector.load %arg13[%c0_108, %c0_109] : memref<32x96xf32, #tpu.memory_space<vmem>>, vector<32x96xf32>
    %c0_110 = arith.constant 0 : index
    %c0_111 = arith.constant 0 : index
    %497 = vector.load %arg14[%c0_110, %c0_111] : memref<32x96xf32, #tpu.memory_space<vmem>>, vector<32x96xf32>
    %c0_112 = arith.constant 0 : index
    %c0_113 = arith.constant 0 : index
    %498 = vector.load %arg12[%c0_112, %c0_113] : memref<1x96xf32, #tpu.memory_space<vmem>>, vector<1x96xf32>
    %c0_114 = arith.constant 0 : index
    %c0_115 = arith.constant 0 : index
    %499 = vector.load %arg15[%c0_114, %c0_115] : memref<1x96xf32, #tpu.memory_space<vmem>>, vector<1x96xf32>
    %c0_116 = arith.constant 0 : index
    %c0_117 = arith.constant 0 : index
    %500 = vector.load %arg16[%c0_116, %c0_117] : memref<1x96xf32, #tpu.memory_space<vmem>>, vector<1x96xf32>
    %c0_118 = arith.constant 0 : index
    %c0_119 = arith.constant 0 : index
    %501 = vector.load %arg19[%c0_118, %c0_119] : memref<8x32xf32, #tpu.memory_space<vmem>>, vector<8x32xf32>
    %c0_120 = arith.constant 0 : index
    %c0_121 = arith.constant 0 : index
    %502 = vector.load %arg9[%c0_120, %c0_121] : memref<32x96xf32, #tpu.memory_space<vmem>>, vector<32x96xf32>
    %cst_122 = arith.constant dense<0.000000e+00> : vector<8x96xf32>
    %503 = tpu.matmul %501, %502, %cst_122 {dimension_numbers = #tpu.dot_dimension_numbers<[1], [0], [0], [1], [0, 0, 1, 1], [], []>} : vector<8x32xf32>, vector<32x96xf32>, vector<8x96xf32> -> vector<8x96xf32>
    %c0_123 = arith.constant 0 : index
    %c0_124 = arith.constant 0 : index
    %504 = vector.load %arg11[%c0_123, %c0_124] : memref<1x96xf32, #tpu.memory_space<vmem>>, vector<1x96xf32>
    %505 = vector.broadcast %504 : vector<1x96xf32> to vector<8x96xf32>
    %506 = arith.addf %503, %505 : vector<8x96xf32>
    %c0_125 = arith.constant 0 : index
    %c0_126 = arith.constant 0 : index
    %507 = vector.load %arg20[%c0_125, %c0_126] : memref<8x96xf32, #tpu.memory_space<vmem>>, vector<8x96xf32>
    tpu.vector_store %arg20[%c0_125, %c0_126], %506 {strides = array<i32>} : memref<8x96xf32, #tpu.memory_space<vmem>>, vector<8x96xf32>,
    %cst_127 = arith.constant 0.000000e+00 : f32
    %508 = vector.broadcast %cst_127 : f32 to vector<1x32xf32>
    %cst_128 = arith.constant 0.000000e+00 : f32
    %509 = vector.broadcast %cst_128 : f32 to vector<1x32xf32>
    %c1 = arith.constant 1 : index
    %c0_129 = arith.constant 0 : index
    %510 = vector.load %arg20[%c1, %c0_129] : memref<8x96xf32, #tpu.memory_space<vmem>>, vector<1x96xf32>
    %cst_130 = arith.constant dense<0.000000e+00> : vector<1x96xf32>
    %511 = tpu.matmul %508, %495, %cst_130 {dimension_numbers = #tpu.dot_dimension_numbers<[1], [0], [0], [1], [0, 0, 1, 1], [], []>} : vector<1x32xf32>, vector<32x96xf32>, vector<1x96xf32> -> vector<1x96xf32>
    %512 = arith.addf %511, %498 : vector<1x96xf32>
    %513 = vector.extract_strided_slice %510 {offsets = [0, 0], sizes = [1, 32], strides = [1, 1]} : vector<1x96xf32> to vector<1x32xf32>
    %514 = vector.extract_strided_slice %512 {offsets = [0, 0], sizes = [1, 32], strides = [1, 1]} : vector<1x96xf32> to vector<1x32xf32>
    %515 = arith.addf %513, %514 : vector<1x32xf32>
    %516 = arith.negf %515 : vector<1x32xf32>
    %517 = math.exp %516 : vector<1x32xf32>
    %cst_131 = arith.constant 1.000000e+00 : f32
    %518 = vector.broadcast %cst_131 : f32 to vector<1x32xf32>
    %519 = arith.addf %518, %517 : vector<1x32xf32>
    %520 = arith.divf %518, %519 : vector<1x32xf32>
    %521 = vector.extract_strided_slice %510 {offsets = [0, 32], sizes = [1, 32], strides = [1, 1]} : vector<1x96xf32> to vector<1x32xf32>
    %522 = vector.extract_strided_slice %512 {offsets = [0, 32], sizes = [1, 32], strides = [1, 1]} : vector<1x96xf32> to vector<1x32xf32>
    %523 = arith.addf %521, %522 : vector<1x32xf32>
    %524 = arith.negf %523 : vector<1x32xf32>
    %525 = math.exp %524 : vector<1x32xf32>
    %cst_132 = arith.constant 1.000000e+00 : f32
    %526 = vector.broadcast %cst_132 : f32 to vector<1x32xf32>
    %527 = arith.addf %526, %525 : vector<1x32xf32>
    %528 = arith.divf %526, %527 : vector<1x32xf32>
    %529 = vector.extract_strided_slice %510 {offsets = [0, 64], sizes = [1, 32], strides = [1, 1]} : vector<1x96xf32> to vector<1x32xf32>
    %530 = vector.extract_strided_slice %512 {offsets = [0, 64], sizes = [1, 32], strides = [1, 1]} : vector<1x96xf32> to vector<1x32xf32>
    %531 = arith.mulf %520, %530 : vector<1x32xf32>
    %532 = arith.addf %529, %531 : vector<1x32xf32>
    %533 = math.tanh %532 : vector<1x32xf32>
    %cst_133 = arith.constant 1.000000e+00 : f32
    %534 = vector.broadcast %cst_133 : f32 to vector<1x32xf32>
    %535 = arith.subf %534, %528 : vector<1x32xf32>
    %536 = arith.mulf %535, %533 : vector<1x32xf32>
    %537 = arith.mulf %528, %508 : vector<1x32xf32>
    %538 = arith.addf %536, %537 : vector<1x32xf32>
    %cst_134 = arith.constant dense<0.000000e+00> : vector<1x96xf32>
    %539 = tpu.matmul %538, %496, %cst_134 {dimension_numbers = #tpu.dot_dimension_numbers<[1], [0], [0], [1], [0, 0, 1, 1], [], []>} : vector<1x32xf32>, vector<32x96xf32>, vector<1x96xf32> -> vector<1x96xf32>
    %540 = arith.addf %539, %499 : vector<1x96xf32>
    %cst_135 = arith.constant dense<0.000000e+00> : vector<1x96xf32>
    %541 = tpu.matmul %509, %497, %cst_135 {dimension_numbers = #tpu.dot_dimension_numbers<[1], [0], [0], [1], [0, 0, 1, 1], [], []>} : vector<1x32xf32>, vector<32x96xf32>, vector<1x96xf32> -> vector<1x96xf32>
    %542 = arith.addf %541, %500 : vector<1x96xf32>
    %543 = vector.extract_strided_slice %540 {offsets = [0, 0], sizes = [1, 32], strides = [1, 1]} : vector<1x96xf32> to vector<1x32xf32>
    %544 = vector.extract_strided_slice %542 {offsets = [0, 0], sizes = [1, 32], strides = [1, 1]} : vector<1x96xf32> to vector<1x32xf32>
    %545 = arith.addf %543, %544 : vector<1x32xf32>
    %546 = arith.negf %545 : vector<1x32xf32>
    %547 = math.exp %546 : vector<1x32xf32>
    %cst_136 = arith.constant 1.000000e+00 : f32
    %548 = vector.broadcast %cst_136 : f32 to vector<1x32xf32>
    %549 = arith.addf %548, %547 : vector<1x32xf32>
    %550 = arith.divf %548, %549 : vector<1x32xf32>
    %551 = vector.extract_strided_slice %540 {offsets = [0, 32], sizes = [1, 32], strides = [1, 1]} : vector<1x96xf32> to vector<1x32xf32>
    %552 = vector.extract_strided_slice %542 {offsets = [0, 32], sizes = [1, 32], strides = [1, 1]} : vector<1x96xf32> to vector<1x32xf32>
    %553 = arith.addf %551, %552 : vector<1x32xf32>
    %554 = arith.negf %553 : vector<1x32xf32>
    %555 = math.exp %554 : vector<1x32xf32>
    %cst_137 = arith.constant 1.000000e+00 : f32
    %556 = vector.broadcast %cst_137 : f32 to vector<1x32xf32>
    %557 = arith.addf %556, %555 : vector<1x32xf32>
    %558 = arith.divf %556, %557 : vector<1x32xf32>
    %559 = vector.extract_strided_slice %540 {offsets = [0, 64], sizes = [1, 32], strides = [1, 1]} : vector<1x96xf32> to vector<1x32xf32>
    %560 = vector.extract_strided_slice %542 {offsets = [0, 64], sizes = [1, 32], strides = [1, 1]} : vector<1x96xf32> to vector<1x32xf32>
    %561 = arith.mulf %550, %560 : vector<1x32xf32>
    %562 = arith.addf %559, %561 : vector<1x32xf32>
    %563 = math.tanh %562 : vector<1x32xf32>
    %cst_138 = arith.constant 1.000000e+00 : f32
    %564 = vector.broadcast %cst_138 : f32 to vector<1x32xf32>
    %565 = arith.subf %564, %558 : vector<1x32xf32>
    %566 = arith.mulf %565, %563 : vector<1x32xf32>
    %567 = arith.mulf %558, %509 : vector<1x32xf32>
    %568 = arith.addf %566, %567 : vector<1x32xf32>
    %c3 = arith.constant 3 : index
    %c0_139 = arith.constant 0 : index
    %569 = vector.load %arg20[%c3, %c0_139] : memref<8x96xf32, #tpu.memory_space<vmem>>, vector<1x96xf32>
    %cst_140 = arith.constant dense<0.000000e+00> : vector<1x96xf32>
    %570 = tpu.matmul %538, %495, %cst_140 {dimension_numbers = #tpu.dot_dimension_numbers<[1], [0], [0], [1], [0, 0, 1, 1], [], []>} : vector<1x32xf32>, vector<32x96xf32>, vector<1x96xf32> -> vector<1x96xf32>
    %571 = arith.addf %570, %498 : vector<1x96xf32>
    %572 = vector.extract_strided_slice %569 {offsets = [0, 0], sizes = [1, 32], strides = [1, 1]} : vector<1x96xf32> to vector<1x32xf32>
    %573 = vector.extract_strided_slice %571 {offsets = [0, 0], sizes = [1, 32], strides = [1, 1]} : vector<1x96xf32> to vector<1x32xf32>
    %574 = arith.addf %572, %573 : vector<1x32xf32>
    %575 = arith.negf %574 : vector<1x32xf32>
    %576 = math.exp %575 : vector<1x32xf32>
    %cst_141 = arith.constant 1.000000e+00 : f32
    %577 = vector.broadcast %cst_141 : f32 to vector<1x32xf32>
    %578 = arith.addf %577, %576 : vector<1x32xf32>
    %579 = arith.divf %577, %578 : vector<1x32xf32>
    %580 = vector.extract_strided_slice %569 {offsets = [0, 32], sizes = [1, 32], strides = [1, 1]} : vector<1x96xf32> to vector<1x32xf32>
    %581 = vector.extract_strided_slice %571 {offsets = [0, 32], sizes = [1, 32], strides = [1, 1]} : vector<1x96xf32> to vector<1x32xf32>
    %582 = arith.addf %580, %581 : vector<1x32xf32>
    %583 = arith.negf %582 : vector<1x32xf32>
    %584 = math.exp %583 : vector<1x32xf32>
    %cst_142 = arith.constant 1.000000e+00 : f32
    %585 = vector.broadcast %cst_142 : f32 to vector<1x32xf32>
    %586 = arith.addf %585, %584 : vector<1x32xf32>
    %587 = arith.divf %585, %586 : vector<1x32xf32>
    %588 = vector.extract_strided_slice %569 {offsets = [0, 64], sizes = [1, 32], strides = [1, 1]} : vector<1x96xf32> to vector<1x32xf32>
    %589 = vector.extract_strided_slice %571 {offsets = [0, 64], sizes = [1, 32], strides = [1, 1]} : vector<1x96xf32> to vector<1x32xf32>
    %590 = arith.mulf %579, %589 : vector<1x32xf32>
    %591 = arith.addf %588, %590 : vector<1x32xf32>
    %592 = math.tanh %591 : vector<1x32xf32>
    %cst_143 = arith.constant 1.000000e+00 : f32
    %593 = vector.broadcast %cst_143 : f32 to vector<1x32xf32>
    %594 = arith.subf %593, %587 : vector<1x32xf32>
    %595 = arith.mulf %594, %592 : vector<1x32xf32>
    %596 = arith.mulf %587, %538 : vector<1x32xf32>
    %597 = arith.addf %595, %596 : vector<1x32xf32>
    %cst_144 = arith.constant dense<0.000000e+00> : vector<1x96xf32>
    %598 = tpu.matmul %597, %496, %cst_144 {dimension_numbers = #tpu.dot_dimension_numbers<[1], [0], [0], [1], [0, 0, 1, 1], [], []>} : vector<1x32xf32>, vector<32x96xf32>, vector<1x96xf32> -> vector<1x96xf32>
    %599 = arith.addf %598, %499 : vector<1x96xf32>
    %cst_145 = arith.constant dense<0.000000e+00> : vector<1x96xf32>
    %600 = tpu.matmul %568, %497, %cst_145 {dimension_numbers = #tpu.dot_dimension_numbers<[1], [0], [0], [1], [0, 0, 1, 1], [], []>} : vector<1x32xf32>, vector<32x96xf32>, vector<1x96xf32> -> vector<1x96xf32>
    %601 = arith.addf %600, %500 : vector<1x96xf32>
    %602 = vector.extract_strided_slice %599 {offsets = [0, 0], sizes = [1, 32], strides = [1, 1]} : vector<1x96xf32> to vector<1x32xf32>
    %603 = vector.extract_strided_slice %601 {offsets = [0, 0], sizes = [1, 32], strides = [1, 1]} : vector<1x96xf32> to vector<1x32xf32>
    %604 = arith.addf %602, %603 : vector<1x32xf32>
    %605 = arith.negf %604 : vector<1x32xf32>
    %606 = math.exp %605 : vector<1x32xf32>
    %cst_146 = arith.constant 1.000000e+00 : f32
    %607 = vector.broadcast %cst_146 : f32 to vector<1x32xf32>
    %608 = arith.addf %607, %606 : vector<1x32xf32>
    %609 = arith.divf %607, %608 : vector<1x32xf32>
    %610 = vector.extract_strided_slice %599 {offsets = [0, 32], sizes = [1, 32], strides = [1, 1]} : vector<1x96xf32> to vector<1x32xf32>
    %611 = vector.extract_strided_slice %601 {offsets = [0, 32], sizes = [1, 32], strides = [1, 1]} : vector<1x96xf32> to vector<1x32xf32>
    %612 = arith.addf %610, %611 : vector<1x32xf32>
    %613 = arith.negf %612 : vector<1x32xf32>
    %614 = math.exp %613 : vector<1x32xf32>
    %cst_147 = arith.constant 1.000000e+00 : f32
    %615 = vector.broadcast %cst_147 : f32 to vector<1x32xf32>
    %616 = arith.addf %615, %614 : vector<1x32xf32>
    %617 = arith.divf %615, %616 : vector<1x32xf32>
    %618 = vector.extract_strided_slice %599 {offsets = [0, 64], sizes = [1, 32], strides = [1, 1]} : vector<1x96xf32> to vector<1x32xf32>
    %619 = vector.extract_strided_slice %601 {offsets = [0, 64], sizes = [1, 32], strides = [1, 1]} : vector<1x96xf32> to vector<1x32xf32>
    %620 = arith.mulf %609, %619 : vector<1x32xf32>
    %621 = arith.addf %618, %620 : vector<1x32xf32>
    %622 = math.tanh %621 : vector<1x32xf32>
    %cst_148 = arith.constant 1.000000e+00 : f32
    %623 = vector.broadcast %cst_148 : f32 to vector<1x32xf32>
    %624 = arith.subf %623, %617 : vector<1x32xf32>
    %625 = arith.mulf %624, %622 : vector<1x32xf32>
    %626 = arith.mulf %617, %568 : vector<1x32xf32>
    %627 = arith.addf %625, %626 : vector<1x32xf32>
    %c5 = arith.constant 5 : index
    %c0_149 = arith.constant 0 : index
    %628 = vector.load %arg20[%c5, %c0_149] : memref<8x96xf32, #tpu.memory_space<vmem>>, vector<1x96xf32>
    %cst_150 = arith.constant dense<0.000000e+00> : vector<1x96xf32>
    %629 = tpu.matmul %597, %495, %cst_150 {dimension_numbers = #tpu.dot_dimension_numbers<[1], [0], [0], [1], [0, 0, 1, 1], [], []>} : vector<1x32xf32>, vector<32x96xf32>, vector<1x96xf32> -> vector<1x96xf32>
    %630 = arith.addf %629, %498 : vector<1x96xf32>
    %631 = vector.extract_strided_slice %628 {offsets = [0, 0], sizes = [1, 32], strides = [1, 1]} : vector<1x96xf32> to vector<1x32xf32>
    %632 = vector.extract_strided_slice %630 {offsets = [0, 0], sizes = [1, 32], strides = [1, 1]} : vector<1x96xf32> to vector<1x32xf32>
    %633 = arith.addf %631, %632 : vector<1x32xf32>
    %634 = arith.negf %633 : vector<1x32xf32>
    %635 = math.exp %634 : vector<1x32xf32>
    %cst_151 = arith.constant 1.000000e+00 : f32
    %636 = vector.broadcast %cst_151 : f32 to vector<1x32xf32>
    %637 = arith.addf %636, %635 : vector<1x32xf32>
    %638 = arith.divf %636, %637 : vector<1x32xf32>
    %639 = vector.extract_strided_slice %628 {offsets = [0, 32], sizes = [1, 32], strides = [1, 1]} : vector<1x96xf32> to vector<1x32xf32>
    %640 = vector.extract_strided_slice %630 {offsets = [0, 32], sizes = [1, 32], strides = [1, 1]} : vector<1x96xf32> to vector<1x32xf32>
    %641 = arith.addf %639, %640 : vector<1x32xf32>
    %642 = arith.negf %641 : vector<1x32xf32>
    %643 = math.exp %642 : vector<1x32xf32>
    %cst_152 = arith.constant 1.000000e+00 : f32
    %644 = vector.broadcast %cst_152 : f32 to vector<1x32xf32>
    %645 = arith.addf %644, %643 : vector<1x32xf32>
    %646 = arith.divf %644, %645 : vector<1x32xf32>
    %647 = vector.extract_strided_slice %628 {offsets = [0, 64], sizes = [1, 32], strides = [1, 1]} : vector<1x96xf32> to vector<1x32xf32>
    %648 = vector.extract_strided_slice %630 {offsets = [0, 64], sizes = [1, 32], strides = [1, 1]} : vector<1x96xf32> to vector<1x32xf32>
    %649 = arith.mulf %638, %648 : vector<1x32xf32>
    %650 = arith.addf %647, %649 : vector<1x32xf32>
    %651 = math.tanh %650 : vector<1x32xf32>
    %cst_153 = arith.constant 1.000000e+00 : f32
    %652 = vector.broadcast %cst_153 : f32 to vector<1x32xf32>
    %653 = arith.subf %652, %646 : vector<1x32xf32>
    %654 = arith.mulf %653, %651 : vector<1x32xf32>
    %655 = arith.mulf %646, %597 : vector<1x32xf32>
    %656 = arith.addf %654, %655 : vector<1x32xf32>
    %cst_154 = arith.constant dense<0.000000e+00> : vector<1x96xf32>
    %657 = tpu.matmul %656, %496, %cst_154 {dimension_numbers = #tpu.dot_dimension_numbers<[1], [0], [0], [1], [0, 0, 1, 1], [], []>} : vector<1x32xf32>, vector<32x96xf32>, vector<1x96xf32> -> vector<1x96xf32>
    %658 = arith.addf %657, %499 : vector<1x96xf32>
    %cst_155 = arith.constant dense<0.000000e+00> : vector<1x96xf32>
    %659 = tpu.matmul %627, %497, %cst_155 {dimension_numbers = #tpu.dot_dimension_numbers<[1], [0], [0], [1], [0, 0, 1, 1], [], []>} : vector<1x32xf32>, vector<32x96xf32>, vector<1x96xf32> -> vector<1x96xf32>
    %660 = arith.addf %659, %500 : vector<1x96xf32>
    %661 = vector.extract_strided_slice %658 {offsets = [0, 0], sizes = [1, 32], strides = [1, 1]} : vector<1x96xf32> to vector<1x32xf32>
    %662 = vector.extract_strided_slice %660 {offsets = [0, 0], sizes = [1, 32], strides = [1, 1]} : vector<1x96xf32> to vector<1x32xf32>
    %663 = arith.addf %661, %662 : vector<1x32xf32>
    %664 = arith.negf %663 : vector<1x32xf32>
    %665 = math.exp %664 : vector<1x32xf32>
    %cst_156 = arith.constant 1.000000e+00 : f32
    %666 = vector.broadcast %cst_156 : f32 to vector<1x32xf32>
    %667 = arith.addf %666, %665 : vector<1x32xf32>
    %668 = arith.divf %666, %667 : vector<1x32xf32>
    %669 = vector.extract_strided_slice %658 {offsets = [0, 32], sizes = [1, 32], strides = [1, 1]} : vector<1x96xf32> to vector<1x32xf32>
    %670 = vector.extract_strided_slice %660 {offsets = [0, 32], sizes = [1, 32], strides = [1, 1]} : vector<1x96xf32> to vector<1x32xf32>
    %671 = arith.addf %669, %670 : vector<1x32xf32>
    %672 = arith.negf %671 : vector<1x32xf32>
    %673 = math.exp %672 : vector<1x32xf32>
    %cst_157 = arith.constant 1.000000e+00 : f32
    %674 = vector.broadcast %cst_157 : f32 to vector<1x32xf32>
    %675 = arith.addf %674, %673 : vector<1x32xf32>
    %676 = arith.divf %674, %675 : vector<1x32xf32>
    %677 = vector.extract_strided_slice %658 {offsets = [0, 64], sizes = [1, 32], strides = [1, 1]} : vector<1x96xf32> to vector<1x32xf32>
    %678 = vector.extract_strided_slice %660 {offsets = [0, 64], sizes = [1, 32], strides = [1, 1]} : vector<1x96xf32> to vector<1x32xf32>
    %679 = arith.mulf %668, %678 : vector<1x32xf32>
    %680 = arith.addf %677, %679 : vector<1x32xf32>
    %681 = math.tanh %680 : vector<1x32xf32>
    %cst_158 = arith.constant 1.000000e+00 : f32
    %682 = vector.broadcast %cst_158 : f32 to vector<1x32xf32>
    %683 = arith.subf %682, %676 : vector<1x32xf32>
    %684 = arith.mulf %683, %681 : vector<1x32xf32>
    %685 = arith.mulf %676, %627 : vector<1x32xf32>
    %686 = arith.addf %684, %685 : vector<1x32xf32>
    %c7 = arith.constant 7 : index
    %c0_159 = arith.constant 0 : index
    %687 = vector.load %arg20[%c7, %c0_159] : memref<8x96xf32, #tpu.memory_space<vmem>>, vector<1x96xf32>
    %cst_160 = arith.constant dense<0.000000e+00> : vector<1x96xf32>
    %688 = tpu.matmul %656, %495, %cst_160 {dimension_numbers = #tpu.dot_dimension_numbers<[1], [0], [0], [1], [0, 0, 1, 1], [], []>} : vector<1x32xf32>, vector<32x96xf32>, vector<1x96xf32> -> vector<1x96xf32>
    %689 = arith.addf %688, %498 : vector<1x96xf32>
    %690 = vector.extract_strided_slice %687 {offsets = [0, 0], sizes = [1, 32], strides = [1, 1]} : vector<1x96xf32> to vector<1x32xf32>
    %691 = vector.extract_strided_slice %689 {offsets = [0, 0], sizes = [1, 32], strides = [1, 1]} : vector<1x96xf32> to vector<1x32xf32>
    %692 = arith.addf %690, %691 : vector<1x32xf32>
    %693 = arith.negf %692 : vector<1x32xf32>
    %694 = math.exp %693 : vector<1x32xf32>
    %cst_161 = arith.constant 1.000000e+00 : f32
    %695 = vector.broadcast %cst_161 : f32 to vector<1x32xf32>
    %696 = arith.addf %695, %694 : vector<1x32xf32>
    %697 = arith.divf %695, %696 : vector<1x32xf32>
    %698 = vector.extract_strided_slice %687 {offsets = [0, 32], sizes = [1, 32], strides = [1, 1]} : vector<1x96xf32> to vector<1x32xf32>
    %699 = vector.extract_strided_slice %689 {offsets = [0, 32], sizes = [1, 32], strides = [1, 1]} : vector<1x96xf32> to vector<1x32xf32>
    %700 = arith.addf %698, %699 : vector<1x32xf32>
    %701 = arith.negf %700 : vector<1x32xf32>
    %702 = math.exp %701 : vector<1x32xf32>
    %cst_162 = arith.constant 1.000000e+00 : f32
    %703 = vector.broadcast %cst_162 : f32 to vector<1x32xf32>
    %704 = arith.addf %703, %702 : vector<1x32xf32>
    %705 = arith.divf %703, %704 : vector<1x32xf32>
    %706 = vector.extract_strided_slice %687 {offsets = [0, 64], sizes = [1, 32], strides = [1, 1]} : vector<1x96xf32> to vector<1x32xf32>
    %707 = vector.extract_strided_slice %689 {offsets = [0, 64], sizes = [1, 32], strides = [1, 1]} : vector<1x96xf32> to vector<1x32xf32>
    %708 = arith.mulf %697, %707 : vector<1x32xf32>
    %709 = arith.addf %706, %708 : vector<1x32xf32>
    %710 = math.tanh %709 : vector<1x32xf32>
    %cst_163 = arith.constant 1.000000e+00 : f32
    %711 = vector.broadcast %cst_163 : f32 to vector<1x32xf32>
    %712 = arith.subf %711, %705 : vector<1x32xf32>
    %713 = arith.mulf %712, %710 : vector<1x32xf32>
    %714 = arith.mulf %705, %656 : vector<1x32xf32>
    %715 = arith.addf %713, %714 : vector<1x32xf32>
    %cst_164 = arith.constant dense<0.000000e+00> : vector<1x96xf32>
    %716 = tpu.matmul %715, %496, %cst_164 {dimension_numbers = #tpu.dot_dimension_numbers<[1], [0], [0], [1], [0, 0, 1, 1], [], []>} : vector<1x32xf32>, vector<32x96xf32>, vector<1x96xf32> -> vector<1x96xf32>
    %717 = arith.addf %716, %499 : vector<1x96xf32>
    %cst_165 = arith.constant dense<0.000000e+00> : vector<1x96xf32>
    %718 = tpu.matmul %686, %497, %cst_165 {dimension_numbers = #tpu.dot_dimension_numbers<[1], [0], [0], [1], [0, 0, 1, 1], [], []>} : vector<1x32xf32>, vector<32x96xf32>, vector<1x96xf32> -> vector<1x96xf32>
    %719 = arith.addf %718, %500 : vector<1x96xf32>
    %720 = vector.extract_strided_slice %717 {offsets = [0, 0], sizes = [1, 32], strides = [1, 1]} : vector<1x96xf32> to vector<1x32xf32>
    %721 = vector.extract_strided_slice %719 {offsets = [0, 0], sizes = [1, 32], strides = [1, 1]} : vector<1x96xf32> to vector<1x32xf32>
    %722 = arith.addf %720, %721 : vector<1x32xf32>
    %723 = arith.negf %722 : vector<1x32xf32>
    %724 = math.exp %723 : vector<1x32xf32>
    %cst_166 = arith.constant 1.000000e+00 : f32
    %725 = vector.broadcast %cst_166 : f32 to vector<1x32xf32>
    %726 = arith.addf %725, %724 : vector<1x32xf32>
    %727 = arith.divf %725, %726 : vector<1x32xf32>
    %728 = vector.extract_strided_slice %717 {offsets = [0, 32], sizes = [1, 32], strides = [1, 1]} : vector<1x96xf32> to vector<1x32xf32>
    %729 = vector.extract_strided_slice %719 {offsets = [0, 32], sizes = [1, 32], strides = [1, 1]} : vector<1x96xf32> to vector<1x32xf32>
    %730 = arith.addf %728, %729 : vector<1x32xf32>
    %731 = arith.negf %730 : vector<1x32xf32>
    %732 = math.exp %731 : vector<1x32xf32>
    %cst_167 = arith.constant 1.000000e+00 : f32
    %733 = vector.broadcast %cst_167 : f32 to vector<1x32xf32>
    %734 = arith.addf %733, %732 : vector<1x32xf32>
    %735 = arith.divf %733, %734 : vector<1x32xf32>
    %736 = vector.extract_strided_slice %717 {offsets = [0, 64], sizes = [1, 32], strides = [1, 1]} : vector<1x96xf32> to vector<1x32xf32>
    %737 = vector.extract_strided_slice %719 {offsets = [0, 64], sizes = [1, 32], strides = [1, 1]} : vector<1x96xf32> to vector<1x32xf32>
    %738 = arith.mulf %727, %737 : vector<1x32xf32>
    %739 = arith.addf %736, %738 : vector<1x32xf32>
    %740 = math.tanh %739 : vector<1x32xf32>
    %cst_168 = arith.constant 1.000000e+00 : f32
    %741 = vector.broadcast %cst_168 : f32 to vector<1x32xf32>
    %742 = arith.subf %741, %735 : vector<1x32xf32>
    %743 = arith.mulf %742, %740 : vector<1x32xf32>
    %744 = arith.mulf %735, %686 : vector<1x32xf32>
    %745 = arith.addf %743, %744 : vector<1x32xf32>
    %c0_169 = arith.constant 0 : index
    %c0_170 = arith.constant 0 : index
    %746 = vector.load %arg17[%c0_169, %c0_170] : memref<1x32xf32, #tpu.memory_space<vmem>>, vector<1x32xf32>
    tpu.vector_store %arg17[%c0_169, %c0_170], %745 {strides = array<i32>} : memref<1x32xf32, #tpu.memory_space<vmem>>, vector<1x32xf32>,
    return
  }
}

</mosaic_0001>

<llo_original>
// kernel: autoencoder_forward.1
$region0: #{autoencoder_forward.1}
  #allocation0 [shape = 'u32[]', space=smem, size = 0x4, offset = 0x4, fixed_abs, tag = 'smem constant byte address 0x4 - core index']
  #allocation1 [shape = 'u32[72,128]{1,0:T(1,128)}', space=vmem, size = 0x9000, scoped, tag = 'internal scratch']
  #allocation2 [shape = 'f32[32,96]{1,0:T(8,128)}', space=vmem, size = 0x4000, scoped, tag = 'scratch operand']
  #allocation3 [shape = 'f32[8,32]{1,0:T(8,128)}', space=vmem, size = 0x1000, scoped, tag = 'scratch operand']
  #allocation4 [shape = 'f32[8,96]{1,0:T(8,128)}', space=vmem, size = 0x1000, scoped, tag = 'scratch operand']
  %s0 = inlined_call_operand.vmem [shape: f32[32,32], index: 0, kind: input, shape index: {}]
  %s1 = inlined_call_operand.vmem [shape: f32[32,96], index: 1, kind: input, shape index: {}]
  %s2 = inlined_call_operand.vmem [shape: f32[32,96], index: 2, kind: input, shape index: {}]
  %s3 = inlined_call_operand.vmem [shape: f32[1,96], index: 3, kind: input, shape index: {}]
  %s4 = inlined_call_operand.vmem [shape: f32[1,96], index: 4, kind: input, shape index: {}]
  %s5 = inlined_call_operand.hbm [shape: f32[32,96], index: 5, kind: input, shape index: {}]
  %s6 = inlined_call_operand.hbm [shape: f32[32,96], index: 6, kind: input, shape index: {}]
  %s7 = inlined_call_operand.vmem [shape: f32[1,96], index: 7, kind: input, shape index: {}]
  %s8 = inlined_call_operand.hbm [shape: f32[1,96], index: 8, kind: input, shape index: {}]
  %s9 = inlined_call_operand.hbm [shape: f32[32,96], index: 9, kind: input, shape index: {}]
  %s10 = inlined_call_operand.hbm [shape: f32[32,96], index: 10, kind: input, shape index: {}]
  %s11 = inlined_call_operand.vmem [shape: f32[1,96], index: 11, kind: input, shape index: {}]
  %s12 = inlined_call_operand.vmem [shape: f32[1,96], index: 12, kind: input, shape index: {}]
  %s13 = inlined_call_operand.hbm [shape: f32[32,96], index: 13, kind: input, shape index: {}]
  %s14 = inlined_call_operand.hbm [shape: f32[32,96], index: 14, kind: input, shape index: {}]
  %s15 = inlined_call_operand.vmem [shape: f32[1,96], index: 15, kind: input, shape index: {}]
  %s16 = inlined_call_operand.vmem [shape: f32[1,96], index: 16, kind: input, shape index: {}]
  %s17 = inlined_call_operand.hbm [shape: f32[1,32], index: 17, kind: output, shape index: {}]
  %s18 = sld [smem:[#allocation0]]
  $region106: #{autoencoder_forward.1} parent=0
    _
  %s20 = ssub.s32 1, %s18
  %s21 = scalar_select 0, %s20, %s18
  $region1: #{autoencoder_forward.1} parent=0
    #allocation5 [shape = 'u8[16384]{0}', space=vmem, size = 0x4000, scoped, tag = 'input window, operand 5, single buffered']
    #allocation6 [shape = 's32[1]{0}', space=sflag, size = 0x4, scoped, tag = 'scoped memory for autoencoder_forward.1']
    #allocation7 [shape = 's32[1]{0}', space=sflag, size = 0x4, scoped, tag = 'scoped memory for autoencoder_forward.1']
    #allocation8 [shape = 'u8[16384]{0}', space=vmem, size = 0x4000, scoped, tag = 'input window, operand 6, single buffered']
    #allocation9 [shape = 's32[1]{0}', space=sflag, size = 0x4, scoped, tag = 'scoped memory for autoencoder_forward.1']
    #allocation10 [shape = 'u8[512]{0}', space=vmem, size = 0x400, scoped, tag = 'input window, operand 8, single buffered']
    #allocation11 [shape = 'u8[16384]{0}', space=vmem, size = 0x4000, scoped, tag = 'input window, operand 9, single buffered']
    #allocation12 [shape = 's32[1]{0}', space=sflag, size = 0x4, scoped, tag = 'scoped memory for autoencoder_forward.1']
    #allocation13 [shape = 'u8[16384]{0}', space=vmem, size = 0x4000, scoped, tag = 'input window, operand 10, single buffered']
    #allocation14 [shape = 'u8[16384]{0}', space=vmem, size = 0x4000, scoped, tag = 'input window, operand 13, single buffered']
    #allocation15 [shape = 's32[1]{0}', space=sflag, size = 0x4, scoped, tag = 'scoped memory for autoencoder_forward.1']
    #allocation16 [shape = 'u8[16384]{0}', space=vmem, size = 0x4000, scoped, tag = 'input window, operand 14, single buffered']
    #allocation17 [shape = 'u8[512]{0}', space=vmem, size = 0x400, scoped, tag = 'output window, operand 0, single buffered']
    %22 = vsyncpa [#allocation6], 0
    %23 = vsyncpa [#allocation9], 0
    %24 = vsyncpa [#allocation12], 0
    %25 = vsyncpa [#allocation15], 0
    %26 = vsyncpa [#allocation7], 0
    // Predicated region
    $region2: #{autoencoder_forward.1} parent=1 // pred_check
      _
    $region3: #{autoencoder_forward.1} parent=1 // pred_check_branch
      %28 = sbr.rel (0) target = $region5
    $region4: #{autoencoder_forward.1} parent=1 // pred_region
      _
    $region5: #{autoencoder_forward.1} parent=1 // pred_fallthru
      _
    // Predicated region
    $region6: #{autoencoder_forward.1} parent=1 // pred_check
      _
    $region7: #{autoencoder_forward.1} parent=1 // pred_check_branch
      %30 = sbr.rel (0) target = $region9
    $region8: #{autoencoder_forward.1} parent=1 // pred_region
      _
    $region9: #{autoencoder_forward.1} parent=1 // pred_fallthru
      _
    // Predicated region
    $region10: #{autoencoder_forward.1} parent=1 // pred_check
      _
    $region11: #{autoencoder_forward.1} parent=1 // pred_check_branch
      %32 = sbr.rel (0) target = $region13
    $region12: #{autoencoder_forward.1} parent=1 // pred_region
      _
    $region13: #{autoencoder_forward.1} parent=1 // pred_fallthru
      _
    // Predicated region
    $region14: #{autoencoder_forward.1} parent=1 // pred_check
      _
    $region15: #{autoencoder_forward.1} parent=1 // pred_check_branch
      %34 = sbr.rel (0) target = $region17
    $region16: #{autoencoder_forward.1} parent=1 // pred_region
      _
    $region17: #{autoencoder_forward.1} parent=1 // pred_fallthru
      _
    // Predicated region
    $region18: #{autoencoder_forward.1} parent=1 // pred_check
      _
    $region19: #{autoencoder_forward.1} parent=1 // pred_check_branch
      %36 = sbr.rel (0) target = $region21
    $region20: #{autoencoder_forward.1} parent=1 // pred_region
      _
    $region21: #{autoencoder_forward.1} parent=1 // pred_fallthru
      _
    // Predicated region
    $region22: #{autoencoder_forward.1} parent=1 // pred_check
      _
    $region23: #{autoencoder_forward.1} parent=1 // pred_check_branch
      %38 = sbr.rel (0) target = $region25
    $region24: #{autoencoder_forward.1} parent=1 // pred_region
      %40 = vsyncadd [#allocation6], 0
      %s41 = sshll.u32 %s5, 4
      %s42 = int_to_ptr.hbm [resolvable:$true] %s41
      %s43 = sshll.u32 [#allocation5], 4
      %s44 = int_to_ptr.vmem [resolvable:$true] %s43
      %49 = dma.hbm_to_vmem [thread:$0]  %s42, 512, %s44, [#allocation6], 128, 128, 8
    $region25: #{autoencoder_forward.1} parent=1 // pred_fallthru
      _
    // Predicated region
    $region26: #{autoencoder_forward.1} parent=1 // pred_check
      _
    $region27: #{autoencoder_forward.1} parent=1 // pred_check_branch
      %51 = sbr.rel (0) target = $region29
    $region28: #{autoencoder_forward.1} parent=1 // pred_region
      %53 = vsyncadd [#allocation9], 0
      %s54 = sshll.u32 %s6, 4
      %s55 = int_to_ptr.hbm [resolvable:$true] %s54
      %s56 = sshll.u32 [#allocation8], 4
      %s57 = int_to_ptr.vmem [resolvable:$true] %s56
      %62 = dma.hbm_to_vmem [thread:$0]  %s55, 512, %s57, [#allocation9], 128, 128, 8
    $region29: #{autoencoder_forward.1} parent=1 // pred_fallthru
      _
    // Predicated region
    $region30: #{autoencoder_forward.1} parent=1 // pred_check
      _
    $region31: #{autoencoder_forward.1} parent=1 // pred_check_branch
      %64 = sbr.rel (0) target = $region33
    $region32: #{autoencoder_forward.1} parent=1 // pred_region
      _
    $region33: #{autoencoder_forward.1} parent=1 // pred_fallthru
      _
    // Predicated region
    $region34: #{autoencoder_forward.1} parent=1 // pred_check
      _
    $region35: #{autoencoder_forward.1} parent=1 // pred_check_branch
      %66 = sbr.rel (0) target = $region37
    $region36: #{autoencoder_forward.1} parent=1 // pred_region
      %68 = vsyncadd [#allocation9], 0
      %s70 = sshll.u32 %s8, 4
      %s71 = int_to_ptr.hbm [resolvable:$true] %s70
      %s72 = sshll.u32 [#allocation10], 4
      %s73 = int_to_ptr.vmem [resolvable:$true] %s72
      %75 = dma.hbm_to_vmem [thread:$0]  %s71, 16, %s73, [#allocation9]
    $region37: #{autoencoder_forward.1} parent=1 // pred_fallthru
      _
    // Predicated region
    $region38: #{autoencoder_forward.1} parent=1 // pred_check
      _
    $region39: #{autoencoder_forward.1} parent=1 // pred_check_branch
      %77 = sbr.rel (0) target = $region41
    $region40: #{autoencoder_forward.1} parent=1 // pred_region
      %79 = vsyncadd [#allocation12], 0
      %s80 = sshll.u32 %s9, 4
      %s81 = int_to_ptr.hbm [resolvable:$true] %s80
      %s82 = sshll.u32 [#allocation11], 4
      %s83 = int_to_ptr.vmem [resolvable:$true] %s82
      %88 = dma.hbm_to_vmem [thread:$0]  %s81, 512, %s83, [#allocation12], 128, 128, 8
    $region41: #{autoencoder_forward.1} parent=1 // pred_fallthru
      _
    // Predicated region
    $region42: #{autoencoder_forward.1} parent=1 // pred_check
      _
    $region43: #{autoencoder_forward.1} parent=1 // pred_check_branch
      %90 = sbr.rel (0) target = $region45
    $region44: #{autoencoder_forward.1} parent=1 // pred_region
      %92 = vsyncadd [#allocation12], 0
      %s93 = sshll.u32 %s10, 4
      %s94 = int_to_ptr.hbm [resolvable:$true] %s93
      %s95 = sshll.u32 [#allocation13], 4
      %s96 = int_to_ptr.vmem [resolvable:$true] %s95
      %101 = dma.hbm_to_vmem [thread:$0]  %s94, 512, %s96, [#allocation12], 128, 128, 8
    $region45: #{autoencoder_forward.1} parent=1 // pred_fallthru
      _
    // Predicated region
    $region46: #{autoencoder_forward.1} parent=1 // pred_check
      _
    $region47: #{autoencoder_forward.1} parent=1 // pred_check_branch
      %103 = sbr.rel (0) target = $region49
    $region48: #{autoencoder_forward.1} parent=1 // pred_region
      _
    $region49: #{autoencoder_forward.1} parent=1 // pred_fallthru
      _
    // Predicated region
    $region50: #{autoencoder_forward.1} parent=1 // pred_check
      _
    $region51: #{autoencoder_forward.1} parent=1 // pred_check_branch
      %105 = sbr.rel (0) target = $region53
    $region52: #{autoencoder_forward.1} parent=1 // pred_region
      _
    $region53: #{autoencoder_forward.1} parent=1 // pred_fallthru
      _
    // Predicated region
    $region54: #{autoencoder_forward.1} parent=1 // pred_check
      _
    $region55: #{autoencoder_forward.1} parent=1 // pred_check_branch
      %107 = sbr.rel (0) target = $region57
    $region56: #{autoencoder_forward.1} parent=1 // pred_region
      %109 = vsyncadd [#allocation15], 0
      %s110 = sshll.u32 %s13, 4
      %s111 = int_to_ptr.hbm [resolvable:$true] %s110
      %s112 = sshll.u32 [#allocation14], 4
      %s113 = int_to_ptr.vmem [resolvable:$true] %s112
      %118 = dma.hbm_to_vmem [thread:$0]  %s111, 512, %s113, [#allocation15], 128, 128, 8
    $region57: #{autoencoder_forward.1} parent=1 // pred_fallthru
      _
    // Predicated region
    $region58: #{autoencoder_forward.1} parent=1 // pred_check
      _
    $region59: #{autoencoder_forward.1} parent=1 // pred_check_branch
      %120 = sbr.rel (0) target = $region61
    $region60: #{autoencoder_forward.1} parent=1 // pred_region
      %122 = vsyncadd [#allocation15], 0
      %s123 = sshll.u32 %s14, 4
      %s124 = int_to_ptr.hbm [resolvable:$true] %s123
      %s125 = sshll.u32 [#allocation16], 4
      %s126 = int_to_ptr.vmem [resolvable:$true] %s125
      %131 = dma.hbm_to_vmem [thread:$0]  %s124, 512, %s126, [#allocation15], 128, 128, 8
    $region61: #{autoencoder_forward.1} parent=1 // pred_fallthru
      _
    // Predicated region
    $region62: #{autoencoder_forward.1} parent=1 // pred_check
      _
    $region63: #{autoencoder_forward.1} parent=1 // pred_check_branch
      %133 = sbr.rel (0) target = $region65
    $region64: #{autoencoder_forward.1} parent=1 // pred_region
      _
    $region65: #{autoencoder_forward.1} parent=1 // pred_fallthru
      _
    // Predicated region
    $region66: #{autoencoder_forward.1} parent=1 // pred_check
      _
    $region67: #{autoencoder_forward.1} parent=1 // pred_check_branch
      %135 = sbr.rel (0) target = $region69
    $region68: #{autoencoder_forward.1} parent=1 // pred_region
      _
    $region69: #{autoencoder_forward.1} parent=1 // pred_fallthru
      _
    // Predicated region
    $region70: #{autoencoder_forward.1} parent=1 // pred_check
      _
    $region71: #{autoencoder_forward.1} parent=1 // pred_check_branch
      %137 = sbr.rel (0) target = $region73
    $region72: #{autoencoder_forward.1} parent=1 // pred_region
      %139 = dma.done [#allocation6], 512
    $region73: #{autoencoder_forward.1} parent=1 // pred_fallthru
      _
    // Predicated region
    $region74: #{autoencoder_forward.1} parent=1 // pred_check
      _
    $region75: #{autoencoder_forward.1} parent=1 // pred_check_branch
      %141 = sbr.rel (0) target = $region77
    $region76: #{autoencoder_forward.1} parent=1 // pred_region
      %143 = dma.done [#allocation9], 512
    $region77: #{autoencoder_forward.1} parent=1 // pred_fallthru
      _
    // Predicated region
    $region78: #{autoencoder_forward.1} parent=1 // pred_check
      _
    $region79: #{autoencoder_forward.1} parent=1 // pred_check_branch
      %145 = sbr.rel (0) target = $region81
    $region80: #{autoencoder_forward.1} parent=1 // pred_region
      %147 = dma.done [#allocation9], 16
    $region81: #{autoencoder_forward.1} parent=1 // pred_fallthru
      _
    // Predicated region
    $region82: #{autoencoder_forward.1} parent=1 // pred_check
      _
    $region83: #{autoencoder_forward.1} parent=1 // pred_check_branch
      %149 = sbr.rel (0) target = $region85
    $region84: #{autoencoder_forward.1} parent=1 // pred_region
      %151 = dma.done [#allocation12], 512
    $region85: #{autoencoder_forward.1} parent=1 // pred_fallthru
      _
    // Predicated region
    $region86: #{autoencoder_forward.1} parent=1 // pred_check
      _
    $region87: #{autoencoder_forward.1} parent=1 // pred_check_branch
      %153 = sbr.rel (0) target = $region89
    $region88: #{autoencoder_forward.1} parent=1 // pred_region
      %155 = dma.done [#allocation12], 512
    $region89: #{autoencoder_forward.1} parent=1 // pred_fallthru
      _
    // Predicated region
    $region90: #{autoencoder_forward.1} parent=1 // pred_check
      _
    $region91: #{autoencoder_forward.1} parent=1 // pred_check_branch
      %157 = sbr.rel (0) target = $region93
    $region92: #{autoencoder_forward.1} parent=1 // pred_region
      %159 = dma.done [#allocation15], 512
    $region93: #{autoencoder_forward.1} parent=1 // pred_fallthru
      _
    // Predicated region
    $region94: #{autoencoder_forward.1} parent=1 // pred_check
      _
    $region95: #{autoencoder_forward.1} parent=1 // pred_check_branch
      %161 = sbr.rel (0) target = $region97
    $region96: #{autoencoder_forward.1} parent=1 // pred_region
      %163 = dma.done [#allocation15], 512
    $region97: #{autoencoder_forward.1} parent=1 // pred_fallthru
      _
    %v164 = vld [vmem:[%s2] sm:$0xff]
    %v165 = vld [vmem:[%s2 + $0x8] sm:$0xff]
    %v166 = vld [vmem:[%s2 + $0x10] sm:$0xff]
    %v167 = vld [vmem:[%s2 + $0x18] sm:$0xff]
    %v168 = vld [vmem:[#allocation5] sm:$0xff]
    %v169 = vld [vmem:[#allocation5 + $0x8] sm:$0xff]
    %v170 = vld [vmem:[#allocation5 + $0x10] sm:$0xff]
    %v171 = vld [vmem:[#allocation5 + $0x18] sm:$0xff]
    %v172 = vld [vmem:[#allocation8] sm:$0xff]
    %v173 = vld [vmem:[#allocation8 + $0x8] sm:$0xff]
    %v174 = vld [vmem:[#allocation8 + $0x10] sm:$0xff]
    %v175 = vld [vmem:[#allocation8 + $0x18] sm:$0xff]
    %v176 = vld [vmem:[%s4] sm:$0x1]
    %v178 = vperm.slane %v176, 0
    %v180 = vld [vmem:[%s7] sm:$0x1]
    %v182 = vperm.slane %v180, 0
    %v184 = vld [vmem:[#allocation10] sm:$0x1]
    %v186 = vperm.slane %v184, 0
    %v188 = vld [vmem:[%s0] sm:$0xff]
    %v189 = vld [vmem:[%s0 + $0x8] sm:$0xff]
    %v190 = vld [vmem:[%s0 + $0x10] sm:$0xff]
    %v191 = vld [vmem:[%s0 + $0x18] sm:$0xff]
    %v192 = vld [vmem:[%s1] sm:$0xff]
    %v193 = vld [vmem:[%s1 + $0x8] sm:$0xff]
    %v194 = vld [vmem:[%s1 + $0x10] sm:$0xff]
    %v195 = vld [vmem:[%s1 + $0x18] sm:$0xff]
    %v196 = vld [vmem:[%s3] sm:$0x1]
    %v198 = vperm.slane %v196, 0
    %vm200 = vcmask 261120
    %v202 = vsel %vm200, %v188, 0
    %v205 = vsel %vm200, %v189, 0
    %v208 = vsel %vm200, %v190, 0
    %v211 = vsel %vm200, %v191, 0
    %213 = vmatpush.msra.mxu0 0.0
    %214 = vmatpush.msra.mxu0 0.0
    %215 = vmatpush.msra.mxu0 0.0
    %216 = vmatpush.msra.mxu0 0.0
    %217 = vmatpush.msra.mxu0 0.0
    %218 = vmatpush.msra.mxu0 0.0
    %219 = vmatpush.msra.mxu0 0.0
    %220 = vmatpush.msra.mxu0 0.0
    %221 = vmatpush.msra.mxu0 0.0
    %222 = vmatpush.msra.mxu0 0.0
    %223 = vmatpush.msra.mxu0 0.0
    %224 = vmatpush.msra.mxu0 0.0
    %225 = vmatpush.msra.mxu0 %v195
    %226 = vmatpush.msra.mxu0 %v194
    %227 = vmatpush.msra.mxu0 %v193
    %228 = vmatpush.msra.mxu0 %v192
    %229 = vmatmul.f32.gmra.mxu0 %v202
    %v230 = vpop.f32.mrf.mxu0
    %v231 = vadd.f32 %v198, %v230
    %232 = vmatmul.f32.gmra.mxu0 %v205
    %v233 = vpop.f32.mrf.mxu0
    %v234 = vadd.f32 %v198, %v233
    %235 = vmatmul.f32.gmra.mxu0 %v208
    %v236 = vpop.f32.mrf.mxu0
    %v237 = vadd.f32 %v198, %v236
    %238 = vmatmul.f32.gmra.mxu0 %v211
    %v239 = vpop.f32.mrf.mxu0
    %v240 = vadd.f32 %v198, %v239
    %241 = vdwg.mxu0
    %vm242 = vcmask 785408
    %243 = vst.msk [vmem:[#allocation2] sm:$0xff] %vm242, %v231
    %244 = vst.msk [vmem:[#allocation2 + $0x8] sm:$0xff] %vm242, %v234
    %245 = vst.msk [vmem:[#allocation2 + $0x10] sm:$0xff] %vm242, %v237
    %246 = vst.msk [vmem:[#allocation2 + $0x18] sm:$0xff] %vm242, %v240
    %v247 = vld [vmem:[#allocation2] sm:$0xf]
    %v249 = vsel %vm200, 0.0, 0
    %251 = vmatpush.msra.mxu0 0.0
    %252 = vmatpush.msra.mxu0 0.0
    %253 = vmatpush.msra.mxu0 0.0
    %254 = vmatpush.msra.mxu0 0.0
    %255 = vmatpush.msra.mxu0 0.0
    %256 = vmatpush.msra.mxu0 0.0
    %257 = vmatpush.msra.mxu0 0.0
    %258 = vmatpush.msra.mxu0 0.0
    %259 = vmatpush.msra.mxu0 0.0
    %260 = vmatpush.msra.mxu0 0.0
    %261 = vmatpush.msra.mxu0 0.0
    %262 = vmatpush.msra.mxu0 0.0
    %263 = vmatpush.msra.mxu0 %v167
    %264 = vmatpush.msra.mxu0 %v166
    %265 = vmatpush.msra.mxu0 %v165
    %266 = vmatpush.msra.mxu0 %v164
    %267 = vmatmul.f32.gmra.mxu0 %v249
    %v268 = vpop.f32.mrf.mxu0
    %v269 = vadd.f32 %v178, %v268
    %270 = vdwg.mxu0
    %v271 = vadd.f32 %v247, %v269
    %v272 = vxor.u32 %v271, 2147483648
    %v273 = vmul.f32 %v272, 1.442695
    %v274 = vpow.pop %v273
    %v275 = vadd.f32 %v274, 1.0
    %v276 = vrcp.pop %v275
    %v277 = vmul.f32 %v275, %v276
    %v278 = vsub.f32 1.0, %v277
    %v279 = vmul.f32 %v276, %v278
    %v280 = vadd.f32 %v276, %v279
    %vm281 = vweird.f32 %v275
    %vm282 = vweird.f32 %v276
    %vm283 = vmor %vm281, %vm282
    %v284 = vsel %vm283, %v276, %v280
    %v285 = vand.u32 2147483647, %v275
    %vm286 = vcmp.eq.f32.partialorder %v285, 8.507059e+37
    %v287 = vand.u32 %v275, 2147483648
    %v288 = vor.u32 1.1754944e-38, %v287
    %v289 = vsel %vm286, %v288, %v284
    %v290 = vmul.f32 1.0, %v289
    %292 = vrot.lane.b32.xlu0 %v269, 64
    %v293 = vpop.permute.xlu0 %292
    %v295 = vmul.f32 %v290, %v293
    %297 = vrot.lane.b32.xlu0 %v295, 64
    %v298 = vpop.permute.xlu0 %297
    %v300 = vadd.f32 %v247, %v298
    %v301 = vtanh.pop %v300
    %v302 = vsub.f32 1.0, %v290
    %304 = vrot.lane.b32.xlu0 %v301, 96
    %v305 = vpop.permute.xlu0 %304
    %v307 = vmul.f32 %v302, %v305
    %v308 = vmul.f32 %v290, 0.0
    %v309 = vadd.f32 %v307, %v308
    %311 = vrot.lane.b32.xlu0 %v309, 96
    %v312 = vpop.permute.xlu0 %311
    %v313 = vsel %vm200, %v312, 0
    %315 = vmatpush.msra.mxu0 0.0
    %316 = vmatpush.msra.mxu0 0.0
    %317 = vmatpush.msra.mxu0 0.0
    %318 = vmatpush.msra.mxu0 0.0
    %319 = vmatpush.msra.mxu0 0.0
    %320 = vmatpush.msra.mxu0 0.0
    %321 = vmatpush.msra.mxu0 0.0
    %322 = vmatpush.msra.mxu0 0.0
    %323 = vmatpush.msra.mxu0 0.0
    %324 = vmatpush.msra.mxu0 0.0
    %325 = vmatpush.msra.mxu0 0.0
    %326 = vmatpush.msra.mxu0 0.0
    %327 = vmatpush.msra.mxu0 %v171
    %328 = vmatpush.msra.mxu0 %v170
    %329 = vmatpush.msra.mxu0 %v169
    %330 = vmatpush.msra.mxu0 %v168
    %331 = vmatmul.f32.gmra.mxu0 %v313
    %v332 = vpop.f32.mrf.mxu0
    %v333 = vadd.f32 %v182, %v332
    %334 = vdwg.mxu0
    %335 = vmatpush.msra.mxu0 0.0
    %336 = vmatpush.msra.mxu0 0.0
    %337 = vmatpush.msra.mxu0 0.0
    %338 = vmatpush.msra.mxu0 0.0
    %339 = vmatpush.msra.mxu0 0.0
    %340 = vmatpush.msra.mxu0 0.0
    %341 = vmatpush.msra.mxu0 0.0
    %342 = vmatpush.msra.mxu0 0.0
    %343 = vmatpush.msra.mxu0 0.0
    %344 = vmatpush.msra.mxu0 0.0
    %345 = vmatpush.msra.mxu0 0.0
    %346 = vmatpush.msra.mxu0 0.0
    %347 = vmatpush.msra.mxu0 %v175
    %348 = vmatpush.msra.mxu0 %v174
    %349 = vmatpush.msra.mxu0 %v173
    %350 = vmatpush.msra.mxu0 %v172
    %351 = vmatmul.f32.gmra.mxu0 %v249
    %v352 = vpop.f32.mrf.mxu0
    %v353 = vadd.f32 %v186, %v352
    %354 = vdwg.mxu0
    %v355 = vadd.f32 %v333, %v353
    %v356 = vxor.u32 %v355, 2147483648
    %v357 = vmul.f32 %v356, 1.442695
    %v358 = vpow.pop %v357
    %v359 = vadd.f32 %v358, 1.0
    %v360 = vrcp.pop %v359
    %v361 = vmul.f32 %v359, %v360
    %v362 = vsub.f32 1.0, %v361
    %v363 = vmul.f32 %v360, %v362
    %v364 = vadd.f32 %v360, %v363
    %vm365 = vweird.f32 %v359
    %vm366 = vweird.f32 %v360
    %vm367 = vmor %vm365, %vm366
    %v368 = vsel %vm367, %v360, %v364
    %v369 = vand.u32 2147483647, %v359
    %vm370 = vcmp.eq.f32.partialorder %v369, 8.507059e+37
    %v371 = vand.u32 %v359, 2147483648
    %v372 = vor.u32 1.1754944e-38, %v371
    %v373 = vsel %vm370, %v372, %v368
    %v374 = vmul.f32 1.0, %v373
    %376 = vrot.lane.b32.xlu0 %v353, 64
    %v377 = vpop.permute.xlu0 %376
    %v379 = vmul.f32 %v374, %v377
    %381 = vrot.lane.b32.xlu0 %v379, 64
    %v382 = vpop.permute.xlu0 %381
    %v384 = vadd.f32 %v333, %v382
    %v385 = vtanh.pop %v384
    %v386 = vsub.f32 1.0, %v374
    %388 = vrot.lane.b32.xlu0 %v385, 96
    %v389 = vpop.permute.xlu0 %388
    %v391 = vmul.f32 %v386, %v389
    %v392 = vmul.f32 %v374, 0.0
    %v393 = vadd.f32 %v391, %v392
    %v394 = vld [vmem:[#allocation2 + $0x4] sm:$0xf]
    %395 = vmatpush.msra.mxu0 0.0
    %396 = vmatpush.msra.mxu0 0.0
    %397 = vmatpush.msra.mxu0 0.0
    %398 = vmatpush.msra.mxu0 0.0
    %399 = vmatpush.msra.mxu0 0.0
    %400 = vmatpush.msra.mxu0 0.0
    %401 = vmatpush.msra.mxu0 0.0
    %402 = vmatpush.msra.mxu0 0.0
    %403 = vmatpush.msra.mxu0 0.0
    %404 = vmatpush.msra.mxu0 0.0
    %405 = vmatpush.msra.mxu0 0.0
    %406 = vmatpush.msra.mxu0 0.0
    %407 = vmatpush.msra.mxu0 %v167
    %408 = vmatpush.msra.mxu0 %v166
    %409 = vmatpush.msra.mxu0 %v165
    %410 = vmatpush.msra.mxu0 %v164
    %411 = vmatmul.f32.gmra.mxu0 %v313
    %v412 = vpop.f32.mrf.mxu0
    %v413 = vadd.f32 %v178, %v412
    %414 = vdwg.mxu0
    %v415 = vadd.f32 %v394, %v413
    %v416 = vxor.u32 %v415, 2147483648
    %v417 = vmul.f32 %v416, 1.442695
    %v418 = vpow.pop %v417
    %v419 = vadd.f32 %v418, 1.0
    %v420 = vrcp.pop %v419
    %v421 = vmul.f32 %v419, %v420
    %v422 = vsub.f32 1.0, %v421
    %v423 = vmul.f32 %v420, %v422
    %v424 = vadd.f32 %v420, %v423
    %vm425 = vweird.f32 %v419
    %vm426 = vweird.f32 %v420
    %vm427 = vmor %vm425, %vm426
    %v428 = vsel %vm427, %v420, %v424
    %v429 = vand.u32 2147483647, %v419
    %vm430 = vcmp.eq.f32.partialorder %v429, 8.507059e+37
    %v431 = vand.u32 %v419, 2147483648
    %v432 = vor.u32 1.1754944e-38, %v431
    %v433 = vsel %vm430, %v432, %v428
    %v434 = vmul.f32 1.0, %v433
    %436 = vrot.lane.b32.xlu0 %v413, 64
    %v437 = vpop.permute.xlu0 %436
    %v439 = vmul.f32 %v434, %v437
    %441 = vrot.lane.b32.xlu0 %v439, 64
    %v442 = vpop.permute.xlu0 %441
    %v444 = vadd.f32 %v394, %v442
    %v445 = vtanh.pop %v444
    %v446 = vsub.f32 1.0, %v434
    %448 = vrot.lane.b32.xlu0 %v445, 96
    %v449 = vpop.permute.xlu0 %448
    %v451 = vmul.f32 %v446, %v449
    %v452 = vmul.f32 %v434, %v309
    %v453 = vadd.f32 %v451, %v452
    %455 = vrot.lane.b32.xlu0 %v453, 96
    %v456 = vpop.permute.xlu0 %455
    %v457 = vsel %vm200, %v456, 0
    %459 = vmatpush.msra.mxu0 0.0
    %460 = vmatpush.msra.mxu0 0.0
    %461 = vmatpush.msra.mxu0 0.0
    %462 = vmatpush.msra.mxu0 0.0
    %463 = vmatpush.msra.mxu0 0.0
    %464 = vmatpush.msra.mxu0 0.0
    %465 = vmatpush.msra.mxu0 0.0
    %466 = vmatpush.msra.mxu0 0.0
    %467 = vmatpush.msra.mxu0 0.0
    %468 = vmatpush.msra.mxu0 0.0
    %469 = vmatpush.msra.mxu0 0.0
    %470 = vmatpush.msra.mxu0 0.0
    %471 = vmatpush.msra.mxu0 %v171
    %472 = vmatpush.msra.mxu0 %v170
    %473 = vmatpush.msra.mxu0 %v169
    %474 = vmatpush.msra.mxu0 %v168
    %475 = vmatmul.f32.gmra.mxu0 %v457
    %v476 = vpop.f32.mrf.mxu0
    %v477 = vadd.f32 %v182, %v476
    %478 = vdwg.mxu0
    %480 = vrot.lane.b32.xlu0 %v393, 96
    %v481 = vpop.permute.xlu0 %480
    %v482 = vsel %vm200, %v481, 0
    %484 = vmatpush.msra.mxu0 0.0
    %485 = vmatpush.msra.mxu0 0.0
    %486 = vmatpush.msra.mxu0 0.0
    %487 = vmatpush.msra.mxu0 0.0
    %488 = vmatpush.msra.mxu0 0.0
    %489 = vmatpush.msra.mxu0 0.0
    %490 = vmatpush.msra.mxu0 0.0
    %491 = vmatpush.msra.mxu0 0.0
    %492 = vmatpush.msra.mxu0 0.0
    %493 = vmatpush.msra.mxu0 0.0
    %494 = vmatpush.msra.mxu0 0.0
    %495 = vmatpush.msra.mxu0 0.0
    %496 = vmatpush.msra.mxu0 %v175
    %497 = vmatpush.msra.mxu0 %v174
    %498 = vmatpush.msra.mxu0 %v173
    %499 = vmatpush.msra.mxu0 %v172
    %500 = vmatmul.f32.gmra.mxu0 %v482
    %v501 = vpop.f32.mrf.mxu0
    %v502 = vadd.f32 %v186, %v501
    %503 = vdwg.mxu0
    %v504 = vadd.f32 %v477, %v502
    %v505 = vxor.u32 %v504, 2147483648
    %v506 = vmul.f32 %v505, 1.442695
    %v507 = vpow.pop %v506
    %v508 = vadd.f32 %v507, 1.0
    %v509 = vrcp.pop %v508
    %v510 = vmul.f32 %v508, %v509
    %v511 = vsub.f32 1.0, %v510
    %v512 = vmul.f32 %v509, %v511
    %v513 = vadd.f32 %v509, %v512
    %vm514 = vweird.f32 %v508
    %vm515 = vweird.f32 %v509
    %vm516 = vmor %vm514, %vm515
    %v517 = vsel %vm516, %v509, %v513
    %v518 = vand.u32 2147483647, %v508
    %vm519 = vcmp.eq.f32.partialorder %v518, 8.507059e+37
    %v520 = vand.u32 %v508, 2147483648
    %v521 = vor.u32 1.1754944e-38, %v520
    %v522 = vsel %vm519, %v521, %v517
    %v523 = vmul.f32 1.0, %v522
    %525 = vrot.lane.b32.xlu0 %v502, 64
    %v526 = vpop.permute.xlu0 %525
    %v528 = vmul.f32 %v523, %v526
    %530 = vrot.lane.b32.xlu0 %v528, 64
    %v531 = vpop.permute.xlu0 %530
    %v533 = vadd.f32 %v477, %v531
    %v534 = vtanh.pop %v533
    %v535 = vsub.f32 1.0, %v523
    %537 = vrot.lane.b32.xlu0 %v534, 96
    %v538 = vpop.permute.xlu0 %537
    %v540 = vmul.f32 %v535, %v538
    %v541 = vmul.f32 %v523, %v393
    %v542 = vadd.f32 %v540, %v541
    %v543 = vld [vmem:[#allocation2 + $0x8] sm:$0xf]
    %544 = vmatpush.msra.mxu0 0.0
    %545 = vmatpush.msra.mxu0 0.0
    %546 = vmatpush.msra.mxu0 0.0
    %547 = vmatpush.msra.mxu0 0.0
    %548 = vmatpush.msra.mxu0 0.0
    %549 = vmatpush.msra.mxu0 0.0
    %550 = vmatpush.msra.mxu0 0.0
    %551 = vmatpush.msra.mxu0 0.0
    %552 = vmatpush.msra.mxu0 0.0
    %553 = vmatpush.msra.mxu0 0.0
    %554 = vmatpush.msra.mxu0 0.0
    %555 = vmatpush.msra.mxu0 0.0
    %556 = vmatpush.msra.mxu0 %v167
    %557 = vmatpush.msra.mxu0 %v166
    %558 = vmatpush.msra.mxu0 %v165
    %559 = vmatpush.msra.mxu0 %v164
    %560 = vmatmul.f32.gmra.mxu0 %v457
    %v561 = vpop.f32.mrf.mxu0
    %v562 = vadd.f32 %v178, %v561
    %563 = vdwg.mxu0
    %v564 = vadd.f32 %v543, %v562
    %v565 = vxor.u32 %v564, 2147483648
    %v566 = vmul.f32 %v565, 1.442695
    %v567 = vpow.pop %v566
    %v568 = vadd.f32 %v567, 1.0
    %v569 = vrcp.pop %v568
    %v570 = vmul.f32 %v568, %v569
    %v571 = vsub.f32 1.0, %v570
    %v572 = vmul.f32 %v569, %v571
    %v573 = vadd.f32 %v569, %v572
    %vm574 = vweird.f32 %v568
    %vm575 = vweird.f32 %v569
    %vm576 = vmor %vm574, %vm575
    %v577 = vsel %vm576, %v569, %v573
    %v578 = vand.u32 2147483647, %v568
    %vm579 = vcmp.eq.f32.partialorder %v578, 8.507059e+37
    %v580 = vand.u32 %v568, 2147483648
    %v581 = vor.u32 1.1754944e-38, %v580
    %v582 = vsel %vm579, %v581, %v577
    %v583 = vmul.f32 1.0, %v582
    %585 = vrot.lane.b32.xlu0 %v562, 64
    %v586 = vpop.permute.xlu0 %585
    %v588 = vmul.f32 %v583, %v586
    %590 = vrot.lane.b32.xlu0 %v588, 64
    %v591 = vpop.permute.xlu0 %590
    %v593 = vadd.f32 %v543, %v591
    %v594 = vtanh.pop %v593
    %v595 = vsub.f32 1.0, %v583
    %597 = vrot.lane.b32.xlu0 %v594, 96
    %v598 = vpop.permute.xlu0 %597
    %v600 = vmul.f32 %v595, %v598
    %v601 = vmul.f32 %v583, %v453
    %v602 = vadd.f32 %v600, %v601
    %604 = vrot.lane.b32.xlu0 %v602, 96
    %v605 = vpop.permute.xlu0 %604
    %v606 = vsel %vm200, %v605, 0
    %608 = vmatpush.msra.mxu0 0.0
    %609 = vmatpush.msra.mxu0 0.0
    %610 = vmatpush.msra.mxu0 0.0
    %611 = vmatpush.msra.mxu0 0.0
    %612 = vmatpush.msra.mxu0 0.0
    %613 = vmatpush.msra.mxu0 0.0
    %614 = vmatpush.msra.mxu0 0.0
    %615 = vmatpush.msra.mxu0 0.0
    %616 = vmatpush.msra.mxu0 0.0
    %617 = vmatpush.msra.mxu0 0.0
    %618 = vmatpush.msra.mxu0 0.0
    %619 = vmatpush.msra.mxu0 0.0
    %620 = vmatpush.msra.mxu0 %v171
    %621 = vmatpush.msra.mxu0 %v170
    %622 = vmatpush.msra.mxu0 %v169
    %623 = vmatpush.msra.mxu0 %v168
    %624 = vmatmul.f32.gmra.mxu0 %v606
    %v625 = vpop.f32.mrf.mxu0
    %v626 = vadd.f32 %v182, %v625
    %627 = vdwg.mxu0
    %629 = vrot.lane.b32.xlu0 %v542, 96
    %v630 = vpop.permute.xlu0 %629
    %v631 = vsel %vm200, %v630, 0
    %633 = vmatpush.msra.mxu0 0.0
    %634 = vmatpush.msra.mxu0 0.0
    %635 = vmatpush.msra.mxu0 0.0
    %636 = vmatpush.msra.mxu0 0.0
    %637 = vmatpush.msra.mxu0 0.0
    %638 = vmatpush.msra.mxu0 0.0
    %639 = vmatpush.msra.mxu0 0.0
    %640 = vmatpush.msra.mxu0 0.0
    %641 = vmatpush.msra.mxu0 0.0
    %642 = vmatpush.msra.mxu0 0.0
    %643 = vmatpush.msra.mxu0 0.0
    %644 = vmatpush.msra.mxu0 0.0
    %645 = vmatpush.msra.mxu0 %v175
    %646 = vmatpush.msra.mxu0 %v174
    %647 = vmatpush.msra.mxu0 %v173
    %648 = vmatpush.msra.mxu0 %v172
    %649 = vmatmul.f32.gmra.mxu0 %v631
    %v650 = vpop.f32.mrf.mxu0
    %v651 = vadd.f32 %v186, %v650
    %652 = vdwg.mxu0
    %v653 = vadd.f32 %v626, %v651
    %v654 = vxor.u32 %v653, 2147483648
    %v655 = vmul.f32 %v654, 1.442695
    %v656 = vpow.pop %v655
    %v657 = vadd.f32 %v656, 1.0
    %v658 = vrcp.pop %v657
    %v659 = vmul.f32 %v657, %v658
    %v660 = vsub.f32 1.0, %v659
    %v661 = vmul.f32 %v658, %v660
    %v662 = vadd.f32 %v658, %v661
    %vm663 = vweird.f32 %v657
    %vm664 = vweird.f32 %v658
    %vm665 = vmor %vm663, %vm664
    %v666 = vsel %vm665, %v658, %v662
    %v667 = vand.u32 2147483647, %v657
    %vm668 = vcmp.eq.f32.partialorder %v667, 8.507059e+37
    %v669 = vand.u32 %v657, 2147483648
    %v670 = vor.u32 1.1754944e-38, %v669
    %v671 = vsel %vm668, %v670, %v666
    %v672 = vmul.f32 1.0, %v671
    %674 = vrot.lane.b32.xlu0 %v651, 64
    %v675 = vpop.permute.xlu0 %674
    %v677 = vmul.f32 %v672, %v675
    %679 = vrot.lane.b32.xlu0 %v677, 64
    %v680 = vpop.permute.xlu0 %679
    %v682 = vadd.f32 %v626, %v680
    %v683 = vtanh.pop %v682
    %v684 = vsub.f32 1.0, %v672
    %686 = vrot.lane.b32.xlu0 %v683, 96
    %v687 = vpop.permute.xlu0 %686
    %v689 = vmul.f32 %v684, %v687
    %v690 = vmul.f32 %v672, %v542
    %v691 = vadd.f32 %v689, %v690
    %v692 = vld [vmem:[#allocation2 + $0xc] sm:$0xf]
    %693 = vmatpush.msra.mxu0 0.0
    %694 = vmatpush.msra.mxu0 0.0
    %695 = vmatpush.msra.mxu0 0.0
    %696 = vmatpush.msra.mxu0 0.0
    %697 = vmatpush.msra.mxu0 0.0
    %698 = vmatpush.msra.mxu0 0.0
    %699 = vmatpush.msra.mxu0 0.0
    %700 = vmatpush.msra.mxu0 0.0
    %701 = vmatpush.msra.mxu0 0.0
    %702 = vmatpush.msra.mxu0 0.0
    %703 = vmatpush.msra.mxu0 0.0
    %704 = vmatpush.msra.mxu0 0.0
    %705 = vmatpush.msra.mxu0 %v167
    %706 = vmatpush.msra.mxu0 %v166
    %707 = vmatpush.msra.mxu0 %v165
    %708 = vmatpush.msra.mxu0 %v164
    %709 = vmatmul.f32.gmra.mxu0 %v606
    %v710 = vpop.f32.mrf.mxu0
    %v711 = vadd.f32 %v178, %v710
    %712 = vdwg.mxu0
    %v713 = vadd.f32 %v692, %v711
    %v714 = vxor.u32 %v713, 2147483648
    %v715 = vmul.f32 %v714, 1.442695
    %v716 = vpow.pop %v715
    %v717 = vadd.f32 %v716, 1.0
    %v718 = vrcp.pop %v717
    %v719 = vmul.f32 %v717, %v718
    %v720 = vsub.f32 1.0, %v719
    %v721 = vmul.f32 %v718, %v720
    %v722 = vadd.f32 %v718, %v721
    %vm723 = vweird.f32 %v717
    %vm724 = vweird.f32 %v718
    %vm725 = vmor %vm723, %vm724
    %v726 = vsel %vm725, %v718, %v722
    %v727 = vand.u32 2147483647, %v717
    %vm728 = vcmp.eq.f32.partialorder %v727, 8.507059e+37
    %v729 = vand.u32 %v717, 2147483648
    %v730 = vor.u32 1.1754944e-38, %v729
    %v731 = vsel %vm728, %v730, %v726
    %v732 = vmul.f32 1.0, %v731
    %734 = vrot.lane.b32.xlu0 %v711, 64
    %v735 = vpop.permute.xlu0 %734
    %v737 = vmul.f32 %v732, %v735
    %739 = vrot.lane.b32.xlu0 %v737, 64
    %v740 = vpop.permute.xlu0 %739
    %v742 = vadd.f32 %v692, %v740
    %v743 = vtanh.pop %v742
    %v744 = vsub.f32 1.0, %v732
    %746 = vrot.lane.b32.xlu0 %v743, 96
    %v747 = vpop.permute.xlu0 %746
    %v749 = vmul.f32 %v744, %v747
    %v750 = vmul.f32 %v732, %v602
    %v751 = vadd.f32 %v749, %v750
    %753 = vrot.lane.b32.xlu0 %v751, 96
    %v754 = vpop.permute.xlu0 %753
    %v755 = vsel %vm200, %v754, 0
    %757 = vmatpush.msra.mxu0 0.0
    %758 = vmatpush.msra.mxu0 0.0
    %759 = vmatpush.msra.mxu0 0.0
    %760 = vmatpush.msra.mxu0 0.0
    %761 = vmatpush.msra.mxu0 0.0
    %762 = vmatpush.msra.mxu0 0.0
    %763 = vmatpush.msra.mxu0 0.0
    %764 = vmatpush.msra.mxu0 0.0
    %765 = vmatpush.msra.mxu0 0.0
    %766 = vmatpush.msra.mxu0 0.0
    %767 = vmatpush.msra.mxu0 0.0
    %768 = vmatpush.msra.mxu0 0.0
    %769 = vmatpush.msra.mxu0 %v171
    %770 = vmatpush.msra.mxu0 %v170
    %771 = vmatpush.msra.mxu0 %v169
    %772 = vmatpush.msra.mxu0 %v168
    %773 = vmatmul.f32.gmra.mxu0 %v755
    %v774 = vpop.f32.mrf.mxu0
    %v775 = vadd.f32 %v182, %v774
    %776 = vdwg.mxu0
    %778 = vrot.lane.b32.xlu0 %v691, 96
    %v779 = vpop.permute.xlu0 %778
    %v780 = vsel %vm200, %v779, 0
    %782 = vmatpush.msra.mxu0 0.0
    %783 = vmatpush.msra.mxu0 0.0
    %784 = vmatpush.msra.mxu0 0.0
    %785 = vmatpush.msra.mxu0 0.0
    %786 = vmatpush.msra.mxu0 0.0
    %787 = vmatpush.msra.mxu0 0.0
    %788 = vmatpush.msra.mxu0 0.0
    %789 = vmatpush.msra.mxu0 0.0
    %790 = vmatpush.msra.mxu0 0.0
    %791 = vmatpush.msra.mxu0 0.0
    %792 = vmatpush.msra.mxu0 0.0
    %793 = vmatpush.msra.mxu0 0.0
    %794 = vmatpush.msra.mxu0 %v175
    %795 = vmatpush.msra.mxu0 %v174
    %796 = vmatpush.msra.mxu0 %v173
    %797 = vmatpush.msra.mxu0 %v172
    %798 = vmatmul.f32.gmra.mxu0 %v780
    %v799 = vpop.f32.mrf.mxu0
    %v800 = vadd.f32 %v186, %v799
    %801 = vdwg.mxu0
    %v802 = vadd.f32 %v775, %v800
    %v803 = vxor.u32 %v802, 2147483648
    %v804 = vmul.f32 %v803, 1.442695
    %v805 = vpow.pop %v804
    %v806 = vadd.f32 %v805, 1.0
    %v807 = vrcp.pop %v806
    %v808 = vmul.f32 %v806, %v807
    %v809 = vsub.f32 1.0, %v808
    %v810 = vmul.f32 %v807, %v809
    %v811 = vadd.f32 %v807, %v810
    %vm812 = vweird.f32 %v806
    %vm813 = vweird.f32 %v807
    %vm814 = vmor %vm812, %vm813
    %v815 = vsel %vm814, %v807, %v811
    %v816 = vand.u32 2147483647, %v806
    %vm817 = vcmp.eq.f32.partialorder %v816, 8.507059e+37
    %v818 = vand.u32 %v806, 2147483648
    %v819 = vor.u32 1.1754944e-38, %v818
    %v820 = vsel %vm817, %v819, %v815
    %v821 = vmul.f32 1.0, %v820
    %823 = vrot.lane.b32.xlu0 %v800, 64
    %v824 = vpop.permute.xlu0 %823
    %v826 = vmul.f32 %v821, %v824
    %828 = vrot.lane.b32.xlu0 %v826, 64
    %v829 = vpop.permute.xlu0 %828
    %v831 = vadd.f32 %v775, %v829
    %v832 = vtanh.pop %v831
    %v833 = vsub.f32 1.0, %v821
    %835 = vrot.lane.b32.xlu0 %v832, 96
    %v836 = vpop.permute.xlu0 %835
    %v838 = vmul.f32 %v833, %v836
    %v839 = vmul.f32 %v821, %v691
    %v840 = vadd.f32 %v838, %v839
    %v841 = vld [vmem:[#allocation2 + $0x10] sm:$0xf]
    %842 = vmatpush.msra.mxu0 0.0
    %843 = vmatpush.msra.mxu0 0.0
    %844 = vmatpush.msra.mxu0 0.0
    %845 = vmatpush.msra.mxu0 0.0
    %846 = vmatpush.msra.mxu0 0.0
    %847 = vmatpush.msra.mxu0 0.0
    %848 = vmatpush.msra.mxu0 0.0
    %849 = vmatpush.msra.mxu0 0.0
    %850 = vmatpush.msra.mxu0 0.0
    %851 = vmatpush.msra.mxu0 0.0
    %852 = vmatpush.msra.mxu0 0.0
    %853 = vmatpush.msra.mxu0 0.0
    %854 = vmatpush.msra.mxu0 %v167
    %855 = vmatpush.msra.mxu0 %v166
    %856 = vmatpush.msra.mxu0 %v165
    %857 = vmatpush.msra.mxu0 %v164
    %858 = vmatmul.f32.gmra.mxu0 %v755
    %v859 = vpop.f32.mrf.mxu0
    %v860 = vadd.f32 %v178, %v859
    %861 = vdwg.mxu0
    %v862 = vadd.f32 %v841, %v860
    %v863 = vxor.u32 %v862, 2147483648
    %v864 = vmul.f32 %v863, 1.442695
    %v865 = vpow.pop %v864
    %v866 = vadd.f32 %v865, 1.0
    %v867 = vrcp.pop %v866
    %v868 = vmul.f32 %v866, %v867
    %v869 = vsub.f32 1.0, %v868
    %v870 = vmul.f32 %v867, %v869
    %v871 = vadd.f32 %v867, %v870
    %vm872 = vweird.f32 %v866
    %vm873 = vweird.f32 %v867
    %vm874 = vmor %vm872, %vm873
    %v875 = vsel %vm874, %v867, %v871
    %v876 = vand.u32 2147483647, %v866
    %vm877 = vcmp.eq.f32.partialorder %v876, 8.507059e+37
    %v878 = vand.u32 %v866, 2147483648
    %v879 = vor.u32 1.1754944e-38, %v878
    %v880 = vsel %vm877, %v879, %v875
    %v881 = vmul.f32 1.0, %v880
    %883 = vrot.lane.b32.xlu0 %v860, 64
    %v884 = vpop.permute.xlu0 %883
    %v886 = vmul.f32 %v881, %v884
    %888 = vrot.lane.b32.xlu0 %v886, 64
    %v889 = vpop.permute.xlu0 %888
    %v891 = vadd.f32 %v841, %v889
    %v892 = vtanh.pop %v891
    %v893 = vsub.f32 1.0, %v881
    %895 = vrot.lane.b32.xlu0 %v892, 96
    %v896 = vpop.permute.xlu0 %895
    %v898 = vmul.f32 %v893, %v896
    %v899 = vmul.f32 %v881, %v751
    %v900 = vadd.f32 %v898, %v899
    %902 = vrot.lane.b32.xlu0 %v900, 96
    %v903 = vpop.permute.xlu0 %902
    %v904 = vsel %vm200, %v903, 0
    %906 = vmatpush.msra.mxu0 0.0
    %907 = vmatpush.msra.mxu0 0.0
    %908 = vmatpush.msra.mxu0 0.0
    %909 = vmatpush.msra.mxu0 0.0
    %910 = vmatpush.msra.mxu0 0.0
    %911 = vmatpush.msra.mxu0 0.0
    %912 = vmatpush.msra.mxu0 0.0
    %913 = vmatpush.msra.mxu0 0.0
    %914 = vmatpush.msra.mxu0 0.0
    %915 = vmatpush.msra.mxu0 0.0
    %916 = vmatpush.msra.mxu0 0.0
    %917 = vmatpush.msra.mxu0 0.0
    %918 = vmatpush.msra.mxu0 %v171
    %919 = vmatpush.msra.mxu0 %v170
    %920 = vmatpush.msra.mxu0 %v169
    %921 = vmatpush.msra.mxu0 %v168
    %922 = vmatmul.f32.gmra.mxu0 %v904
    %v923 = vpop.f32.mrf.mxu0
    %v924 = vadd.f32 %v182, %v923
    %925 = vdwg.mxu0
    %927 = vrot.lane.b32.xlu0 %v840, 96
    %v928 = vpop.permute.xlu0 %927
    %v929 = vsel %vm200, %v928, 0
    %931 = vmatpush.msra.mxu0 0.0
    %932 = vmatpush.msra.mxu0 0.0
    %933 = vmatpush.msra.mxu0 0.0
    %934 = vmatpush.msra.mxu0 0.0
    %935 = vmatpush.msra.mxu0 0.0
    %936 = vmatpush.msra.mxu0 0.0
    %937 = vmatpush.msra.mxu0 0.0
    %938 = vmatpush.msra.mxu0 0.0
    %939 = vmatpush.msra.mxu0 0.0
    %940 = vmatpush.msra.mxu0 0.0
    %941 = vmatpush.msra.mxu0 0.0
    %942 = vmatpush.msra.mxu0 0.0
    %943 = vmatpush.msra.mxu0 %v175
    %944 = vmatpush.msra.mxu0 %v174
    %945 = vmatpush.msra.mxu0 %v173
    %946 = vmatpush.msra.mxu0 %v172
    %947 = vmatmul.f32.gmra.mxu0 %v929
    %v948 = vpop.f32.mrf.mxu0
    %v949 = vadd.f32 %v186, %v948
    %950 = vdwg.mxu0
    %v951 = vadd.f32 %v924, %v949
    %v952 = vxor.u32 %v951, 2147483648
    %v953 = vmul.f32 %v952, 1.442695
    %v954 = vpow.pop %v953
    %v955 = vadd.f32 %v954, 1.0
    %v956 = vrcp.pop %v955
    %v957 = vmul.f32 %v955, %v956
    %v958 = vsub.f32 1.0, %v957
    %v959 = vmul.f32 %v956, %v958
    %v960 = vadd.f32 %v956, %v959
    %vm961 = vweird.f32 %v955
    %vm962 = vweird.f32 %v956
    %vm963 = vmor %vm961, %vm962
    %v964 = vsel %vm963, %v956, %v960
    %v965 = vand.u32 2147483647, %v955
    %vm966 = vcmp.eq.f32.partialorder %v965, 8.507059e+37
    %v967 = vand.u32 %v955, 2147483648
    %v968 = vor.u32 1.1754944e-38, %v967
    %v969 = vsel %vm966, %v968, %v964
    %v970 = vmul.f32 1.0, %v969
    %972 = vrot.lane.b32.xlu0 %v949, 64
    %v973 = vpop.permute.xlu0 %972
    %v975 = vmul.f32 %v970, %v973
    %977 = vrot.lane.b32.xlu0 %v975, 64
    %v978 = vpop.permute.xlu0 %977
    %v980 = vadd.f32 %v924, %v978
    %v981 = vtanh.pop %v980
    %v982 = vsub.f32 1.0, %v970
    %984 = vrot.lane.b32.xlu0 %v981, 96
    %v985 = vpop.permute.xlu0 %984
    %v987 = vmul.f32 %v982, %v985
    %v988 = vmul.f32 %v970, %v840
    %v989 = vadd.f32 %v987, %v988
    %v990 = vld [vmem:[#allocation2 + $0x14] sm:$0xf]
    %991 = vmatpush.msra.mxu0 0.0
    %992 = vmatpush.msra.mxu0 0.0
    %993 = vmatpush.msra.mxu0 0.0
    %994 = vmatpush.msra.mxu0 0.0
    %995 = vmatpush.msra.mxu0 0.0
    %996 = vmatpush.msra.mxu0 0.0
    %997 = vmatpush.msra.mxu0 0.0
    %998 = vmatpush.msra.mxu0 0.0
    %999 = vmatpush.msra.mxu0 0.0
    %1000 = vmatpush.msra.mxu0 0.0
    %1001 = vmatpush.msra.mxu0 0.0
    %1002 = vmatpush.msra.mxu0 0.0
    %1003 = vmatpush.msra.mxu0 %v167
    %1004 = vmatpush.msra.mxu0 %v166
    %1005 = vmatpush.msra.mxu0 %v165
    %1006 = vmatpush.msra.mxu0 %v164
    %1007 = vmatmul.f32.gmra.mxu0 %v904
    %v1008 = vpop.f32.mrf.mxu0
    %v1009 = vadd.f32 %v178, %v1008
    %1010 = vdwg.mxu0
    %v1011 = vadd.f32 %v990, %v1009
    %v1012 = vxor.u32 %v1011, 2147483648
    %v1013 = vmul.f32 %v1012, 1.442695
    %v1014 = vpow.pop %v1013
    %v1015 = vadd.f32 %v1014, 1.0
    %v1016 = vrcp.pop %v1015
    %v1017 = vmul.f32 %v1015, %v1016
    %v1018 = vsub.f32 1.0, %v1017
    %v1019 = vmul.f32 %v1016, %v1018
    %v1020 = vadd.f32 %v1016, %v1019
    %vm1021 = vweird.f32 %v1015
    %vm1022 = vweird.f32 %v1016
    %vm1023 = vmor %vm1021, %vm1022
    %v1024 = vsel %vm1023, %v1016, %v1020
    %v1025 = vand.u32 2147483647, %v1015
    %vm1026 = vcmp.eq.f32.partialorder %v1025, 8.507059e+37
    %v1027 = vand.u32 %v1015, 2147483648
    %v1028 = vor.u32 1.1754944e-38, %v1027
    %v1029 = vsel %vm1026, %v1028, %v1024
    %v1030 = vmul.f32 1.0, %v1029
    %1032 = vrot.lane.b32.xlu0 %v1009, 64
    %v1033 = vpop.permute.xlu0 %1032
    %v1035 = vmul.f32 %v1030, %v1033
    %1037 = vrot.lane.b32.xlu0 %v1035, 64
    %v1038 = vpop.permute.xlu0 %1037
    %v1040 = vadd.f32 %v990, %v1038
    %v1041 = vtanh.pop %v1040
    %v1042 = vsub.f32 1.0, %v1030
    %1044 = vrot.lane.b32.xlu0 %v1041, 96
    %v1045 = vpop.permute.xlu0 %1044
    %v1047 = vmul.f32 %v1042, %v1045
    %v1048 = vmul.f32 %v1030, %v900
    %v1049 = vadd.f32 %v1047, %v1048
    %1051 = vrot.lane.b32.xlu0 %v1049, 96
    %v1052 = vpop.permute.xlu0 %1051
    %v1053 = vsel %vm200, %v1052, 0
    %1055 = vmatpush.msra.mxu0 0.0
    %1056 = vmatpush.msra.mxu0 0.0
    %1057 = vmatpush.msra.mxu0 0.0
    %1058 = vmatpush.msra.mxu0 0.0
    %1059 = vmatpush.msra.mxu0 0.0
    %1060 = vmatpush.msra.mxu0 0.0
    %1061 = vmatpush.msra.mxu0 0.0
    %1062 = vmatpush.msra.mxu0 0.0
    %1063 = vmatpush.msra.mxu0 0.0
    %1064 = vmatpush.msra.mxu0 0.0
    %1065 = vmatpush.msra.mxu0 0.0
    %1066 = vmatpush.msra.mxu0 0.0
    %1067 = vmatpush.msra.mxu0 %v171
    %1068 = vmatpush.msra.mxu0 %v170
    %1069 = vmatpush.msra.mxu0 %v169
    %1070 = vmatpush.msra.mxu0 %v168
    %1071 = vmatmul.f32.gmra.mxu0 %v1053
    %v1072 = vpop.f32.mrf.mxu0
    %v1073 = vadd.f32 %v182, %v1072
    %1074 = vdwg.mxu0
    %1076 = vrot.lane.b32.xlu0 %v989, 96
    %v1077 = vpop.permute.xlu0 %1076
    %v1078 = vsel %vm200, %v1077, 0
    %1080 = vmatpush.msra.mxu0 0.0
    %1081 = vmatpush.msra.mxu0 0.0
    %1082 = vmatpush.msra.mxu0 0.0
    %1083 = vmatpush.msra.mxu0 0.0
    %1084 = vmatpush.msra.mxu0 0.0
    %1085 = vmatpush.msra.mxu0 0.0
    %1086 = vmatpush.msra.mxu0 0.0
    %1087 = vmatpush.msra.mxu0 0.0
    %1088 = vmatpush.msra.mxu0 0.0
    %1089 = vmatpush.msra.mxu0 0.0
    %1090 = vmatpush.msra.mxu0 0.0
    %1091 = vmatpush.msra.mxu0 0.0
    %1092 = vmatpush.msra.mxu0 %v175
    %1093 = vmatpush.msra.mxu0 %v174
    %1094 = vmatpush.msra.mxu0 %v173
    %1095 = vmatpush.msra.mxu0 %v172
    %1096 = vmatmul.f32.gmra.mxu0 %v1078
    %v1097 = vpop.f32.mrf.mxu0
    %v1098 = vadd.f32 %v186, %v1097
    %1099 = vdwg.mxu0
    %v1100 = vadd.f32 %v1073, %v1098
    %v1101 = vxor.u32 %v1100, 2147483648
    %v1102 = vmul.f32 %v1101, 1.442695
    %v1103 = vpow.pop %v1102
    %v1104 = vadd.f32 %v1103, 1.0
    %v1105 = vrcp.pop %v1104
    %v1106 = vmul.f32 %v1104, %v1105
    %v1107 = vsub.f32 1.0, %v1106
    %v1108 = vmul.f32 %v1105, %v1107
    %v1109 = vadd.f32 %v1105, %v1108
    %vm1110 = vweird.f32 %v1104
    %vm1111 = vweird.f32 %v1105
    %vm1112 = vmor %vm1110, %vm1111
    %v1113 = vsel %vm1112, %v1105, %v1109
    %v1114 = vand.u32 2147483647, %v1104
    %vm1115 = vcmp.eq.f32.partialorder %v1114, 8.507059e+37
    %v1116 = vand.u32 %v1104, 2147483648
    %v1117 = vor.u32 1.1754944e-38, %v1116
    %v1118 = vsel %vm1115, %v1117, %v1113
    %v1119 = vmul.f32 1.0, %v1118
    %1121 = vrot.lane.b32.xlu0 %v1098, 64
    %v1122 = vpop.permute.xlu0 %1121
    %v1124 = vmul.f32 %v1119, %v1122
    %1126 = vrot.lane.b32.xlu0 %v1124, 64
    %v1127 = vpop.permute.xlu0 %1126
    %v1129 = vadd.f32 %v1073, %v1127
    %v1130 = vtanh.pop %v1129
    %v1131 = vsub.f32 1.0, %v1119
    %1133 = vrot.lane.b32.xlu0 %v1130, 96
    %v1134 = vpop.permute.xlu0 %1133
    %v1136 = vmul.f32 %v1131, %v1134
    %v1137 = vmul.f32 %v1119, %v989
    %v1138 = vadd.f32 %v1136, %v1137
    %v1139 = vld [vmem:[#allocation2 + $0x18] sm:$0xf]
    %1140 = vmatpush.msra.mxu0 0.0
    %1141 = vmatpush.msra.mxu0 0.0
    %1142 = vmatpush.msra.mxu0 0.0
    %1143 = vmatpush.msra.mxu0 0.0
    %1144 = vmatpush.msra.mxu0 0.0
    %1145 = vmatpush.msra.mxu0 0.0
    %1146 = vmatpush.msra.mxu0 0.0
    %1147 = vmatpush.msra.mxu0 0.0
    %1148 = vmatpush.msra.mxu0 0.0
    %1149 = vmatpush.msra.mxu0 0.0
    %1150 = vmatpush.msra.mxu0 0.0
    %1151 = vmatpush.msra.mxu0 0.0
    %1152 = vmatpush.msra.mxu0 %v167
    %1153 = vmatpush.msra.mxu0 %v166
    %1154 = vmatpush.msra.mxu0 %v165
    %1155 = vmatpush.msra.mxu0 %v164
    %1156 = vmatmul.f32.gmra.mxu0 %v1053
    %v1157 = vpop.f32.mrf.mxu0
    %v1158 = vadd.f32 %v178, %v1157
    %1159 = vdwg.mxu0
    %v1160 = vadd.f32 %v1139, %v1158
    %v1161 = vxor.u32 %v1160, 2147483648
    %v1162 = vmul.f32 %v1161, 1.442695
    %v1163 = vpow.pop %v1162
    %v1164 = vadd.f32 %v1163, 1.0
    %v1165 = vrcp.pop %v1164
    %v1166 = vmul.f32 %v1164, %v1165
    %v1167 = vsub.f32 1.0, %v1166
    %v1168 = vmul.f32 %v1165, %v1167
    %v1169 = vadd.f32 %v1165, %v1168
    %vm1170 = vweird.f32 %v1164
    %vm1171 = vweird.f32 %v1165
    %vm1172 = vmor %vm1170, %vm1171
    %v1173 = vsel %vm1172, %v1165, %v1169
    %v1174 = vand.u32 2147483647, %v1164
    %vm1175 = vcmp.eq.f32.partialorder %v1174, 8.507059e+37
    %v1176 = vand.u32 %v1164, 2147483648
    %v1177 = vor.u32 1.1754944e-38, %v1176
    %v1178 = vsel %vm1175, %v1177, %v1173
    %v1179 = vmul.f32 1.0, %v1178
    %1181 = vrot.lane.b32.xlu0 %v1158, 64
    %v1182 = vpop.permute.xlu0 %1181
    %v1184 = vmul.f32 %v1179, %v1182
    %1186 = vrot.lane.b32.xlu0 %v1184, 64
    %v1187 = vpop.permute.xlu0 %1186
    %v1189 = vadd.f32 %v1139, %v1187
    %v1190 = vtanh.pop %v1189
    %v1191 = vsub.f32 1.0, %v1179
    %1193 = vrot.lane.b32.xlu0 %v1190, 96
    %v1194 = vpop.permute.xlu0 %1193
    %v1196 = vmul.f32 %v1191, %v1194
    %v1197 = vmul.f32 %v1179, %v1049
    %v1198 = vadd.f32 %v1196, %v1197
    %1200 = vrot.lane.b32.xlu0 %v1198, 96
    %v1201 = vpop.permute.xlu0 %1200
    %v1202 = vsel %vm200, %v1201, 0
    %1204 = vmatpush.msra.mxu0 0.0
    %1205 = vmatpush.msra.mxu0 0.0
    %1206 = vmatpush.msra.mxu0 0.0
    %1207 = vmatpush.msra.mxu0 0.0
    %1208 = vmatpush.msra.mxu0 0.0
    %1209 = vmatpush.msra.mxu0 0.0
    %1210 = vmatpush.msra.mxu0 0.0
    %1211 = vmatpush.msra.mxu0 0.0
    %1212 = vmatpush.msra.mxu0 0.0
    %1213 = vmatpush.msra.mxu0 0.0
    %1214 = vmatpush.msra.mxu0 0.0
    %1215 = vmatpush.msra.mxu0 0.0
    %1216 = vmatpush.msra.mxu0 %v171
    %1217 = vmatpush.msra.mxu0 %v170
    %1218 = vmatpush.msra.mxu0 %v169
    %1219 = vmatpush.msra.mxu0 %v168
    %1220 = vmatmul.f32.gmra.mxu0 %v1202
    %v1221 = vpop.f32.mrf.mxu0
    %v1222 = vadd.f32 %v182, %v1221
    %1223 = vdwg.mxu0
    %1225 = vrot.lane.b32.xlu0 %v1138, 96
    %v1226 = vpop.permute.xlu0 %1225
    %v1227 = vsel %vm200, %v1226, 0
    %1229 = vmatpush.msra.mxu0 0.0
    %1230 = vmatpush.msra.mxu0 0.0
    %1231 = vmatpush.msra.mxu0 0.0
    %1232 = vmatpush.msra.mxu0 0.0
    %1233 = vmatpush.msra.mxu0 0.0
    %1234 = vmatpush.msra.mxu0 0.0
    %1235 = vmatpush.msra.mxu0 0.0
    %1236 = vmatpush.msra.mxu0 0.0
    %1237 = vmatpush.msra.mxu0 0.0
    %1238 = vmatpush.msra.mxu0 0.0
    %1239 = vmatpush.msra.mxu0 0.0
    %1240 = vmatpush.msra.mxu0 0.0
    %1241 = vmatpush.msra.mxu0 %v175
    %1242 = vmatpush.msra.mxu0 %v174
    %1243 = vmatpush.msra.mxu0 %v173
    %1244 = vmatpush.msra.mxu0 %v172
    %1245 = vmatmul.f32.gmra.mxu0 %v1227
    %v1246 = vpop.f32.mrf.mxu0
    %v1247 = vadd.f32 %v186, %v1246
    %1248 = vdwg.mxu0
    %v1249 = vadd.f32 %v1222, %v1247
    %v1250 = vxor.u32 %v1249, 2147483648
    %v1251 = vmul.f32 %v1250, 1.442695
    %v1252 = vpow.pop %v1251
    %v1253 = vadd.f32 %v1252, 1.0
    %v1254 = vrcp.pop %v1253
    %v1255 = vmul.f32 %v1253, %v1254
    %v1256 = vsub.f32 1.0, %v1255
    %v1257 = vmul.f32 %v1254, %v1256
    %v1258 = vadd.f32 %v1254, %v1257
    %vm1259 = vweird.f32 %v1253
    %vm1260 = vweird.f32 %v1254
    %vm1261 = vmor %vm1259, %vm1260
    %v1262 = vsel %vm1261, %v1254, %v1258
    %v1263 = vand.u32 2147483647, %v1253
    %vm1264 = vcmp.eq.f32.partialorder %v1263, 8.507059e+37
    %v1265 = vand.u32 %v1253, 2147483648
    %v1266 = vor.u32 1.1754944e-38, %v1265
    %v1267 = vsel %vm1264, %v1266, %v1262
    %v1268 = vmul.f32 1.0, %v1267
    %1270 = vrot.lane.b32.xlu0 %v1247, 64
    %v1271 = vpop.permute.xlu0 %1270
    %v1273 = vmul.f32 %v1268, %v1271
    %1275 = vrot.lane.b32.xlu0 %v1273, 64
    %v1276 = vpop.permute.xlu0 %1275
    %v1278 = vadd.f32 %v1222, %v1276
    %v1279 = vtanh.pop %v1278
    %v1280 = vsub.f32 1.0, %v1268
    %1282 = vrot.lane.b32.xlu0 %v1279, 96
    %v1283 = vpop.permute.xlu0 %1282
    %v1285 = vmul.f32 %v1280, %v1283
    %v1286 = vmul.f32 %v1268, %v1138
    %v1287 = vadd.f32 %v1285, %v1286
    %v1288 = vld [vmem:[#allocation2 + $0x1c] sm:$0xf]
    %1289 = vmatpush.msra.mxu0 0.0
    %1290 = vmatpush.msra.mxu0 0.0
    %1291 = vmatpush.msra.mxu0 0.0
    %1292 = vmatpush.msra.mxu0 0.0
    %1293 = vmatpush.msra.mxu0 0.0
    %1294 = vmatpush.msra.mxu0 0.0
    %1295 = vmatpush.msra.mxu0 0.0
    %1296 = vmatpush.msra.mxu0 0.0
    %1297 = vmatpush.msra.mxu0 0.0
    %1298 = vmatpush.msra.mxu0 0.0
    %1299 = vmatpush.msra.mxu0 0.0
    %1300 = vmatpush.msra.mxu0 0.0
    %1301 = vmatpush.msra.mxu0 %v167
    %1302 = vmatpush.msra.mxu0 %v166
    %1303 = vmatpush.msra.mxu0 %v165
    %1304 = vmatpush.msra.mxu0 %v164
    %1305 = vmatmul.f32.gmra.mxu0 %v1202
    %v1306 = vpop.f32.mrf.mxu0
    %v1307 = vadd.f32 %v178, %v1306
    %1308 = vdwg.mxu0
    %v1309 = vadd.f32 %v1288, %v1307
    %v1310 = vxor.u32 %v1309, 2147483648
    %v1311 = vmul.f32 %v1310, 1.442695
    %v1312 = vpow.pop %v1311
    %v1313 = vadd.f32 %v1312, 1.0
    %v1314 = vrcp.pop %v1313
    %v1315 = vmul.f32 %v1313, %v1314
    %v1316 = vsub.f32 1.0, %v1315
    %v1317 = vmul.f32 %v1314, %v1316
    %v1318 = vadd.f32 %v1314, %v1317
    %vm1319 = vweird.f32 %v1313
    %vm1320 = vweird.f32 %v1314
    %vm1321 = vmor %vm1319, %vm1320
    %v1322 = vsel %vm1321, %v1314, %v1318
    %v1323 = vand.u32 2147483647, %v1313
    %vm1324 = vcmp.eq.f32.partialorder %v1323, 8.507059e+37
    %v1325 = vand.u32 %v1313, 2147483648
    %v1326 = vor.u32 1.1754944e-38, %v1325
    %v1327 = vsel %vm1324, %v1326, %v1322
    %v1328 = vmul.f32 1.0, %v1327
    %1330 = vrot.lane.b32.xlu0 %v1307, 64
    %v1331 = vpop.permute.xlu0 %1330
    %v1333 = vmul.f32 %v1328, %v1331
    %1335 = vrot.lane.b32.xlu0 %v1333, 64
    %v1336 = vpop.permute.xlu0 %1335
    %v1338 = vadd.f32 %v1288, %v1336
    %v1339 = vtanh.pop %v1338
    %v1340 = vsub.f32 1.0, %v1328
    %1342 = vrot.lane.b32.xlu0 %v1339, 96
    %v1343 = vpop.permute.xlu0 %1342
    %v1345 = vmul.f32 %v1340, %v1343
    %v1346 = vmul.f32 %v1328, %v1198
    %v1347 = vadd.f32 %v1345, %v1346
    %1349 = vrot.lane.b32.xlu0 %v1347, 96
    %v1350 = vpop.permute.xlu0 %1349
    %v1351 = vsel %vm200, %v1350, 0
    %1353 = vmatpush.msra.mxu0 0.0
    %1354 = vmatpush.msra.mxu0 0.0
    %1355 = vmatpush.msra.mxu0 0.0
    %1356 = vmatpush.msra.mxu0 0.0
    %1357 = vmatpush.msra.mxu0 0.0
    %1358 = vmatpush.msra.mxu0 0.0
    %1359 = vmatpush.msra.mxu0 0.0
    %1360 = vmatpush.msra.mxu0 0.0
    %1361 = vmatpush.msra.mxu0 0.0
    %1362 = vmatpush.msra.mxu0 0.0
    %1363 = vmatpush.msra.mxu0 0.0
    %1364 = vmatpush.msra.mxu0 0.0
    %1365 = vmatpush.msra.mxu0 %v171
    %1366 = vmatpush.msra.mxu0 %v170
    %1367 = vmatpush.msra.mxu0 %v169
    %1368 = vmatpush.msra.mxu0 %v168
    %1369 = vmatmul.f32.gmra.mxu0 %v1351
    %v1370 = vpop.f32.mrf.mxu0
    %v1371 = vadd.f32 %v182, %v1370
    %1372 = vdwg.mxu0
    %1374 = vrot.lane.b32.xlu0 %v1287, 96
    %v1375 = vpop.permute.xlu0 %1374
    %v1376 = vsel %vm200, %v1375, 0
    %1378 = vmatpush.msra.mxu0 0.0
    %1379 = vmatpush.msra.mxu0 0.0
    %1380 = vmatpush.msra.mxu0 0.0
    %1381 = vmatpush.msra.mxu0 0.0
    %1382 = vmatpush.msra.mxu0 0.0
    %1383 = vmatpush.msra.mxu0 0.0
    %1384 = vmatpush.msra.mxu0 0.0
    %1385 = vmatpush.msra.mxu0 0.0
    %1386 = vmatpush.msra.mxu0 0.0
    %1387 = vmatpush.msra.mxu0 0.0
    %1388 = vmatpush.msra.mxu0 0.0
    %1389 = vmatpush.msra.mxu0 0.0
    %1390 = vmatpush.msra.mxu0 %v175
    %1391 = vmatpush.msra.mxu0 %v174
    %1392 = vmatpush.msra.mxu0 %v173
    %1393 = vmatpush.msra.mxu0 %v172
    %1394 = vmatmul.f32.gmra.mxu0 %v1376
    %v1395 = vpop.f32.mrf.mxu0
    %v1396 = vadd.f32 %v186, %v1395
    %1397 = vdwg.mxu0
    %v1398 = vadd.f32 %v1371, %v1396
    %v1399 = vxor.u32 %v1398, 2147483648
    %v1400 = vmul.f32 %v1399, 1.442695
    %v1401 = vpow.pop %v1400
    %v1402 = vadd.f32 %v1401, 1.0
    %v1403 = vrcp.pop %v1402
    %v1404 = vmul.f32 %v1402, %v1403
    %v1405 = vsub.f32 1.0, %v1404
    %v1406 = vmul.f32 %v1403, %v1405
    %v1407 = vadd.f32 %v1403, %v1406
    %vm1408 = vweird.f32 %v1402
    %vm1409 = vweird.f32 %v1403
    %vm1410 = vmor %vm1408, %vm1409
    %v1411 = vsel %vm1410, %v1403, %v1407
    %v1412 = vand.u32 2147483647, %v1402
    %vm1413 = vcmp.eq.f32.partialorder %v1412, 8.507059e+37
    %v1414 = vand.u32 %v1402, 2147483648
    %v1415 = vor.u32 1.1754944e-38, %v1414
    %v1416 = vsel %vm1413, %v1415, %v1411
    %v1417 = vmul.f32 1.0, %v1416
    %1419 = vrot.lane.b32.xlu0 %v1396, 64
    %v1420 = vpop.permute.xlu0 %1419
    %v1422 = vmul.f32 %v1417, %v1420
    %1424 = vrot.lane.b32.xlu0 %v1422, 64
    %v1425 = vpop.permute.xlu0 %1424
    %v1427 = vadd.f32 %v1371, %v1425
    %v1428 = vtanh.pop %v1427
    %v1429 = vsub.f32 1.0, %v1417
    %1431 = vrot.lane.b32.xlu0 %v1428, 96
    %v1432 = vpop.permute.xlu0 %1431
    %v1434 = vmul.f32 %v1429, %v1432
    %v1435 = vmul.f32 %v1417, %v1287
    %v1436 = vadd.f32 %v1434, %v1435
    %vm1438 = vcmask 257024
    %1439 = vst.msk [vmem:[#allocation3] sm:$0xf] %vm1438, %v1350
    %1441 = vrot.lane.b32.xlu0 %v1436, 96
    %v1442 = vpop.permute.xlu0 %1441
    %1444 = vst.msk [vmem:[#allocation3 + $0x4] sm:$0xf] %vm1438, %v1442
    %v1445 = vld [vmem:[#allocation13] sm:$0xff]
    %v1446 = vld [vmem:[#allocation13 + $0x8] sm:$0xff]
    %v1447 = vld [vmem:[#allocation13 + $0x10] sm:$0xff]
    %v1448 = vld [vmem:[#allocation13 + $0x18] sm:$0xff]
    %v1449 = vld [vmem:[#allocation14] sm:$0xff]
    %v1450 = vld [vmem:[#allocation14 + $0x8] sm:$0xff]
    %v1451 = vld [vmem:[#allocation14 + $0x10] sm:$0xff]
    %v1452 = vld [vmem:[#allocation14 + $0x18] sm:$0xff]
    %v1453 = vld [vmem:[#allocation16] sm:$0xff]
    %v1454 = vld [vmem:[#allocation16 + $0x8] sm:$0xff]
    %v1455 = vld [vmem:[#allocation16 + $0x10] sm:$0xff]
    %v1456 = vld [vmem:[#allocation16 + $0x18] sm:$0xff]
    %v1457 = vld [vmem:[%s12] sm:$0x1]
    %v1458 = vld [vmem:[%s15] sm:$0x1]
    %v1459 = vld [vmem:[%s16] sm:$0x1]
    %v1460 = vld [vmem:[#allocation3] sm:$0xff]
    %v1461 = vld [vmem:[#allocation11] sm:$0xff]
    %v1462 = vld [vmem:[#allocation11 + $0x8] sm:$0xff]
    %v1463 = vld [vmem:[#allocation11 + $0x10] sm:$0xff]
    %v1464 = vld [vmem:[#allocation11 + $0x18] sm:$0xff]
    %v1465 = vld [vmem:[%s11] sm:$0x1]
    %v1467 = vperm.slane %v1465, 0
    %v1470 = vsel %vm200, %v1460, 0
    %1472 = vmatpush.msra.mxu0 0.0
    %1473 = vmatpush.msra.mxu0 0.0
    %1474 = vmatpush.msra.mxu0 0.0
    %1475 = vmatpush.msra.mxu0 0.0
    %1476 = vmatpush.msra.mxu0 0.0
    %1477 = vmatpush.msra.mxu0 0.0
    %1478 = vmatpush.msra.mxu0 0.0
    %1479 = vmatpush.msra.mxu0 0.0
    %1480 = vmatpush.msra.mxu0 0.0
    %1481 = vmatpush.msra.mxu0 0.0
    %1482 = vmatpush.msra.mxu0 0.0
    %1483 = vmatpush.msra.mxu0 0.0
    %1484 = vmatpush.msra.mxu0 %v1464
    %1485 = vmatpush.msra.mxu0 %v1463
    %1486 = vmatpush.msra.mxu0 %v1462
    %1487 = vmatpush.msra.mxu0 %v1461
    %1488 = vmatmul.f32.gmra.mxu0 %v1470
    %v1489 = vpop.f32.mrf.mxu0
    %v1490 = vadd.f32 %v1467, %v1489
    %1491 = vdwg.mxu0
    %1492 = vst.msk [vmem:[#allocation4] sm:$0xff] %vm242, %v1490
    %v1493 = vld [vmem:[#allocation4 + $0x1] sm:$0x1]
    %1494 = vmatpush.msra.mxu0 0.0
    %1495 = vmatpush.msra.mxu0 0.0
    %1496 = vmatpush.msra.mxu0 0.0
    %1497 = vmatpush.msra.mxu0 0.0
    %1498 = vmatpush.msra.mxu0 0.0
    %1499 = vmatpush.msra.mxu0 0.0
    %1500 = vmatpush.msra.mxu0 0.0
    %1501 = vmatpush.msra.mxu0 0.0
    %1502 = vmatpush.msra.mxu0 0.0
    %1503 = vmatpush.msra.mxu0 0.0
    %1504 = vmatpush.msra.mxu0 0.0
    %1505 = vmatpush.msra.mxu0 0.0
    %1506 = vmatpush.msra.mxu0 %v1448
    %1507 = vmatpush.msra.mxu0 %v1447
    %1508 = vmatpush.msra.mxu0 %v1446
    %1509 = vmatpush.msra.mxu0 %v1445
    %1510 = vmatmul.f32.gmra.mxu0 %v249
    %v1511 = vpop.f32.mrf.mxu0
    %v1512 = vadd.f32 %v1457, %v1511
    %1513 = vdwg.mxu0
    %v1514 = vadd.f32 %v1493, %v1512
    %v1515 = vxor.u32 %v1514, 2147483648
    %v1516 = vmul.f32 %v1515, 1.442695
    %v1517 = vpow.pop %v1516
    %v1518 = vadd.f32 %v1517, 1.0
    %v1519 = vrcp.pop %v1518
    %v1520 = vmul.f32 %v1518, %v1519
    %v1521 = vsub.f32 1.0, %v1520
    %v1522 = vmul.f32 %v1519, %v1521
    %v1523 = vadd.f32 %v1519, %v1522
    %vm1524 = vweird.f32 %v1518
    %vm1525 = vweird.f32 %v1519
    %vm1526 = vmor %vm1524, %vm1525
    %v1527 = vsel %vm1526, %v1519, %v1523
    %v1528 = vand.u32 2147483647, %v1518
    %vm1529 = vcmp.eq.f32.partialorder %v1528, 8.507059e+37
    %v1530 = vand.u32 %v1518, 2147483648
    %v1531 = vor.u32 1.1754944e-38, %v1530
    %v1532 = vsel %vm1529, %v1531, %v1527
    %v1533 = vmul.f32 1.0, %v1532
    %1535 = vrot.lane.b32.xlu0 %v1512, 64
    %v1536 = vpop.permute.xlu0 %1535
    %v1538 = vmul.f32 %v1533, %v1536
    %1540 = vrot.lane.b32.xlu0 %v1538, 64
    %v1541 = vpop.permute.xlu0 %1540
    %v1543 = vadd.f32 %v1493, %v1541
    %v1544 = vtanh.pop %v1543
    %v1545 = vsub.f32 1.0, %v1533
    %1547 = vrot.lane.b32.xlu0 %v1544, 96
    %v1548 = vpop.permute.xlu0 %1547
    %v1550 = vmul.f32 %v1545, %v1548
    %v1551 = vmul.f32 %v1533, 0.0
    %v1552 = vadd.f32 %v1550, %v1551
    %1554 = vrot.lane.b32.xlu0 %v1552, 96
    %v1555 = vpop.permute.xlu0 %1554
    %v1556 = vsel %vm200, %v1555, 0
    %1558 = vmatpush.msra.mxu0 0.0
    %1559 = vmatpush.msra.mxu0 0.0
    %1560 = vmatpush.msra.mxu0 0.0
    %1561 = vmatpush.msra.mxu0 0.0
    %1562 = vmatpush.msra.mxu0 0.0
    %1563 = vmatpush.msra.mxu0 0.0
    %1564 = vmatpush.msra.mxu0 0.0
    %1565 = vmatpush.msra.mxu0 0.0
    %1566 = vmatpush.msra.mxu0 0.0
    %1567 = vmatpush.msra.mxu0 0.0
    %1568 = vmatpush.msra.mxu0 0.0
    %1569 = vmatpush.msra.mxu0 0.0
    %1570 = vmatpush.msra.mxu0 %v1452
    %1571 = vmatpush.msra.mxu0 %v1451
    %1572 = vmatpush.msra.mxu0 %v1450
    %1573 = vmatpush.msra.mxu0 %v1449
    %1574 = vmatmul.f32.gmra.mxu0 %v1556
    %v1575 = vpop.f32.mrf.mxu0
    %v1576 = vadd.f32 %v1458, %v1575
    %1577 = vdwg.mxu0
    %1578 = vmatpush.msra.mxu0 0.0
    %1579 = vmatpush.msra.mxu0 0.0
    %1580 = vmatpush.msra.mxu0 0.0
    %1581 = vmatpush.msra.mxu0 0.0
    %1582 = vmatpush.msra.mxu0 0.0
    %1583 = vmatpush.msra.mxu0 0.0
    %1584 = vmatpush.msra.mxu0 0.0
    %1585 = vmatpush.msra.mxu0 0.0
    %1586 = vmatpush.msra.mxu0 0.0
    %1587 = vmatpush.msra.mxu0 0.0
    %1588 = vmatpush.msra.mxu0 0.0
    %1589 = vmatpush.msra.mxu0 0.0
    %1590 = vmatpush.msra.mxu0 %v1456
    %1591 = vmatpush.msra.mxu0 %v1455
    %1592 = vmatpush.msra.mxu0 %v1454
    %1593 = vmatpush.msra.mxu0 %v1453
    %1594 = vmatmul.f32.gmra.mxu0 %v249
    %v1595 = vpop.f32.mrf.mxu0
    %v1596 = vadd.f32 %v1459, %v1595
    %1597 = vdwg.mxu0
    %v1598 = vadd.f32 %v1576, %v1596
    %v1599 = vxor.u32 %v1598, 2147483648
    %v1600 = vmul.f32 %v1599, 1.442695
    %v1601 = vpow.pop %v1600
    %v1602 = vadd.f32 %v1601, 1.0
    %v1603 = vrcp.pop %v1602
    %v1604 = vmul.f32 %v1602, %v1603
    %v1605 = vsub.f32 1.0, %v1604
    %v1606 = vmul.f32 %v1603, %v1605
    %v1607 = vadd.f32 %v1603, %v1606
    %vm1608 = vweird.f32 %v1602
    %vm1609 = vweird.f32 %v1603
    %vm1610 = vmor %vm1608, %vm1609
    %v1611 = vsel %vm1610, %v1603, %v1607
    %v1612 = vand.u32 2147483647, %v1602
    %vm1613 = vcmp.eq.f32.partialorder %v1612, 8.507059e+37
    %v1614 = vand.u32 %v1602, 2147483648
    %v1615 = vor.u32 1.1754944e-38, %v1614
    %v1616 = vsel %vm1613, %v1615, %v1611
    %v1617 = vmul.f32 1.0, %v1616
    %1619 = vrot.lane.b32.xlu0 %v1596, 64
    %v1620 = vpop.permute.xlu0 %1619
    %v1622 = vmul.f32 %v1617, %v1620
    %1624 = vrot.lane.b32.xlu0 %v1622, 64
    %v1625 = vpop.permute.xlu0 %1624
    %v1627 = vadd.f32 %v1576, %v1625
    %v1628 = vtanh.pop %v1627
    %v1629 = vsub.f32 1.0, %v1617
    %1631 = vrot.lane.b32.xlu0 %v1628, 96
    %v1632 = vpop.permute.xlu0 %1631
    %v1634 = vmul.f32 %v1629, %v1632
    %v1635 = vmul.f32 %v1617, 0.0
    %v1636 = vadd.f32 %v1634, %v1635
    %v1637 = vld [vmem:[#allocation4 + $0x3] sm:$0x1]
    %1638 = vmatpush.msra.mxu0 0.0
    %1639 = vmatpush.msra.mxu0 0.0
    %1640 = vmatpush.msra.mxu0 0.0
    %1641 = vmatpush.msra.mxu0 0.0
    %1642 = vmatpush.msra.mxu0 0.0
    %1643 = vmatpush.msra.mxu0 0.0
    %1644 = vmatpush.msra.mxu0 0.0
    %1645 = vmatpush.msra.mxu0 0.0
    %1646 = vmatpush.msra.mxu0 0.0
    %1647 = vmatpush.msra.mxu0 0.0
    %1648 = vmatpush.msra.mxu0 0.0
    %1649 = vmatpush.msra.mxu0 0.0
    %1650 = vmatpush.msra.mxu0 %v1448
    %1651 = vmatpush.msra.mxu0 %v1447
    %1652 = vmatpush.msra.mxu0 %v1446
    %1653 = vmatpush.msra.mxu0 %v1445
    %1654 = vmatmul.f32.gmra.mxu0 %v1556
    %v1655 = vpop.f32.mrf.mxu0
    %v1656 = vadd.f32 %v1457, %v1655
    %1657 = vdwg.mxu0
    %v1658 = vadd.f32 %v1637, %v1656
    %v1659 = vxor.u32 %v1658, 2147483648
    %v1660 = vmul.f32 %v1659, 1.442695
    %v1661 = vpow.pop %v1660
    %v1662 = vadd.f32 %v1661, 1.0
    %v1663 = vrcp.pop %v1662
    %v1664 = vmul.f32 %v1662, %v1663
    %v1665 = vsub.f32 1.0, %v1664
    %v1666 = vmul.f32 %v1663, %v1665
    %v1667 = vadd.f32 %v1663, %v1666
    %vm1668 = vweird.f32 %v1662
    %vm1669 = vweird.f32 %v1663
    %vm1670 = vmor %vm1668, %vm1669
    %v1671 = vsel %vm1670, %v1663, %v1667
    %v1672 = vand.u32 2147483647, %v1662
    %vm1673 = vcmp.eq.f32.partialorder %v1672, 8.507059e+37
    %v1674 = vand.u32 %v1662, 2147483648
    %v1675 = vor.u32 1.1754944e-38, %v1674
    %v1676 = vsel %vm1673, %v1675, %v1671
    %v1677 = vmul.f32 1.0, %v1676
    %1679 = vrot.lane.b32.xlu0 %v1656, 64
    %v1680 = vpop.permute.xlu0 %1679
    %v1682 = vmul.f32 %v1677, %v1680
    %1684 = vrot.lane.b32.xlu0 %v1682, 64
    %v1685 = vpop.permute.xlu0 %1684
    %v1687 = vadd.f32 %v1637, %v1685
    %v1688 = vtanh.pop %v1687
    %v1689 = vsub.f32 1.0, %v1677
    %1691 = vrot.lane.b32.xlu0 %v1688, 96
    %v1692 = vpop.permute.xlu0 %1691
    %v1694 = vmul.f32 %v1689, %v1692
    %v1695 = vmul.f32 %v1677, %v1552
    %v1696 = vadd.f32 %v1694, %v1695
    %1698 = vrot.lane.b32.xlu0 %v1696, 96
    %v1699 = vpop.permute.xlu0 %1698
    %v1700 = vsel %vm200, %v1699, 0
    %1702 = vmatpush.msra.mxu0 0.0
    %1703 = vmatpush.msra.mxu0 0.0
    %1704 = vmatpush.msra.mxu0 0.0
    %1705 = vmatpush.msra.mxu0 0.0
    %1706 = vmatpush.msra.mxu0 0.0
    %1707 = vmatpush.msra.mxu0 0.0
    %1708 = vmatpush.msra.mxu0 0.0
    %1709 = vmatpush.msra.mxu0 0.0
    %1710 = vmatpush.msra.mxu0 0.0
    %1711 = vmatpush.msra.mxu0 0.0
    %1712 = vmatpush.msra.mxu0 0.0
    %1713 = vmatpush.msra.mxu0 0.0
    %1714 = vmatpush.msra.mxu0 %v1452
    %1715 = vmatpush.msra.mxu0 %v1451
    %1716 = vmatpush.msra.mxu0 %v1450
    %1717 = vmatpush.msra.mxu0 %v1449
    %1718 = vmatmul.f32.gmra.mxu0 %v1700
    %v1719 = vpop.f32.mrf.mxu0
    %v1720 = vadd.f32 %v1458, %v1719
    %1721 = vdwg.mxu0
    %1723 = vrot.lane.b32.xlu0 %v1636, 96
    %v1724 = vpop.permute.xlu0 %1723
    %v1725 = vsel %vm200, %v1724, 0
    %1727 = vmatpush.msra.mxu0 0.0
    %1728 = vmatpush.msra.mxu0 0.0
    %1729 = vmatpush.msra.mxu0 0.0
    %1730 = vmatpush.msra.mxu0 0.0
    %1731 = vmatpush.msra.mxu0 0.0
    %1732 = vmatpush.msra.mxu0 0.0
    %1733 = vmatpush.msra.mxu0 0.0
    %1734 = vmatpush.msra.mxu0 0.0
    %1735 = vmatpush.msra.mxu0 0.0
    %1736 = vmatpush.msra.mxu0 0.0
    %1737 = vmatpush.msra.mxu0 0.0
    %1738 = vmatpush.msra.mxu0 0.0
    %1739 = vmatpush.msra.mxu0 %v1456
    %1740 = vmatpush.msra.mxu0 %v1455
    %1741 = vmatpush.msra.mxu0 %v1454
    %1742 = vmatpush.msra.mxu0 %v1453
    %1743 = vmatmul.f32.gmra.mxu0 %v1725
    %v1744 = vpop.f32.mrf.mxu0
    %v1745 = vadd.f32 %v1459, %v1744
    %1746 = vdwg.mxu0
    %v1747 = vadd.f32 %v1720, %v1745
    %v1748 = vxor.u32 %v1747, 2147483648
    %v1749 = vmul.f32 %v1748, 1.442695
    %v1750 = vpow.pop %v1749
    %v1751 = vadd.f32 %v1750, 1.0
    %v1752 = vrcp.pop %v1751
    %v1753 = vmul.f32 %v1751, %v1752
    %v1754 = vsub.f32 1.0, %v1753
    %v1755 = vmul.f32 %v1752, %v1754
    %v1756 = vadd.f32 %v1752, %v1755
    %vm1757 = vweird.f32 %v1751
    %vm1758 = vweird.f32 %v1752
    %vm1759 = vmor %vm1757, %vm1758
    %v1760 = vsel %vm1759, %v1752, %v1756
    %v1761 = vand.u32 2147483647, %v1751
    %vm1762 = vcmp.eq.f32.partialorder %v1761, 8.507059e+37
    %v1763 = vand.u32 %v1751, 2147483648
    %v1764 = vor.u32 1.1754944e-38, %v1763
    %v1765 = vsel %vm1762, %v1764, %v1760
    %v1766 = vmul.f32 1.0, %v1765
    %1768 = vrot.lane.b32.xlu0 %v1745, 64
    %v1769 = vpop.permute.xlu0 %1768
    %v1771 = vmul.f32 %v1766, %v1769
    %1773 = vrot.lane.b32.xlu0 %v1771, 64
    %v1774 = vpop.permute.xlu0 %1773
    %v1776 = vadd.f32 %v1720, %v1774
    %v1777 = vtanh.pop %v1776
    %v1778 = vsub.f32 1.0, %v1766
    %1780 = vrot.lane.b32.xlu0 %v1777, 96
    %v1781 = vpop.permute.xlu0 %1780
    %v1783 = vmul.f32 %v1778, %v1781
    %v1784 = vmul.f32 %v1766, %v1636
    %v1785 = vadd.f32 %v1783, %v1784
    %v1786 = vld [vmem:[#allocation4 + $0x5] sm:$0x1]
    %1787 = vmatpush.msra.mxu0 0.0
    %1788 = vmatpush.msra.mxu0 0.0
    %1789 = vmatpush.msra.mxu0 0.0
    %1790 = vmatpush.msra.mxu0 0.0
    %1791 = vmatpush.msra.mxu0 0.0
    %1792 = vmatpush.msra.mxu0 0.0
    %1793 = vmatpush.msra.mxu0 0.0
    %1794 = vmatpush.msra.mxu0 0.0
    %1795 = vmatpush.msra.mxu0 0.0
    %1796 = vmatpush.msra.mxu0 0.0
    %1797 = vmatpush.msra.mxu0 0.0
    %1798 = vmatpush.msra.mxu0 0.0
    %1799 = vmatpush.msra.mxu0 %v1448
    %1800 = vmatpush.msra.mxu0 %v1447
    %1801 = vmatpush.msra.mxu0 %v1446
    %1802 = vmatpush.msra.mxu0 %v1445
    %1803 = vmatmul.f32.gmra.mxu0 %v1700
    %v1804 = vpop.f32.mrf.mxu0
    %v1805 = vadd.f32 %v1457, %v1804
    %1806 = vdwg.mxu0
    %v1807 = vadd.f32 %v1786, %v1805
    %v1808 = vxor.u32 %v1807, 2147483648
    %v1809 = vmul.f32 %v1808, 1.442695
    %v1810 = vpow.pop %v1809
    %v1811 = vadd.f32 %v1810, 1.0
    %v1812 = vrcp.pop %v1811
    %v1813 = vmul.f32 %v1811, %v1812
    %v1814 = vsub.f32 1.0, %v1813
    %v1815 = vmul.f32 %v1812, %v1814
    %v1816 = vadd.f32 %v1812, %v1815
    %vm1817 = vweird.f32 %v1811
    %vm1818 = vweird.f32 %v1812
    %vm1819 = vmor %vm1817, %vm1818
    %v1820 = vsel %vm1819, %v1812, %v1816
    %v1821 = vand.u32 2147483647, %v1811
    %vm1822 = vcmp.eq.f32.partialorder %v1821, 8.507059e+37
    %v1823 = vand.u32 %v1811, 2147483648
    %v1824 = vor.u32 1.1754944e-38, %v1823
    %v1825 = vsel %vm1822, %v1824, %v1820
    %v1826 = vmul.f32 1.0, %v1825
    %1828 = vrot.lane.b32.xlu0 %v1805, 64
    %v1829 = vpop.permute.xlu0 %1828
    %v1831 = vmul.f32 %v1826, %v1829
    %1833 = vrot.lane.b32.xlu0 %v1831, 64
    %v1834 = vpop.permute.xlu0 %1833
    %v1836 = vadd.f32 %v1786, %v1834
    %v1837 = vtanh.pop %v1836
    %v1838 = vsub.f32 1.0, %v1826
    %1840 = vrot.lane.b32.xlu0 %v1837, 96
    %v1841 = vpop.permute.xlu0 %1840
    %v1843 = vmul.f32 %v1838, %v1841
    %v1844 = vmul.f32 %v1826, %v1696
    %v1845 = vadd.f32 %v1843, %v1844
    %1847 = vrot.lane.b32.xlu0 %v1845, 96
    %v1848 = vpop.permute.xlu0 %1847
    %v1849 = vsel %vm200, %v1848, 0
    %1851 = vmatpush.msra.mxu0 0.0
    %1852 = vmatpush.msra.mxu0 0.0
    %1853 = vmatpush.msra.mxu0 0.0
    %1854 = vmatpush.msra.mxu0 0.0
    %1855 = vmatpush.msra.mxu0 0.0
    %1856 = vmatpush.msra.mxu0 0.0
    %1857 = vmatpush.msra.mxu0 0.0
    %1858 = vmatpush.msra.mxu0 0.0
    %1859 = vmatpush.msra.mxu0 0.0
    %1860 = vmatpush.msra.mxu0 0.0
    %1861 = vmatpush.msra.mxu0 0.0
    %1862 = vmatpush.msra.mxu0 0.0
    %1863 = vmatpush.msra.mxu0 %v1452
    %1864 = vmatpush.msra.mxu0 %v1451
    %1865 = vmatpush.msra.mxu0 %v1450
    %1866 = vmatpush.msra.mxu0 %v1449
    %1867 = vmatmul.f32.gmra.mxu0 %v1849
    %v1868 = vpop.f32.mrf.mxu0
    %v1869 = vadd.f32 %v1458, %v1868
    %1870 = vdwg.mxu0
    %1872 = vrot.lane.b32.xlu0 %v1785, 96
    %v1873 = vpop.permute.xlu0 %1872
    %v1874 = vsel %vm200, %v1873, 0
    %1876 = vmatpush.msra.mxu0 0.0
    %1877 = vmatpush.msra.mxu0 0.0
    %1878 = vmatpush.msra.mxu0 0.0
    %1879 = vmatpush.msra.mxu0 0.0
    %1880 = vmatpush.msra.mxu0 0.0
    %1881 = vmatpush.msra.mxu0 0.0
    %1882 = vmatpush.msra.mxu0 0.0
    %1883 = vmatpush.msra.mxu0 0.0
    %1884 = vmatpush.msra.mxu0 0.0
    %1885 = vmatpush.msra.mxu0 0.0
    %1886 = vmatpush.msra.mxu0 0.0
    %1887 = vmatpush.msra.mxu0 0.0
    %1888 = vmatpush.msra.mxu0 %v1456
    %1889 = vmatpush.msra.mxu0 %v1455
    %1890 = vmatpush.msra.mxu0 %v1454
    %1891 = vmatpush.msra.mxu0 %v1453
    %1892 = vmatmul.f32.gmra.mxu0 %v1874
    %v1893 = vpop.f32.mrf.mxu0
    %v1894 = vadd.f32 %v1459, %v1893
    %1895 = vdwg.mxu0
    %v1896 = vadd.f32 %v1869, %v1894
    %v1897 = vxor.u32 %v1896, 2147483648
    %v1898 = vmul.f32 %v1897, 1.442695
    %v1899 = vpow.pop %v1898
    %v1900 = vadd.f32 %v1899, 1.0
    %v1901 = vrcp.pop %v1900
    %v1902 = vmul.f32 %v1900, %v1901
    %v1903 = vsub.f32 1.0, %v1902
    %v1904 = vmul.f32 %v1901, %v1903
    %v1905 = vadd.f32 %v1901, %v1904
    %vm1906 = vweird.f32 %v1900
    %vm1907 = vweird.f32 %v1901
    %vm1908 = vmor %vm1906, %vm1907
    %v1909 = vsel %vm1908, %v1901, %v1905
    %v1910 = vand.u32 2147483647, %v1900
    %vm1911 = vcmp.eq.f32.partialorder %v1910, 8.507059e+37
    %v1912 = vand.u32 %v1900, 2147483648
    %v1913 = vor.u32 1.1754944e-38, %v1912
    %v1914 = vsel %vm1911, %v1913, %v1909
    %v1915 = vmul.f32 1.0, %v1914
    %1917 = vrot.lane.b32.xlu0 %v1894, 64
    %v1918 = vpop.permute.xlu0 %1917
    %v1920 = vmul.f32 %v1915, %v1918
    %1922 = vrot.lane.b32.xlu0 %v1920, 64
    %v1923 = vpop.permute.xlu0 %1922
    %v1925 = vadd.f32 %v1869, %v1923
    %v1926 = vtanh.pop %v1925
    %v1927 = vsub.f32 1.0, %v1915
    %1929 = vrot.lane.b32.xlu0 %v1926, 96
    %v1930 = vpop.permute.xlu0 %1929
    %v1932 = vmul.f32 %v1927, %v1930
    %v1933 = vmul.f32 %v1915, %v1785
    %v1934 = vadd.f32 %v1932, %v1933
    %v1935 = vld [vmem:[#allocation4 + $0x7] sm:$0x1]
    %1936 = vmatpush.msra.mxu0 0.0
    %1937 = vmatpush.msra.mxu0 0.0
    %1938 = vmatpush.msra.mxu0 0.0
    %1939 = vmatpush.msra.mxu0 0.0
    %1940 = vmatpush.msra.mxu0 0.0
    %1941 = vmatpush.msra.mxu0 0.0
    %1942 = vmatpush.msra.mxu0 0.0
    %1943 = vmatpush.msra.mxu0 0.0
    %1944 = vmatpush.msra.mxu0 0.0
    %1945 = vmatpush.msra.mxu0 0.0
    %1946 = vmatpush.msra.mxu0 0.0
    %1947 = vmatpush.msra.mxu0 0.0
    %1948 = vmatpush.msra.mxu0 %v1448
    %1949 = vmatpush.msra.mxu0 %v1447
    %1950 = vmatpush.msra.mxu0 %v1446
    %1951 = vmatpush.msra.mxu0 %v1445
    %1952 = vmatmul.f32.gmra.mxu0 %v1849
    %v1953 = vpop.f32.mrf.mxu0
    %v1954 = vadd.f32 %v1457, %v1953
    %1955 = vdwg.mxu0
    %v1956 = vadd.f32 %v1935, %v1954
    %v1957 = vxor.u32 %v1956, 2147483648
    %v1958 = vmul.f32 %v1957, 1.442695
    %v1959 = vpow.pop %v1958
    %v1960 = vadd.f32 %v1959, 1.0
    %v1961 = vrcp.pop %v1960
    %v1962 = vmul.f32 %v1960, %v1961
    %v1963 = vsub.f32 1.0, %v1962
    %v1964 = vmul.f32 %v1961, %v1963
    %v1965 = vadd.f32 %v1961, %v1964
    %vm1966 = vweird.f32 %v1960
    %vm1967 = vweird.f32 %v1961
    %vm1968 = vmor %vm1966, %vm1967
    %v1969 = vsel %vm1968, %v1961, %v1965
    %v1970 = vand.u32 2147483647, %v1960
    %vm1971 = vcmp.eq.f32.partialorder %v1970, 8.507059e+37
    %v1972 = vand.u32 %v1960, 2147483648
    %v1973 = vor.u32 1.1754944e-38, %v1972
    %v1974 = vsel %vm1971, %v1973, %v1969
    %v1975 = vmul.f32 1.0, %v1974
    %1977 = vrot.lane.b32.xlu0 %v1954, 64
    %v1978 = vpop.permute.xlu0 %1977
    %v1980 = vmul.f32 %v1975, %v1978
    %1982 = vrot.lane.b32.xlu0 %v1980, 64
    %v1983 = vpop.permute.xlu0 %1982
    %v1985 = vadd.f32 %v1935, %v1983
    %v1986 = vtanh.pop %v1985
    %v1987 = vsub.f32 1.0, %v1975
    %1989 = vrot.lane.b32.xlu0 %v1986, 96
    %v1990 = vpop.permute.xlu0 %1989
    %v1992 = vmul.f32 %v1987, %v1990
    %v1993 = vmul.f32 %v1975, %v1845
    %v1994 = vadd.f32 %v1992, %v1993
    %1996 = vrot.lane.b32.xlu0 %v1994, 96
    %v1997 = vpop.permute.xlu0 %1996
    %v1998 = vsel %vm200, %v1997, 0
    %2000 = vmatpush.msra.mxu0 0.0
    %2001 = vmatpush.msra.mxu0 0.0
    %2002 = vmatpush.msra.mxu0 0.0
    %2003 = vmatpush.msra.mxu0 0.0
    %2004 = vmatpush.msra.mxu0 0.0
    %2005 = vmatpush.msra.mxu0 0.0
    %2006 = vmatpush.msra.mxu0 0.0
    %2007 = vmatpush.msra.mxu0 0.0
    %2008 = vmatpush.msra.mxu0 0.0
    %2009 = vmatpush.msra.mxu0 0.0
    %2010 = vmatpush.msra.mxu0 0.0
    %2011 = vmatpush.msra.mxu0 0.0
    %2012 = vmatpush.msra.mxu0 %v1452
    %2013 = vmatpush.msra.mxu0 %v1451
    %2014 = vmatpush.msra.mxu0 %v1450
    %2015 = vmatpush.msra.mxu0 %v1449
    %2016 = vmatmul.f32.gmra.mxu0 %v1998
    %v2017 = vpop.f32.mrf.mxu0
    %v2018 = vadd.f32 %v1458, %v2017
    %2019 = vdwg.mxu0
    %2021 = vrot.lane.b32.xlu0 %v1934, 96
    %v2022 = vpop.permute.xlu0 %2021
    %v2023 = vsel %vm200, %v2022, 0
    %2025 = vmatpush.msra.mxu0 0.0
    %2026 = vmatpush.msra.mxu0 0.0
    %2027 = vmatpush.msra.mxu0 0.0
    %2028 = vmatpush.msra.mxu0 0.0
    %2029 = vmatpush.msra.mxu0 0.0
    %2030 = vmatpush.msra.mxu0 0.0
    %2031 = vmatpush.msra.mxu0 0.0
    %2032 = vmatpush.msra.mxu0 0.0
    %2033 = vmatpush.msra.mxu0 0.0
    %2034 = vmatpush.msra.mxu0 0.0
    %2035 = vmatpush.msra.mxu0 0.0
    %2036 = vmatpush.msra.mxu0 0.0
    %2037 = vmatpush.msra.mxu0 %v1456
    %2038 = vmatpush.msra.mxu0 %v1455
    %2039 = vmatpush.msra.mxu0 %v1454
    %2040 = vmatpush.msra.mxu0 %v1453
    %2041 = vmatmul.f32.gmra.mxu0 %v2023
    %v2042 = vpop.f32.mrf.mxu0
    %v2043 = vadd.f32 %v1459, %v2042
    %2044 = vdwg.mxu0
    %v2045 = vadd.f32 %v2018, %v2043
    %v2046 = vxor.u32 %v2045, 2147483648
    %v2047 = vmul.f32 %v2046, 1.442695
    %v2048 = vpow.pop %v2047
    %v2049 = vadd.f32 %v2048, 1.0
    %v2050 = vrcp.pop %v2049
    %v2051 = vmul.f32 %v2049, %v2050
    %v2052 = vsub.f32 1.0, %v2051
    %v2053 = vmul.f32 %v2050, %v2052
    %v2054 = vadd.f32 %v2050, %v2053
    %vm2055 = vweird.f32 %v2049
    %vm2056 = vweird.f32 %v2050
    %vm2057 = vmor %vm2055, %vm2056
    %v2058 = vsel %vm2057, %v2050, %v2054
    %v2059 = vand.u32 2147483647, %v2049
    %vm2060 = vcmp.eq.f32.partialorder %v2059, 8.507059e+37
    %v2061 = vand.u32 %v2049, 2147483648
    %v2062 = vor.u32 1.1754944e-38, %v2061
    %v2063 = vsel %vm2060, %v2062, %v2058
    %v2064 = vmul.f32 1.0, %v2063
    %2066 = vrot.lane.b32.xlu0 %v2043, 64
    %v2067 = vpop.permute.xlu0 %2066
    %v2069 = vmul.f32 %v2064, %v2067
    %2071 = vrot.lane.b32.xlu0 %v2069, 64
    %v2072 = vpop.permute.xlu0 %2071
    %v2074 = vadd.f32 %v2018, %v2072
    %v2075 = vtanh.pop %v2074
    %v2076 = vsub.f32 1.0, %v2064
    %2078 = vrot.lane.b32.xlu0 %v2075, 96
    %v2079 = vpop.permute.xlu0 %2078
    %v2081 = vmul.f32 %v2076, %v2079
    %v2082 = vmul.f32 %v2064, %v1934
    %v2083 = vadd.f32 %v2081, %v2082
    %2085 = vrot.lane.b32.xlu0 %v2083, 96
    %v2086 = vpop.permute.xlu0 %2085
    %vm2088 = vcmask 253952
    %2089 = vst.msk [vmem:[#allocation17] sm:$0x1] %vm2088, %v2086
    // Predicated region
    $region98: #{autoencoder_forward.1} parent=1 // pred_check
      _
    $region99: #{autoencoder_forward.1} parent=1 // pred_check_branch
      %2091 = sbr.rel (0) target = $region101
    $region100: #{autoencoder_forward.1} parent=1 // pred_region
      %2093 = vsyncadd [#allocation7], 0
      %s2095 = sshll.u32 [#allocation17], 4
      %s2096 = int_to_ptr.vmem [resolvable:$true] %s2095
      %s2097 = sshll.u32 %s17, 4
      %s2098 = int_to_ptr.hbm [resolvable:$true] %s2097
      %2100 = dma.vmem_to_hbm [thread:$0]  %s2096, 16, %s2098, [#allocation7]
    $region101: #{autoencoder_forward.1} parent=1 // pred_fallthru
      _
    // Predicated region
    $region102: #{autoencoder_forward.1} parent=1 // pred_check
      _
    $region103: #{autoencoder_forward.1} parent=1 // pred_check_branch
      %2102 = sbr.rel (0) target = $region105
    $region104: #{autoencoder_forward.1} parent=1 // pred_region
      %2104 = dma.done [#allocation7], 16
    $region105: #{autoencoder_forward.1} parent=1 // pred_fallthru
      _
    %2105 = vsyncpa [#allocation6], 1
    %2106 = vsyncpa [#allocation9], 1
    %2107 = vsyncpa [#allocation12], 1
    %2108 = vsyncpa [#allocation15], 1
    %2109 = vsyncpa [#allocation7], 1

</llo_original>
